<compile_context>
chip_gen: v6e
topology: v6e:2x2x1
jax: 0.10.0
libtpu: 0.0.40
codegen_flags: <defaults>
</compile_context>

<pallas_src>
import numpy as np

import jax
import jax.numpy as jnp
from jax import lax
from jax.experimental import pallas as pl
from jax.experimental.pallas import tpu as pltpu

H = 16
W = 16
HW = H * W
C_IN = 4
C_OUT = 3

assert (W & (W - 1)) == 0 and (H & (H - 1)) == 0, "W/H must be powers of two"
_LOG2_W = W.bit_length() - 1


def uwcnn_kernel(x_ref,
                 wcc0_ref, bcc0_ref, wcc1_ref, bcc1_ref,
                 wd1_ref, bd1_ref, wd2_ref, bd2_ref, wd3_ref, bd3_ref,
                 wd4_ref, bd4_ref,
                 out_ref):
    f32 = jnp.float32
    x = x_ref[...].astype(f32)                       # (C_IN, lanes), lanes = b_blk*HW
    lanes = x.shape[1]

    # Per-lane boundary masks, built once per grid step (cheap VPU bit ops).
    lane = lax.broadcasted_iota(jnp.int32, (1, lanes), 1)
    col = jnp.bitwise_and(lane, W - 1)                       # lane % W
    rowi = jnp.bitwise_and(jnp.right_shift(lane, _LOG2_W), H - 1)  # (lane // W) % H
    lmask = jnp.where(col >= 1, 1.0, 0.0).astype(f32)        # reading column w-1 is valid
    rmask = jnp.where(col <= W - 2, 1.0, 0.0).astype(f32)    # reading column w+1 is valid
    tmask = jnp.where(rowi >= 1, 1.0, 0.0).astype(f32)       # reading row h-1 is valid
    bmask = jnp.where(rowi <= H - 2, 1.0, 0.0).astype(f32)   # reading row h+1 is valid

    def lroll(a, s):
        # Circular lane roll (XLU); wraparound across image / array boundaries
        # is zeroed out by the masks above, so circularity is harmless.
        return pltpu.roll(a, s % lanes, 1)

    def conv1x1(a, w_ref, b_ref):
        return jnp.dot(w_ref[...], a, preferred_element_type=f32) + b_ref[...]

    def conv3x3(parts, w_ref, b_ref):
        # parts: list of (Ci, lanes) tensors whose channel-concat is the conv
        # input (cc / dcat are never materialized on their own).
        left = [lroll(p, 1) * lmask for p in parts]      # tap reading column w-1 (kx=0)
        right = [lroll(p, -1) * rmask for p in parts]    # tap reading column w+1 (kx=2)
        row = jnp.concatenate(left + list(parts) + right, axis=0)   # (3C, lanes), k=(kx,ci)
        # Three accumulating matmuls (one per ky) instead of a (9C, lanes) im2col.
        y = jnp.dot(w_ref[1], row, preferred_element_type=f32)      # ky=1 (center row)
        up = lroll(row, W) * tmask                                   # ky=0 reads row h-1
        y = y + jnp.dot(w_ref[0], up, preferred_element_type=f32)
        down = lroll(row, -W) * bmask                                # ky=2 reads row h+1
        y = y + jnp.dot(w_ref[2], down, preferred_element_type=f32)
        return y + b_ref[...]

    relu = lambda v: jnp.maximum(v, 0.0)

    cc0 = relu(conv1x1(x, wcc0_ref, bcc0_ref))                 # (4, lanes)
    cc1 = relu(conv1x1(cc0, wcc1_ref, bcc1_ref))               # (4, lanes)
    c1 = relu(conv3x3([cc0, cc1, x], wd1_ref, bd1_ref))        # (16, lanes)
    c2 = relu(conv3x3([c1], wd2_ref, bd2_ref))                 # (16, lanes)
    c3 = relu(conv3x3([c2], wd3_ref, bd3_ref))                 # (16, lanes)
    c4 = conv3x3([c1, c2, c3, x], wd4_ref, bd4_ref)            # (3, lanes)

    out_ref[...] = (x[:C_OUT, :] + c4).astype(out_ref.dtype)


def _chip_config():
    """Generation-aware (b_blk cap, dual_core, vmem_limit_bytes)."""
    vmem = None
    try:
        vmem = int(pltpu.get_tpu_info().vmem_capacity_bytes)
    except Exception:
        vmem = None
    kind = ""
    try:
        kind = jax.devices()[0].device_kind.lower()
    except Exception:
        pass
    small_vmem = (vmem is not None and vmem <= 80 * 1024 * 1024) or ("v7" in kind)
    if small_vmem:
        # v7x-like: 64 MiB VMEM per TensorCore, 2 TensorCores per chip.
        return 16, True, 48 * 1024 * 1024
    # v5e / v6e: 128 MiB VMEM, single TensorCore.
    return 32, False, 64 * 1024 * 1024


def uwcnn_forward(x_nchw, params, b_blk=None):
    """x_nchw: (N, 4, H, W) float32 -> (N, 3, H, W) float32."""
    N, cin, hx, wx = x_nchw.shape
    assert (cin, hx, wx) == (C_IN, H, W)

    cap, dual_core, vmem_limit = _chip_config()
    if b_blk is None:
        if N <= 1:
            b_blk = 1
        elif dual_core:
            # Even number of grid steps so both TensorCores stay balanced.
            nb = 2 * (-(-N // (2 * cap)))
            b_blk = -(-N // nb)
        else:
            # Single TensorCore: as few (big) steps as possible.
            nb = -(-N // cap)
            b_blk = -(-N // nb)
    nb = -(-N // b_blk)
    n_pad = nb * b_blk
    lanes = b_blk * HW

    xp = x_nchw.astype(jnp.float32)
    if n_pad != N:
        xp = jnp.concatenate(
            [xp, jnp.zeros((n_pad - N,) + xp.shape[1:], xp.dtype)], axis=0)
    # Channel-major with the batch folded onto the lane axis: (C_IN, N_pad*HW).
    x2 = jnp.transpose(xp.reshape(n_pad, C_IN, HW), (1, 0, 2)).reshape(C_IN, n_pad * HW)

    (wcc0, bcc0, wcc1, bcc1, wd1, bd1, wd2, bd2, wd3, bd3, wd4, bd4) = params

    def w1x1(w):                 # HWIO (1,1,ci,co) -> (co, ci)
        return w.reshape(w.shape[2], w.shape[3]).T

    def w3x3(w):                 # HWIO (3,3,ci,co) -> (3, co, 3*ci); k within ky = (kx, ci)
        return jnp.transpose(w, (0, 3, 1, 2)).reshape(3, w.shape[3], 3 * w.shape[2])

    def bias(b):                 # (co,) -> (co, 1)
        return b.reshape(-1, 1)

    const_args = [
        w1x1(wcc0), bias(bcc0), w1x1(wcc1), bias(bcc1),
        w3x3(wd1), bias(bd1), w3x3(wd2), bias(bd2),
        w3x3(wd3), bias(bd3), w3x3(wd4), bias(bd4),
    ]

    def const_spec(a):
        nd = a.ndim
        return pl.BlockSpec(a.shape, lambda n, _nd=nd: (0,) * _nd)

    in_specs = [pl.BlockSpec((C_IN, lanes), lambda n: (0, n))]
    in_specs += [const_spec(a) for a in const_args]
    out_spec = pl.BlockSpec((C_OUT, lanes), lambda n: (0, n))

    out = pl.pallas_call(
        uwcnn_kernel,
        out_shape=jax.ShapeDtypeStruct((C_OUT, n_pad * HW), jnp.float32),
        grid=(nb,),
        in_specs=in_specs,
        out_specs=out_spec,
        compiler_params=pltpu.CompilerParams(
            dimension_semantics=("parallel",),
            vmem_limit_bytes=vmem_limit),
    )(x2, *const_args)

    out = out.reshape(C_OUT, n_pad, HW)[:, :N]
    return jnp.transpose(out, (1, 0, 2)).reshape(N, C_OUT, H, W)


# ---------------- pure-JAX reference (for correctness check) ----------------
def forward_ref_nchw(x_nchw, params):
    x = jnp.transpose(x_nchw, (0, 2, 3, 1))
    (wcc0, bcc0, wcc1, bcc1, wd1, bd1, wd2, bd2, wd3, bd3, wd4, bd4) = params

    def conv(h, w, b, pad):
        y = lax.conv_general_dilated(
            h, w, (1, 1), pad, dimension_numbers=('NHWC', 'HWIO', 'NHWC'),
            precision=lax.Precision.HIGHEST)
        return y + b[None, None, None, :]

    cc0 = jax.nn.relu(conv(x, wcc0, bcc0, 'VALID'))
    cc1 = jax.nn.relu(conv(cc0, wcc1, bcc1, 'VALID'))
    cc = jnp.concatenate([cc0, cc1, x], axis=-1)
    c1 = jax.nn.relu(conv(cc, wd1, bd1, 'SAME'))
    c2 = jax.nn.relu(conv(c1, wd2, bd2, 'SAME'))
    c3 = jax.nn.relu(conv(c2, wd3, bd3, 'SAME'))
    dcat = jnp.concatenate([c1, c2, c3, x], axis=-1)
    c4 = conv(dcat, wd4, bd4, 'SAME')
    out = x[..., :3] + c4
    return jnp.transpose(out, (0, 3, 1, 2))


def init_params(key):
    """Deterministic PyTorch-style (uniform +/- 1/sqrt(fan_in)) init, HWIO."""
    def init_conv(k, kh, kw, cin, cout):
        k1, k2 = jax.random.split(k)
        bound = 1.0 / np.sqrt(cin * kh * kw)
        w = jax.random.uniform(k1, (kh, kw, cin, cout), jnp.float32, -bound, bound)
        b = jax.random.uniform(k2, (cout,), jnp.float32, -bound, bound)
        return w, b

    keys = jax.random.split(key, 6)
    wcc0, bcc0 = init_conv(keys[0], 1, 1, 4, 4)
    wcc1, bcc1 = init_conv(keys[1], 1, 1, 4, 4)
    wd1, bd1 = init_conv(keys[2], 3, 3, 12, 16)
    wd2, bd2 = init_conv(keys[3], 3, 3, 16, 16)
    wd3, bd3 = init_conv(keys[4], 3, 3, 16, 16)
    wd4, bd4 = init_conv(keys[5], 3, 3, 52, 3)
    return (wcc0, bcc0, wcc1, bcc1, wd1, bd1, wd2, bd2, wd3, bd3, wd4, bd4)


if __name__ == "__main__":
    key = jax.random.PRNGKey(0)
    kx, kp = jax.random.split(key)
    params = init_params(kp)

    # Spec-sized input (batch=2, 4 channels, 16x16), NCHW like PyTorch.
    x = jax.random.normal(kx, (2, C_IN, H, W), jnp.float32)
    out = jax.block_until_ready(uwcnn_forward(x, params))
    assert out.shape == (2, C_OUT, H, W)
    ref = forward_ref_nchw(x, params)
    np.testing.assert_allclose(np.asarray(out), np.asarray(ref),
                               atol=1e-4, rtol=1e-4)

    # Multi-step grid + padded-batch path (N=5, forced b_blk=2 -> grid of 3).
    x5 = jax.random.normal(jax.random.PRNGKey(1), (5, C_IN, H, W), jnp.float32)
    out5 = jax.block_until_ready(uwcnn_forward(x5, params, b_blk=2))
    ref5 = forward_ref_nchw(x5, params)
    np.testing.assert_allclose(np.asarray(out5), np.asarray(ref5),
                               atol=1e-4, rtol=1e-4)

    # Auto-blocked path with a larger batch.
    x8 = jax.random.normal(jax.random.PRNGKey(2), (8, C_IN, H, W), jnp.float32)
    out8 = jax.block_until_ready(uwcnn_forward(x8, params))
    ref8 = forward_ref_nchw(x8, params)
    np.testing.assert_allclose(np.asarray(out8), np.asarray(ref8),
                               atol=1e-4, rtol=1e-4)

    print("KERNEL_OK")
</pallas_src>

<mosaic_0001>
module attributes {stable_mosaic.version = 11 : i64} {
  func.func @uwcnn_kernel(%arg0: i32, %arg1: memref<4x512xf32, #tpu.memory_space<vmem>>, %arg2: memref<4x4xf32, #tpu.memory_space<vmem>>, %arg3: memref<4x1xf32, #tpu.memory_space<vmem>>, %arg4: memref<4x4xf32, #tpu.memory_space<vmem>>, %arg5: memref<4x1xf32, #tpu.memory_space<vmem>>, %arg6: memref<3x16x36xf32, #tpu.memory_space<vmem>>, %arg7: memref<16x1xf32, #tpu.memory_space<vmem>>, %arg8: memref<3x16x48xf32, #tpu.memory_space<vmem>>, %arg9: memref<16x1xf32, #tpu.memory_space<vmem>>, %arg10: memref<3x16x48xf32, #tpu.memory_space<vmem>>, %arg11: memref<16x1xf32, #tpu.memory_space<vmem>>, %arg12: memref<3x3x156xf32, #tpu.memory_space<vmem>>, %arg13: memref<3x1xf32, #tpu.memory_space<vmem>>, %arg14: memref<3x512xf32, #tpu.memory_space<vmem>>) attributes {dimension_semantics = [#tpu.dimension_semantics<parallel>], iteration_bounds = array<i64: 1>, scalar_prefetch = 0 : i64, scratch_operands = 0 : i64, tpu.core_type = #tpu.core_type<tc>, window_params = [{transform_indices = @transform_0, window_bounds = array<i64: 4, 512>}, {pipeline_mode = #tpu.pipeline_mode<synchronous>, transform_indices = @transform_1, window_bounds = array<i64: 4, 4>}, {pipeline_mode = #tpu.pipeline_mode<synchronous>, transform_indices = @transform_2, window_bounds = array<i64: 4, 1>}, {pipeline_mode = #tpu.pipeline_mode<synchronous>, transform_indices = @transform_3, window_bounds = array<i64: 4, 4>}, {pipeline_mode = #tpu.pipeline_mode<synchronous>, transform_indices = @transform_4, window_bounds = array<i64: 4, 1>}, {pipeline_mode = #tpu.pipeline_mode<synchronous>, transform_indices = @transform_5, window_bounds = array<i64: 3, 16, 36>}, {pipeline_mode = #tpu.pipeline_mode<synchronous>, transform_indices = @transform_6, window_bounds = array<i64: 16, 1>}, {pipeline_mode = #tpu.pipeline_mode<synchronous>, transform_indices = @transform_7, window_bounds = array<i64: 3, 16, 48>}, {pipeline_mode = #tpu.pipeline_mode<synchronous>, transform_indices = @transform_8, window_bounds = array<i64: 16, 1>}, {pipeline_mode = #tpu.pipeline_mode<synchronous>, transform_indices = @transform_9, window_bounds = array<i64: 3, 16, 48>}, {pipeline_mode = #tpu.pipeline_mode<synchronous>, transform_indices = @transform_10, window_bounds = array<i64: 16, 1>}, {pipeline_mode = #tpu.pipeline_mode<synchronous>, transform_indices = @transform_11, window_bounds = array<i64: 3, 3, 156>}, {pipeline_mode = #tpu.pipeline_mode<synchronous>, transform_indices = @transform_12, window_bounds = array<i64: 3, 1>}, {transform_indices = @transform_13, window_bounds = array<i64: 3, 512>}]} {
    %c0 = arith.constant 0 : index
    %c0_0 = arith.constant 0 : index
    %0 = vector.load %arg1[%c0, %c0_0] : memref<4x512xf32, #tpu.memory_space<vmem>>, vector<4x512xf32>
    %1 = tpu.iota {dimensions = array<i32: 1>} : vector<1x512xi32>
    %c15_i32 = arith.constant 15 : i32
    %2 = vector.broadcast %c15_i32 : i32 to vector<1x512xi32>
    %3 = arith.andi %1, %2 : vector<1x512xi32>
    %c4_i32 = arith.constant 4 : i32
    %4 = vector.broadcast %c4_i32 : i32 to vector<1x512xi32>
    %5 = arith.shrsi %1, %4 : vector<1x512xi32>
    %c15_i32_1 = arith.constant 15 : i32
    %6 = vector.broadcast %c15_i32_1 : i32 to vector<1x512xi32>
    %7 = arith.andi %5, %6 : vector<1x512xi32>
    %c1_i32 = arith.constant 1 : i32
    %8 = vector.broadcast %c1_i32 : i32 to vector<1x512xi32>
    %9 = arith.cmpi sge, %3, %8 : vector<1x512xi32>
    %cst = arith.constant 1.000000e+00 : f32
    %cst_2 = arith.constant 0.000000e+00 : f32
    %10 = vector.broadcast %cst : f32 to vector<1x512xf32>
    %11 = vector.broadcast %cst_2 : f32 to vector<1x512xf32>
    %12 = arith.select %9, %10, %11 : vector<1x512xi1>, vector<1x512xf32>
    %c14_i32 = arith.constant 14 : i32
    %13 = vector.broadcast %c14_i32 : i32 to vector<1x512xi32>
    %14 = arith.cmpi sle, %3, %13 : vector<1x512xi32>
    %cst_3 = arith.constant 1.000000e+00 : f32
    %cst_4 = arith.constant 0.000000e+00 : f32
    %15 = vector.broadcast %cst_3 : f32 to vector<1x512xf32>
    %16 = vector.broadcast %cst_4 : f32 to vector<1x512xf32>
    %17 = arith.select %14, %15, %16 : vector<1x512xi1>, vector<1x512xf32>
    %c1_i32_5 = arith.constant 1 : i32
    %18 = vector.broadcast %c1_i32_5 : i32 to vector<1x512xi32>
    %19 = arith.cmpi sge, %7, %18 : vector<1x512xi32>
    %cst_6 = arith.constant 1.000000e+00 : f32
    %cst_7 = arith.constant 0.000000e+00 : f32
    %20 = vector.broadcast %cst_6 : f32 to vector<1x512xf32>
    %21 = vector.broadcast %cst_7 : f32 to vector<1x512xf32>
    %22 = arith.select %19, %20, %21 : vector<1x512xi1>, vector<1x512xf32>
    %c14_i32_8 = arith.constant 14 : i32
    %23 = vector.broadcast %c14_i32_8 : i32 to vector<1x512xi32>
    %24 = arith.cmpi sle, %7, %23 : vector<1x512xi32>
    %cst_9 = arith.constant 1.000000e+00 : f32
    %cst_10 = arith.constant 0.000000e+00 : f32
    %25 = vector.broadcast %cst_9 : f32 to vector<1x512xf32>
    %26 = vector.broadcast %cst_10 : f32 to vector<1x512xf32>
    %27 = arith.select %24, %25, %26 : vector<1x512xi1>, vector<1x512xf32>
    %c0_11 = arith.constant 0 : index
    %c0_12 = arith.constant 0 : index
    %28 = vector.load %arg2[%c0_11, %c0_12] : memref<4x4xf32, #tpu.memory_space<vmem>>, vector<4x4xf32>
    %cst_13 = arith.constant dense<0.000000e+00> : vector<4x512xf32>
    %29 = tpu.matmul %28, %0, %cst_13 {dimension_numbers = #tpu.dot_dimension_numbers<[1], [0], [0], [1], [0, 0, 1, 1], [], []>} : vector<4x4xf32>, vector<4x512xf32>, vector<4x512xf32> -> vector<4x512xf32>
    %c0_14 = arith.constant 0 : index
    %c0_15 = arith.constant 0 : index
    %30 = vector.load %arg3[%c0_14, %c0_15] : memref<4x1xf32, #tpu.memory_space<vmem>>, vector<4x1xf32>
    %31 = vector.broadcast %30 : vector<4x1xf32> to vector<4x512xf32>
    %32 = arith.addf %29, %31 : vector<4x512xf32>
    %cst_16 = arith.constant 0.000000e+00 : f32
    %33 = vector.broadcast %cst_16 : f32 to vector<4x512xf32>
    %34 = arith.maximumf %32, %33 : vector<4x512xf32>
    %c0_17 = arith.constant 0 : index
    %c0_18 = arith.constant 0 : index
    %35 = vector.load %arg4[%c0_17, %c0_18] : memref<4x4xf32, #tpu.memory_space<vmem>>, vector<4x4xf32>
    %cst_19 = arith.constant dense<0.000000e+00> : vector<4x512xf32>
    %36 = tpu.matmul %35, %34, %cst_19 {dimension_numbers = #tpu.dot_dimension_numbers<[1], [0], [0], [1], [0, 0, 1, 1], [], []>} : vector<4x4xf32>, vector<4x512xf32>, vector<4x512xf32> -> vector<4x512xf32>
    %c0_20 = arith.constant 0 : index
    %c0_21 = arith.constant 0 : index
    %37 = vector.load %arg5[%c0_20, %c0_21] : memref<4x1xf32, #tpu.memory_space<vmem>>, vector<4x1xf32>
    %38 = vector.broadcast %37 : vector<4x1xf32> to vector<4x512xf32>
    %39 = arith.addf %36, %38 : vector<4x512xf32>
    %cst_22 = arith.constant 0.000000e+00 : f32
    %40 = vector.broadcast %cst_22 : f32 to vector<4x512xf32>
    %41 = arith.maximumf %39, %40 : vector<4x512xf32>
    %c1_i32_23 = arith.constant 1 : i32
    %42 = tpu.dynamic_rotate %34 by %c1_i32_23 dim 1 : vector<4x512xf32>, i32 -> vector<4x512xf32>
    %43 = vector.broadcast %12 : vector<1x512xf32> to vector<4x512xf32>
    %44 = arith.mulf %42, %43 : vector<4x512xf32>
    %c1_i32_24 = arith.constant 1 : i32
    %45 = tpu.dynamic_rotate %41 by %c1_i32_24 dim 1 : vector<4x512xf32>, i32 -> vector<4x512xf32>
    %46 = vector.broadcast %12 : vector<1x512xf32> to vector<4x512xf32>
    %47 = arith.mulf %45, %46 : vector<4x512xf32>
    %c1_i32_25 = arith.constant 1 : i32
    %48 = tpu.dynamic_rotate %0 by %c1_i32_25 dim 1 : vector<4x512xf32>, i32 -> vector<4x512xf32>
    %49 = vector.broadcast %12 : vector<1x512xf32> to vector<4x512xf32>
    %50 = arith.mulf %48, %49 : vector<4x512xf32>
    %c511_i32 = arith.constant 511 : i32
    %51 = tpu.dynamic_rotate %34 by %c511_i32 dim 1 : vector<4x512xf32>, i32 -> vector<4x512xf32>
    %52 = vector.broadcast %17 : vector<1x512xf32> to vector<4x512xf32>
    %53 = arith.mulf %51, %52 : vector<4x512xf32>
    %c511_i32_26 = arith.constant 511 : i32
    %54 = tpu.dynamic_rotate %41 by %c511_i32_26 dim 1 : vector<4x512xf32>, i32 -> vector<4x512xf32>
    %55 = vector.broadcast %17 : vector<1x512xf32> to vector<4x512xf32>
    %56 = arith.mulf %54, %55 : vector<4x512xf32>
    %c511_i32_27 = arith.constant 511 : i32
    %57 = tpu.dynamic_rotate %0 by %c511_i32_27 dim 1 : vector<4x512xf32>, i32 -> vector<4x512xf32>
    %58 = vector.broadcast %17 : vector<1x512xf32> to vector<4x512xf32>
    %59 = arith.mulf %57, %58 : vector<4x512xf32>
    %60 = tpu.concatenate %44, %47, %50, %34, %41, %0, %53, %56, %59 in 0 : vector<4x512xf32>, vector<4x512xf32>, vector<4x512xf32>, vector<4x512xf32>, vector<4x512xf32>, vector<4x512xf32>, vector<4x512xf32>, vector<4x512xf32>, vector<4x512xf32> -> vector<36x512xf32>
    %c1 = arith.constant 1 : index
    %c0_28 = arith.constant 0 : index
    %c0_29 = arith.constant 0 : index
    %61 = vector.load %arg6[%c1, %c0_28, %c0_29] : memref<3x16x36xf32, #tpu.memory_space<vmem>>, vector<1x16x36xf32>
    %62 = vector.shape_cast %61 : vector<1x16x36xf32> to vector<16x36xf32>
    %cst_30 = arith.constant dense<0.000000e+00> : vector<16x512xf32>
    %63 = tpu.matmul %62, %60, %cst_30 {dimension_numbers = #tpu.dot_dimension_numbers<[1], [0], [0], [1], [0, 0, 1, 1], [], []>} : vector<16x36xf32>, vector<36x512xf32>, vector<16x512xf32> -> vector<16x512xf32>
    %c16_i32 = arith.constant 16 : i32
    %64 = tpu.dynamic_rotate %60 by %c16_i32 dim 1 : vector<36x512xf32>, i32 -> vector<36x512xf32>
    %65 = vector.broadcast %22 : vector<1x512xf32> to vector<36x512xf32>
    %66 = arith.mulf %64, %65 : vector<36x512xf32>
    %c0_31 = arith.constant 0 : index
    %c0_32 = arith.constant 0 : index
    %c0_33 = arith.constant 0 : index
    %67 = vector.load %arg6[%c0_31, %c0_32, %c0_33] : memref<3x16x36xf32, #tpu.memory_space<vmem>>, vector<1x16x36xf32>
    %68 = vector.shape_cast %67 : vector<1x16x36xf32> to vector<16x36xf32>
    %cst_34 = arith.constant dense<0.000000e+00> : vector<16x512xf32>
    %69 = tpu.matmul %68, %66, %cst_34 {dimension_numbers = #tpu.dot_dimension_numbers<[1], [0], [0], [1], [0, 0, 1, 1], [], []>} : vector<16x36xf32>, vector<36x512xf32>, vector<16x512xf32> -> vector<16x512xf32>
    %70 = arith.addf %63, %69 : vector<16x512xf32>
    %c496_i32 = arith.constant 496 : i32
    %71 = tpu.dynamic_rotate %60 by %c496_i32 dim 1 : vector<36x512xf32>, i32 -> vector<36x512xf32>
    %72 = vector.broadcast %27 : vector<1x512xf32> to vector<36x512xf32>
    %73 = arith.mulf %71, %72 : vector<36x512xf32>
    %c2 = arith.constant 2 : index
    %c0_35 = arith.constant 0 : index
    %c0_36 = arith.constant 0 : index
    %74 = vector.load %arg6[%c2, %c0_35, %c0_36] : memref<3x16x36xf32, #tpu.memory_space<vmem>>, vector<1x16x36xf32>
    %75 = vector.shape_cast %74 : vector<1x16x36xf32> to vector<16x36xf32>
    %cst_37 = arith.constant dense<0.000000e+00> : vector<16x512xf32>
    %76 = tpu.matmul %75, %73, %cst_37 {dimension_numbers = #tpu.dot_dimension_numbers<[1], [0], [0], [1], [0, 0, 1, 1], [], []>} : vector<16x36xf32>, vector<36x512xf32>, vector<16x512xf32> -> vector<16x512xf32>
    %77 = arith.addf %70, %76 : vector<16x512xf32>
    %c0_38 = arith.constant 0 : index
    %c0_39 = arith.constant 0 : index
    %78 = vector.load %arg7[%c0_38, %c0_39] : memref<16x1xf32, #tpu.memory_space<vmem>>, vector<16x1xf32>
    %79 = vector.broadcast %78 : vector<16x1xf32> to vector<16x512xf32>
    %80 = arith.addf %77, %79 : vector<16x512xf32>
    %cst_40 = arith.constant 0.000000e+00 : f32
    %81 = vector.broadcast %cst_40 : f32 to vector<16x512xf32>
    %82 = arith.maximumf %80, %81 : vector<16x512xf32>
    %c1_i32_41 = arith.constant 1 : i32
    %83 = tpu.dynamic_rotate %82 by %c1_i32_41 dim 1 : vector<16x512xf32>, i32 -> vector<16x512xf32>
    %84 = vector.broadcast %12 : vector<1x512xf32> to vector<16x512xf32>
    %85 = arith.mulf %83, %84 : vector<16x512xf32>
    %c511_i32_42 = arith.constant 511 : i32
    %86 = tpu.dynamic_rotate %82 by %c511_i32_42 dim 1 : vector<16x512xf32>, i32 -> vector<16x512xf32>
    %87 = vector.broadcast %17 : vector<1x512xf32> to vector<16x512xf32>
    %88 = arith.mulf %86, %87 : vector<16x512xf32>
    %89 = tpu.concatenate %85, %82, %88 in 0 : vector<16x512xf32>, vector<16x512xf32>, vector<16x512xf32> -> vector<48x512xf32>
    %c1_43 = arith.constant 1 : index
    %c0_44 = arith.constant 0 : index
    %c0_45 = arith.constant 0 : index
    %90 = vector.load %arg8[%c1_43, %c0_44, %c0_45] : memref<3x16x48xf32, #tpu.memory_space<vmem>>, vector<1x16x48xf32>
    %91 = vector.shape_cast %90 : vector<1x16x48xf32> to vector<16x48xf32>
    %cst_46 = arith.constant dense<0.000000e+00> : vector<16x512xf32>
    %92 = tpu.matmul %91, %89, %cst_46 {dimension_numbers = #tpu.dot_dimension_numbers<[1], [0], [0], [1], [0, 0, 1, 1], [], []>} : vector<16x48xf32>, vector<48x512xf32>, vector<16x512xf32> -> vector<16x512xf32>
    %c16_i32_47 = arith.constant 16 : i32
    %93 = tpu.dynamic_rotate %89 by %c16_i32_47 dim 1 : vector<48x512xf32>, i32 -> vector<48x512xf32>
    %94 = vector.broadcast %22 : vector<1x512xf32> to vector<48x512xf32>
    %95 = arith.mulf %93, %94 : vector<48x512xf32>
    %c0_48 = arith.constant 0 : index
    %c0_49 = arith.constant 0 : index
    %c0_50 = arith.constant 0 : index
    %96 = vector.load %arg8[%c0_48, %c0_49, %c0_50] : memref<3x16x48xf32, #tpu.memory_space<vmem>>, vector<1x16x48xf32>
    %97 = vector.shape_cast %96 : vector<1x16x48xf32> to vector<16x48xf32>
    %cst_51 = arith.constant dense<0.000000e+00> : vector<16x512xf32>
    %98 = tpu.matmul %97, %95, %cst_51 {dimension_numbers = #tpu.dot_dimension_numbers<[1], [0], [0], [1], [0, 0, 1, 1], [], []>} : vector<16x48xf32>, vector<48x512xf32>, vector<16x512xf32> -> vector<16x512xf32>
    %99 = arith.addf %92, %98 : vector<16x512xf32>
    %c496_i32_52 = arith.constant 496 : i32
    %100 = tpu.dynamic_rotate %89 by %c496_i32_52 dim 1 : vector<48x512xf32>, i32 -> vector<48x512xf32>
    %101 = vector.broadcast %27 : vector<1x512xf32> to vector<48x512xf32>
    %102 = arith.mulf %100, %101 : vector<48x512xf32>
    %c2_53 = arith.constant 2 : index
    %c0_54 = arith.constant 0 : index
    %c0_55 = arith.constant 0 : index
    %103 = vector.load %arg8[%c2_53, %c0_54, %c0_55] : memref<3x16x48xf32, #tpu.memory_space<vmem>>, vector<1x16x48xf32>
    %104 = vector.shape_cast %103 : vector<1x16x48xf32> to vector<16x48xf32>
    %cst_56 = arith.constant dense<0.000000e+00> : vector<16x512xf32>
    %105 = tpu.matmul %104, %102, %cst_56 {dimension_numbers = #tpu.dot_dimension_numbers<[1], [0], [0], [1], [0, 0, 1, 1], [], []>} : vector<16x48xf32>, vector<48x512xf32>, vector<16x512xf32> -> vector<16x512xf32>
    %106 = arith.addf %99, %105 : vector<16x512xf32>
    %c0_57 = arith.constant 0 : index
    %c0_58 = arith.constant 0 : index
    %107 = vector.load %arg9[%c0_57, %c0_58] : memref<16x1xf32, #tpu.memory_space<vmem>>, vector<16x1xf32>
    %108 = vector.broadcast %107 : vector<16x1xf32> to vector<16x512xf32>
    %109 = arith.addf %106, %108 : vector<16x512xf32>
    %cst_59 = arith.constant 0.000000e+00 : f32
    %110 = vector.broadcast %cst_59 : f32 to vector<16x512xf32>
    %111 = arith.maximumf %109, %110 : vector<16x512xf32>
    %c1_i32_60 = arith.constant 1 : i32
    %112 = tpu.dynamic_rotate %111 by %c1_i32_60 dim 1 : vector<16x512xf32>, i32 -> vector<16x512xf32>
    %113 = vector.broadcast %12 : vector<1x512xf32> to vector<16x512xf32>
    %114 = arith.mulf %112, %113 : vector<16x512xf32>
    %c511_i32_61 = arith.constant 511 : i32
    %115 = tpu.dynamic_rotate %111 by %c511_i32_61 dim 1 : vector<16x512xf32>, i32 -> vector<16x512xf32>
    %116 = vector.broadcast %17 : vector<1x512xf32> to vector<16x512xf32>
    %117 = arith.mulf %115, %116 : vector<16x512xf32>
    %118 = tpu.concatenate %114, %111, %117 in 0 : vector<16x512xf32>, vector<16x512xf32>, vector<16x512xf32> -> vector<48x512xf32>
    %c1_62 = arith.constant 1 : index
    %c0_63 = arith.constant 0 : index
    %c0_64 = arith.constant 0 : index
    %119 = vector.load %arg10[%c1_62, %c0_63, %c0_64] : memref<3x16x48xf32, #tpu.memory_space<vmem>>, vector<1x16x48xf32>
    %120 = vector.shape_cast %119 : vector<1x16x48xf32> to vector<16x48xf32>
    %cst_65 = arith.constant dense<0.000000e+00> : vector<16x512xf32>
    %121 = tpu.matmul %120, %118, %cst_65 {dimension_numbers = #tpu.dot_dimension_numbers<[1], [0], [0], [1], [0, 0, 1, 1], [], []>} : vector<16x48xf32>, vector<48x512xf32>, vector<16x512xf32> -> vector<16x512xf32>
    %c16_i32_66 = arith.constant 16 : i32
    %122 = tpu.dynamic_rotate %118 by %c16_i32_66 dim 1 : vector<48x512xf32>, i32 -> vector<48x512xf32>
    %123 = vector.broadcast %22 : vector<1x512xf32> to vector<48x512xf32>
    %124 = arith.mulf %122, %123 : vector<48x512xf32>
    %c0_67 = arith.constant 0 : index
    %c0_68 = arith.constant 0 : index
    %c0_69 = arith.constant 0 : index
    %125 = vector.load %arg10[%c0_67, %c0_68, %c0_69] : memref<3x16x48xf32, #tpu.memory_space<vmem>>, vector<1x16x48xf32>
    %126 = vector.shape_cast %125 : vector<1x16x48xf32> to vector<16x48xf32>
    %cst_70 = arith.constant dense<0.000000e+00> : vector<16x512xf32>
    %127 = tpu.matmul %126, %124, %cst_70 {dimension_numbers = #tpu.dot_dimension_numbers<[1], [0], [0], [1], [0, 0, 1, 1], [], []>} : vector<16x48xf32>, vector<48x512xf32>, vector<16x512xf32> -> vector<16x512xf32>
    %128 = arith.addf %121, %127 : vector<16x512xf32>
    %c496_i32_71 = arith.constant 496 : i32
    %129 = tpu.dynamic_rotate %118 by %c496_i32_71 dim 1 : vector<48x512xf32>, i32 -> vector<48x512xf32>
    %130 = vector.broadcast %27 : vector<1x512xf32> to vector<48x512xf32>
    %131 = arith.mulf %129, %130 : vector<48x512xf32>
    %c2_72 = arith.constant 2 : index
    %c0_73 = arith.constant 0 : index
    %c0_74 = arith.constant 0 : index
    %132 = vector.load %arg10[%c2_72, %c0_73, %c0_74] : memref<3x16x48xf32, #tpu.memory_space<vmem>>, vector<1x16x48xf32>
    %133 = vector.shape_cast %132 : vector<1x16x48xf32> to vector<16x48xf32>
    %cst_75 = arith.constant dense<0.000000e+00> : vector<16x512xf32>
    %134 = tpu.matmul %133, %131, %cst_75 {dimension_numbers = #tpu.dot_dimension_numbers<[1], [0], [0], [1], [0, 0, 1, 1], [], []>} : vector<16x48xf32>, vector<48x512xf32>, vector<16x512xf32> -> vector<16x512xf32>
    %135 = arith.addf %128, %134 : vector<16x512xf32>
    %c0_76 = arith.constant 0 : index
    %c0_77 = arith.constant 0 : index
    %136 = vector.load %arg11[%c0_76, %c0_77] : memref<16x1xf32, #tpu.memory_space<vmem>>, vector<16x1xf32>
    %137 = vector.broadcast %136 : vector<16x1xf32> to vector<16x512xf32>
    %138 = arith.addf %135, %137 : vector<16x512xf32>
    %cst_78 = arith.constant 0.000000e+00 : f32
    %139 = vector.broadcast %cst_78 : f32 to vector<16x512xf32>
    %140 = arith.maximumf %138, %139 : vector<16x512xf32>
    %c1_i32_79 = arith.constant 1 : i32
    %141 = tpu.dynamic_rotate %82 by %c1_i32_79 dim 1 : vector<16x512xf32>, i32 -> vector<16x512xf32>
    %142 = vector.broadcast %12 : vector<1x512xf32> to vector<16x512xf32>
    %143 = arith.mulf %141, %142 : vector<16x512xf32>
    %c1_i32_80 = arith.constant 1 : i32
    %144 = tpu.dynamic_rotate %111 by %c1_i32_80 dim 1 : vector<16x512xf32>, i32 -> vector<16x512xf32>
    %145 = vector.broadcast %12 : vector<1x512xf32> to vector<16x512xf32>
    %146 = arith.mulf %144, %145 : vector<16x512xf32>
    %c1_i32_81 = arith.constant 1 : i32
    %147 = tpu.dynamic_rotate %140 by %c1_i32_81 dim 1 : vector<16x512xf32>, i32 -> vector<16x512xf32>
    %148 = vector.broadcast %12 : vector<1x512xf32> to vector<16x512xf32>
    %149 = arith.mulf %147, %148 : vector<16x512xf32>
    %c1_i32_82 = arith.constant 1 : i32
    %150 = tpu.dynamic_rotate %0 by %c1_i32_82 dim 1 : vector<4x512xf32>, i32 -> vector<4x512xf32>
    %151 = vector.broadcast %12 : vector<1x512xf32> to vector<4x512xf32>
    %152 = arith.mulf %150, %151 : vector<4x512xf32>
    %c511_i32_83 = arith.constant 511 : i32
    %153 = tpu.dynamic_rotate %82 by %c511_i32_83 dim 1 : vector<16x512xf32>, i32 -> vector<16x512xf32>
    %154 = vector.broadcast %17 : vector<1x512xf32> to vector<16x512xf32>
    %155 = arith.mulf %153, %154 : vector<16x512xf32>
    %c511_i32_84 = arith.constant 511 : i32
    %156 = tpu.dynamic_rotate %111 by %c511_i32_84 dim 1 : vector<16x512xf32>, i32 -> vector<16x512xf32>
    %157 = vector.broadcast %17 : vector<1x512xf32> to vector<16x512xf32>
    %158 = arith.mulf %156, %157 : vector<16x512xf32>
    %c511_i32_85 = arith.constant 511 : i32
    %159 = tpu.dynamic_rotate %140 by %c511_i32_85 dim 1 : vector<16x512xf32>, i32 -> vector<16x512xf32>
    %160 = vector.broadcast %17 : vector<1x512xf32> to vector<16x512xf32>
    %161 = arith.mulf %159, %160 : vector<16x512xf32>
    %c511_i32_86 = arith.constant 511 : i32
    %162 = tpu.dynamic_rotate %0 by %c511_i32_86 dim 1 : vector<4x512xf32>, i32 -> vector<4x512xf32>
    %163 = vector.broadcast %17 : vector<1x512xf32> to vector<4x512xf32>
    %164 = arith.mulf %162, %163 : vector<4x512xf32>
    %165 = tpu.concatenate %143, %146, %149, %152, %82, %111, %140, %0, %155, %158, %161, %164 in 0 : vector<16x512xf32>, vector<16x512xf32>, vector<16x512xf32>, vector<4x512xf32>, vector<16x512xf32>, vector<16x512xf32>, vector<16x512xf32>, vector<4x512xf32>, vector<16x512xf32>, vector<16x512xf32>, vector<16x512xf32>, vector<4x512xf32> -> vector<156x512xf32>
    %c1_87 = arith.constant 1 : index
    %c0_88 = arith.constant 0 : index
    %c0_89 = arith.constant 0 : index
    %166 = vector.load %arg12[%c1_87, %c0_88, %c0_89] : memref<3x3x156xf32, #tpu.memory_space<vmem>>, vector<1x3x156xf32>
    %167 = vector.shape_cast %166 : vector<1x3x156xf32> to vector<3x156xf32>
    %cst_90 = arith.constant dense<0.000000e+00> : vector<3x512xf32>
    %168 = tpu.matmul %167, %165, %cst_90 {dimension_numbers = #tpu.dot_dimension_numbers<[1], [0], [0], [1], [0, 0, 1, 1], [], []>} : vector<3x156xf32>, vector<156x512xf32>, vector<3x512xf32> -> vector<3x512xf32>
    %c16_i32_91 = arith.constant 16 : i32
    %169 = tpu.dynamic_rotate %165 by %c16_i32_91 dim 1 : vector<156x512xf32>, i32 -> vector<156x512xf32>
    %170 = vector.broadcast %22 : vector<1x512xf32> to vector<156x512xf32>
    %171 = arith.mulf %169, %170 : vector<156x512xf32>
    %c0_92 = arith.constant 0 : index
    %c0_93 = arith.constant 0 : index
    %c0_94 = arith.constant 0 : index
    %172 = vector.load %arg12[%c0_92, %c0_93, %c0_94] : memref<3x3x156xf32, #tpu.memory_space<vmem>>, vector<1x3x156xf32>
    %173 = vector.shape_cast %172 : vector<1x3x156xf32> to vector<3x156xf32>
    %cst_95 = arith.constant dense<0.000000e+00> : vector<3x512xf32>
    %174 = tpu.matmul %173, %171, %cst_95 {dimension_numbers = #tpu.dot_dimension_numbers<[1], [0], [0], [1], [0, 0, 1, 1], [], []>} : vector<3x156xf32>, vector<156x512xf32>, vector<3x512xf32> -> vector<3x512xf32>
    %175 = arith.addf %168, %174 : vector<3x512xf32>
    %c496_i32_96 = arith.constant 496 : i32
    %176 = tpu.dynamic_rotate %165 by %c496_i32_96 dim 1 : vector<156x512xf32>, i32 -> vector<156x512xf32>
    %177 = vector.broadcast %27 : vector<1x512xf32> to vector<156x512xf32>
    %178 = arith.mulf %176, %177 : vector<156x512xf32>
    %c2_97 = arith.constant 2 : index
    %c0_98 = arith.constant 0 : index
    %c0_99 = arith.constant 0 : index
    %179 = vector.load %arg12[%c2_97, %c0_98, %c0_99] : memref<3x3x156xf32, #tpu.memory_space<vmem>>, vector<1x3x156xf32>
    %180 = vector.shape_cast %179 : vector<1x3x156xf32> to vector<3x156xf32>
    %cst_100 = arith.constant dense<0.000000e+00> : vector<3x512xf32>
    %181 = tpu.matmul %180, %178, %cst_100 {dimension_numbers = #tpu.dot_dimension_numbers<[1], [0], [0], [1], [0, 0, 1, 1], [], []>} : vector<3x156xf32>, vector<156x512xf32>, vector<3x512xf32> -> vector<3x512xf32>
    %182 = arith.addf %175, %181 : vector<3x512xf32>
    %c0_101 = arith.constant 0 : index
    %c0_102 = arith.constant 0 : index
    %183 = vector.load %arg13[%c0_101, %c0_102] : memref<3x1xf32, #tpu.memory_space<vmem>>, vector<3x1xf32>
    %184 = vector.broadcast %183 : vector<3x1xf32> to vector<3x512xf32>
    %185 = arith.addf %182, %184 : vector<3x512xf32>
    %186 = vector.extract_strided_slice %0 {offsets = [0, 0], sizes = [3, 512], strides = [1, 1]} : vector<4x512xf32> to vector<3x512xf32>
    %187 = arith.addf %186, %185 : vector<3x512xf32>
    %c0_103 = arith.constant 0 : index
    %c0_104 = arith.constant 0 : index
    %188 = vector.load %arg14[%c0_103, %c0_104] : memref<3x512xf32, #tpu.memory_space<vmem>>, vector<3x512xf32>
    tpu.vector_store %arg14[%c0_103, %c0_104], %187 {strides = array<i32>} : memref<3x512xf32, #tpu.memory_space<vmem>>, vector<3x512xf32>,
    return
  }
  func.func @transform_0(%arg0: i32) -> (i32, i32) {
    %c0_i32 = arith.constant 0 : i32
    %c0_i32_0 = arith.constant 0 : i32
    return %c0_i32, %arg0 : i32, i32
  }
  func.func @transform_1(%arg0: i32) -> (i32, i32) {
    %c0_i32 = arith.constant 0 : i32
    %c0_i32_0 = arith.constant 0 : i32
    %c0_i32_1 = arith.constant 0 : i32
    return %c0_i32, %c0_i32_0 : i32, i32
  }
  func.func @transform_2(%arg0: i32) -> (i32, i32) {
    %c0_i32 = arith.constant 0 : i32
    %c0_i32_0 = arith.constant 0 : i32
    %c0_i32_1 = arith.constant 0 : i32
    return %c0_i32, %c0_i32_0 : i32, i32
  }
  func.func @transform_3(%arg0: i32) -> (i32, i32) {
    %c0_i32 = arith.constant 0 : i32
    %c0_i32_0 = arith.constant 0 : i32
    %c0_i32_1 = arith.constant 0 : i32
    return %c0_i32, %c0_i32_0 : i32, i32
  }
  func.func @transform_4(%arg0: i32) -> (i32, i32) {
    %c0_i32 = arith.constant 0 : i32
    %c0_i32_0 = arith.constant 0 : i32
    %c0_i32_1 = arith.constant 0 : i32
    return %c0_i32, %c0_i32_0 : i32, i32
  }
  func.func @transform_5(%arg0: i32) -> (i32, i32, i32) {
    %c0_i32 = arith.constant 0 : i32
    %c0_i32_0 = arith.constant 0 : i32
    %c0_i32_1 = arith.constant 0 : i32
    %c0_i32_2 = arith.constant 0 : i32
    return %c0_i32, %c0_i32_0, %c0_i32_1 : i32, i32, i32
  }
  func.func @transform_6(%arg0: i32) -> (i32, i32) {
    %c0_i32 = arith.constant 0 : i32
    %c0_i32_0 = arith.constant 0 : i32
    %c0_i32_1 = arith.constant 0 : i32
    return %c0_i32, %c0_i32_0 : i32, i32
  }
  func.func @transform_7(%arg0: i32) -> (i32, i32, i32) {
    %c0_i32 = arith.constant 0 : i32
    %c0_i32_0 = arith.constant 0 : i32
    %c0_i32_1 = arith.constant 0 : i32
    %c0_i32_2 = arith.constant 0 : i32
    return %c0_i32, %c0_i32_0, %c0_i32_1 : i32, i32, i32
  }
  func.func @transform_8(%arg0: i32) -> (i32, i32) {
    %c0_i32 = arith.constant 0 : i32
    %c0_i32_0 = arith.constant 0 : i32
    %c0_i32_1 = arith.constant 0 : i32
    return %c0_i32, %c0_i32_0 : i32, i32
  }
  func.func @transform_9(%arg0: i32) -> (i32, i32, i32) {
    %c0_i32 = arith.constant 0 : i32
    %c0_i32_0 = arith.constant 0 : i32
    %c0_i32_1 = arith.constant 0 : i32
    %c0_i32_2 = arith.constant 0 : i32
    return %c0_i32, %c0_i32_0, %c0_i32_1 : i32, i32, i32
  }
  func.func @transform_10(%arg0: i32) -> (i32, i32) {
    %c0_i32 = arith.constant 0 : i32
    %c0_i32_0 = arith.constant 0 : i32
    %c0_i32_1 = arith.constant 0 : i32
    return %c0_i32, %c0_i32_0 : i32, i32
  }
  func.func @transform_11(%arg0: i32) -> (i32, i32, i32) {
    %c0_i32 = arith.constant 0 : i32
    %c0_i32_0 = arith.constant 0 : i32
    %c0_i32_1 = arith.constant 0 : i32
    %c0_i32_2 = arith.constant 0 : i32
    return %c0_i32, %c0_i32_0, %c0_i32_1 : i32, i32, i32
  }
  func.func @transform_12(%arg0: i32) -> (i32, i32) {
    %c0_i32 = arith.constant 0 : i32
    %c0_i32_0 = arith.constant 0 : i32
    %c0_i32_1 = arith.constant 0 : i32
    return %c0_i32, %c0_i32_0 : i32, i32
  }
  func.func @transform_13(%arg0: i32) -> (i32, i32) {
    %c0_i32 = arith.constant 0 : i32
    %c0_i32_0 = arith.constant 0 : i32
    return %c0_i32, %arg0 : i32, i32
  }
}

</mosaic_0001>

<llo_original>
// kernel: tpu_custom_call.1
$region0: #{tpu_custom_call.1}
  #allocation0 [shape = 'u32[]', space=smem, size = 0x4, offset = 0x4, fixed_abs, tag = 'smem constant byte address 0x4 - core index']
  #allocation1 [shape = 'u32[144,128]{1,0:T(1,128)}', space=vmem, size = 0x12000, scoped, tag = 'internal scratch']
  %s0 = inlined_call_operand.hbm [shape: f32[4,512], index: 0, kind: input, shape index: {}]
  %s1 = inlined_call_operand.hbm [shape: f32[4,4], index: 1, kind: input, shape index: {}]
  %s2 = inlined_call_operand.vmem [shape: f32[4,1], index: 2, kind: input, shape index: {}]
  %s3 = inlined_call_operand.hbm [shape: f32[4,4], index: 3, kind: input, shape index: {}]
  %s4 = inlined_call_operand.vmem [shape: f32[4,1], index: 4, kind: input, shape index: {}]
  %s5 = inlined_call_operand.vmem [shape: f32[3,16,36], index: 5, kind: input, shape index: {}]
  %s6 = inlined_call_operand.vmem [shape: f32[16,1], index: 6, kind: input, shape index: {}]
  %s7 = inlined_call_operand.hbm [shape: f32[3,16,48], index: 7, kind: input, shape index: {}]
  %s8 = inlined_call_operand.vmem [shape: f32[16,1], index: 8, kind: input, shape index: {}]
  %s9 = inlined_call_operand.hbm [shape: f32[3,16,48], index: 9, kind: input, shape index: {}]
  %s10 = inlined_call_operand.vmem [shape: f32[16,1], index: 10, kind: input, shape index: {}]
  %s11 = inlined_call_operand.vmem [shape: f32[3,3,156], index: 11, kind: input, shape index: {}]
  %s12 = inlined_call_operand.vmem [shape: f32[3,1], index: 12, kind: input, shape index: {}]
  %s13 = inlined_call_operand.hbm [shape: f32[3,512], index: 13, kind: output, shape index: {}]
  %s14 = sld [smem:[#allocation0]]
  $region82: #{tpu_custom_call.1} parent=0
    _
  %s16 = ssub.s32 1, %s14
  %s17 = scalar_select 0, %s16, %s14
  $region1: #{tpu_custom_call.1} parent=0
    #allocation2 [shape = 'u8[8192]{0}', space=vmem, size = 0x2000, scoped, tag = 'input window, operand 0, single buffered']
    #allocation3 [shape = 's32[1]{0}', space=sflag, size = 0x4, scoped, tag = 'scoped memory for tpu_custom_call.1']
    #allocation4 [shape = 's32[1]{0}', space=sflag, size = 0x4, scoped, tag = 'scoped memory for tpu_custom_call.1']
    #allocation5 [shape = 'u8[2048]{0}', space=vmem, size = 0x800, scoped, tag = 'input window, operand 1, single buffered']
    #allocation6 [shape = 's32[1]{0}', space=sflag, size = 0x4, scoped, tag = 'scoped memory for tpu_custom_call.1']
    #allocation7 [shape = 'u8[2048]{0}', space=vmem, size = 0x800, scoped, tag = 'input window, operand 3, single buffered']
    #allocation8 [shape = 'u8[24576]{0}', space=vmem, size = 0x6000, scoped, tag = 'input window, operand 7, single buffered']
    #allocation9 [shape = 's32[1]{0}', space=sflag, size = 0x4, scoped, tag = 'scoped memory for tpu_custom_call.1']
    #allocation10 [shape = 'u8[24576]{0}', space=vmem, size = 0x6000, scoped, tag = 'input window, operand 9, single buffered']
    #allocation11 [shape = 'u8[8192]{0}', space=vmem, size = 0x2000, scoped, tag = 'output window, operand 0, single buffered']
    %18 = vsyncpa [#allocation3], 0
    %19 = vsyncpa [#allocation6], 0
    %20 = vsyncpa [#allocation9], 0
    %21 = vsyncpa [#allocation4], 0
    // Predicated region
    $region2: #{tpu_custom_call.1} parent=1 // pred_check
      _
    $region3: #{tpu_custom_call.1} parent=1 // pred_check_branch
      %23 = sbr.rel (0) target = $region5
    $region4: #{tpu_custom_call.1} parent=1 // pred_region
      %s25 = ssub.s32 256, 256
      %26 = vsyncadd [#allocation3], %s25
      %s28 = sshll.u32 [#allocation2], 4
      %s29 = int_to_ptr.vmem [resolvable:$true] %s28
      %31 = dma.hbm_to_vmem [thread:$0]  %s0, 256, %s29, [#allocation3]
    $region5: #{tpu_custom_call.1} parent=1 // pred_fallthru
      _
    // Predicated region
    $region6: #{tpu_custom_call.1} parent=1 // pred_check
      _
    $region7: #{tpu_custom_call.1} parent=1 // pred_check_branch
      %33 = sbr.rel (0) target = $region9
    $region8: #{tpu_custom_call.1} parent=1 // pred_region
      %s35 = ssub.s32 64, 64
      %36 = vsyncadd [#allocation6], %s35
      %s38 = sshll.u32 [#allocation5], 4
      %s39 = int_to_ptr.vmem [resolvable:$true] %s38
      %41 = dma.hbm_to_vmem [thread:$0]  %s1, 64, %s39, [#allocation6]
    $region9: #{tpu_custom_call.1} parent=1 // pred_fallthru
      _
    // Predicated region
    $region10: #{tpu_custom_call.1} parent=1 // pred_check
      _
    $region11: #{tpu_custom_call.1} parent=1 // pred_check_branch
      %43 = sbr.rel (0) target = $region13
    $region12: #{tpu_custom_call.1} parent=1 // pred_region
      _
    $region13: #{tpu_custom_call.1} parent=1 // pred_fallthru
      _
    // Predicated region
    $region14: #{tpu_custom_call.1} parent=1 // pred_check
      _
    $region15: #{tpu_custom_call.1} parent=1 // pred_check_branch
      %45 = sbr.rel (0) target = $region17
    $region16: #{tpu_custom_call.1} parent=1 // pred_region
      %s47 = ssub.s32 64, 64
      %48 = vsyncadd [#allocation6], %s47
      %s50 = sshll.u32 [#allocation7], 4
      %s51 = int_to_ptr.vmem [resolvable:$true] %s50
      %53 = dma.hbm_to_vmem [thread:$0]  %s3, 64, %s51, [#allocation6]
    $region17: #{tpu_custom_call.1} parent=1 // pred_fallthru
      _
    // Predicated region
    $region18: #{tpu_custom_call.1} parent=1 // pred_check
      _
    $region19: #{tpu_custom_call.1} parent=1 // pred_check_branch
      %55 = sbr.rel (0) target = $region21
    $region20: #{tpu_custom_call.1} parent=1 // pred_region
      _
    $region21: #{tpu_custom_call.1} parent=1 // pred_fallthru
      _
    // Predicated region
    $region22: #{tpu_custom_call.1} parent=1 // pred_check
      _
    $region23: #{tpu_custom_call.1} parent=1 // pred_check_branch
      %57 = sbr.rel (0) target = $region25
    $region24: #{tpu_custom_call.1} parent=1 // pred_region
      _
    $region25: #{tpu_custom_call.1} parent=1 // pred_fallthru
      _
    // Predicated region
    $region26: #{tpu_custom_call.1} parent=1 // pred_check
      _
    $region27: #{tpu_custom_call.1} parent=1 // pred_check_branch
      %59 = sbr.rel (0) target = $region29
    $region28: #{tpu_custom_call.1} parent=1 // pred_region
      _
    $region29: #{tpu_custom_call.1} parent=1 // pred_fallthru
      _
    // Predicated region
    $region30: #{tpu_custom_call.1} parent=1 // pred_check
      _
    $region31: #{tpu_custom_call.1} parent=1 // pred_check_branch
      %61 = sbr.rel (0) target = $region33
    $region32: #{tpu_custom_call.1} parent=1 // pred_region
      %s63 = ssub.s32 768, 768
      %64 = vsyncadd [#allocation9], %s63
      %s65 = sshll.u32 [#allocation8], 4
      %s66 = int_to_ptr.vmem [resolvable:$true] %s65
      %71 = dma.hbm_to_vmem [thread:$0]  %s7, 768, %s66, [#allocation9], 128, 128, 8
    $region33: #{tpu_custom_call.1} parent=1 // pred_fallthru
      _
    // Predicated region
    $region34: #{tpu_custom_call.1} parent=1 // pred_check
      _
    $region35: #{tpu_custom_call.1} parent=1 // pred_check_branch
      %73 = sbr.rel (0) target = $region37
    $region36: #{tpu_custom_call.1} parent=1 // pred_region
      _
    $region37: #{tpu_custom_call.1} parent=1 // pred_fallthru
      _
    // Predicated region
    $region38: #{tpu_custom_call.1} parent=1 // pred_check
      _
    $region39: #{tpu_custom_call.1} parent=1 // pred_check_branch
      %75 = sbr.rel (0) target = $region41
    $region40: #{tpu_custom_call.1} parent=1 // pred_region
      %s77 = ssub.s32 768, 768
      %78 = vsyncadd [#allocation9], %s77
      %s79 = sshll.u32 [#allocation10], 4
      %s80 = int_to_ptr.vmem [resolvable:$true] %s79
      %85 = dma.hbm_to_vmem [thread:$0]  %s9, 768, %s80, [#allocation9], 128, 128, 8
    $region41: #{tpu_custom_call.1} parent=1 // pred_fallthru
      _
    // Predicated region
    $region42: #{tpu_custom_call.1} parent=1 // pred_check
      _
    $region43: #{tpu_custom_call.1} parent=1 // pred_check_branch
      %87 = sbr.rel (0) target = $region45
    $region44: #{tpu_custom_call.1} parent=1 // pred_region
      _
    $region45: #{tpu_custom_call.1} parent=1 // pred_fallthru
      _
    // Predicated region
    $region46: #{tpu_custom_call.1} parent=1 // pred_check
      _
    $region47: #{tpu_custom_call.1} parent=1 // pred_check_branch
      %89 = sbr.rel (0) target = $region49
    $region48: #{tpu_custom_call.1} parent=1 // pred_region
      _
    $region49: #{tpu_custom_call.1} parent=1 // pred_fallthru
      _
    // Predicated region
    $region50: #{tpu_custom_call.1} parent=1 // pred_check
      _
    $region51: #{tpu_custom_call.1} parent=1 // pred_check_branch
      %91 = sbr.rel (0) target = $region53
    $region52: #{tpu_custom_call.1} parent=1 // pred_region
      _
    $region53: #{tpu_custom_call.1} parent=1 // pred_fallthru
      _
    // Predicated region
    $region54: #{tpu_custom_call.1} parent=1 // pred_check
      _
    $region55: #{tpu_custom_call.1} parent=1 // pred_check_branch
      %93 = sbr.rel (0) target = $region57
    $region56: #{tpu_custom_call.1} parent=1 // pred_region
      %94 = dma.done [#allocation3], 256
    $region57: #{tpu_custom_call.1} parent=1 // pred_fallthru
      _
    // Predicated region
    $region58: #{tpu_custom_call.1} parent=1 // pred_check
      _
    $region59: #{tpu_custom_call.1} parent=1 // pred_check_branch
      %96 = sbr.rel (0) target = $region61
    $region60: #{tpu_custom_call.1} parent=1 // pred_region
      %97 = dma.done [#allocation6], 64
    $region61: #{tpu_custom_call.1} parent=1 // pred_fallthru
      _
    // Predicated region
    $region62: #{tpu_custom_call.1} parent=1 // pred_check
      _
    $region63: #{tpu_custom_call.1} parent=1 // pred_check_branch
      %99 = sbr.rel (0) target = $region65
    $region64: #{tpu_custom_call.1} parent=1 // pred_region
      %100 = dma.done [#allocation6], 64
    $region65: #{tpu_custom_call.1} parent=1 // pred_fallthru
      _
    // Predicated region
    $region66: #{tpu_custom_call.1} parent=1 // pred_check
      _
    $region67: #{tpu_custom_call.1} parent=1 // pred_check_branch
      %102 = sbr.rel (0) target = $region69
    $region68: #{tpu_custom_call.1} parent=1 // pred_region
      %103 = dma.done [#allocation9], 768
    $region69: #{tpu_custom_call.1} parent=1 // pred_fallthru
      _
    // Predicated region
    $region70: #{tpu_custom_call.1} parent=1 // pred_check
      _
    $region71: #{tpu_custom_call.1} parent=1 // pred_check_branch
      %105 = sbr.rel (0) target = $region73
    $region72: #{tpu_custom_call.1} parent=1 // pred_region
      %106 = dma.done [#allocation9], 768
    $region73: #{tpu_custom_call.1} parent=1 // pred_fallthru
      _
    %v107 = vld [vmem:[#allocation2] sm:$0xff]
    %v108 = vld [vmem:[#allocation2 + $0x8] sm:$0xff]
    %v109 = vlaneseq
    %v110 = vand.u32 %v109, 127
    %v111 = vadd.s32 %v110, 128
    %v112 = vadd.s32 %v110, 256
    %v113 = vadd.s32 %v110, 384
    %v114 = vand.u32 %v110, 15
    %v115 = vand.u32 %v111, 15
    %v116 = vand.u32 %v112, 15
    %v117 = vand.u32 %v113, 15
    %v118 = vshra.s32 %v110, 4
    %v119 = vshra.s32 %v111, 4
    %v120 = vshra.s32 %v112, 4
    %v121 = vshra.s32 %v113, 4
    %v122 = vand.u32 %v118, 15
    %v123 = vand.u32 %v119, 15
    %v124 = vand.u32 %v120, 15
    %v125 = vand.u32 %v121, 15
    %vm126 = vcmp.ge.s32.totalorder %v114, 1
    %vm127 = vcmp.ge.s32.totalorder %v115, 1
    %vm128 = vcmp.ge.s32.totalorder %v116, 1
    %vm129 = vcmp.ge.s32.totalorder %v117, 1
    %v130 = vsel %vm126, 1.0, 0.0
    %v131 = vsel %vm127, 1.0, 0.0
    %v132 = vsel %vm128, 1.0, 0.0
    %v133 = vsel %vm129, 1.0, 0.0
    %vm134 = vcmp.le.s32.totalorder %v114, 14
    %vm135 = vcmp.le.s32.totalorder %v115, 14
    %vm136 = vcmp.le.s32.totalorder %v116, 14
    %vm137 = vcmp.le.s32.totalorder %v117, 14
    %v138 = vsel %vm134, 1.0, 0.0
    %v139 = vsel %vm135, 1.0, 0.0
    %v140 = vsel %vm136, 1.0, 0.0
    %v141 = vsel %vm137, 1.0, 0.0
    %vm142 = vcmp.ge.s32.totalorder %v122, 1
    %vm143 = vcmp.ge.s32.totalorder %v123, 1
    %vm144 = vcmp.ge.s32.totalorder %v124, 1
    %vm145 = vcmp.ge.s32.totalorder %v125, 1
    %v146 = vsel %vm142, 1.0, 0.0
    %v147 = vsel %vm143, 1.0, 0.0
    %v148 = vsel %vm144, 1.0, 0.0
    %v149 = vsel %vm145, 1.0, 0.0
    %vm150 = vcmp.le.s32.totalorder %v122, 14
    %vm151 = vcmp.le.s32.totalorder %v123, 14
    %vm152 = vcmp.le.s32.totalorder %v124, 14
    %vm153 = vcmp.le.s32.totalorder %v125, 14
    %v154 = vsel %vm150, 1.0, 0.0
    %v155 = vsel %vm151, 1.0, 0.0
    %v156 = vsel %vm152, 1.0, 0.0
    %v157 = vsel %vm153, 1.0, 0.0
    %v158 = vld [vmem:[#allocation5] sm:$0xf]
    %v159 = vld [vmem:[%s2] sm:$0xf]
    %161 = vset.pattern.permute.xlu0 0
    %162 = vperm.xlu0 %161, %v159
    %v163 = vpop.permute.xlu0 %162
    %v167 = vcombine.high %v107, %v107
    %v168 = vcombine.high %v108, %v108
    %vm169 = vcmask 31744
    %v171 = vsel %vm169, %v158, 0
    %vm173 = vcmask 1043456
    %v174 = vsel %vm173, %v107, 0
    %v176 = vsel %vm173, %v167, 0
    %v178 = vsel %vm173, %v108, 0
    %v180 = vsel %vm173, %v168, 0
    %182 = vmatprep.subr.mxu0 0.0
    %183 = vmatpush1.msra.mxu0 0.0
    %184 = vmatprep.subr.mxu0 0.0
    %185 = vmatpush1.msra.mxu0 0.0
    %186 = vmatprep.subr.mxu0 0.0
    %187 = vmatpush1.msra.mxu0 0.0
    %188 = vmatprep.subr.mxu0 0.0
    %189 = vmatpush1.msra.mxu0 0.0
    %190 = vmatprep.subr.mxu0 0.0
    %191 = vmatpush1.msra.mxu0 0.0
    %192 = vmatprep.subr.mxu0 0.0
    %193 = vmatpush1.msra.mxu0 0.0
    %194 = vmatprep.subr.mxu0 0.0
    %195 = vmatpush1.msra.mxu0 0.0
    %196 = vmatprep.subr.mxu0 0.0
    %197 = vmatpush1.msra.mxu0 0.0
    %198 = vmatprep.subr.mxu0 0.0
    %199 = vmatpush1.msra.mxu0 0.0
    %200 = vmatprep.subr.mxu0 0.0
    %201 = vmatpush1.msra.mxu0 0.0
    %202 = vmatprep.subr.mxu0 0.0
    %203 = vmatpush1.msra.mxu0 0.0
    %204 = vmatprep.subr.mxu0 0.0
    %205 = vmatpush1.msra.mxu0 0.0
    %206 = vmatprep.subr.mxu0 0.0
    %207 = vmatpush1.msra.mxu0 0.0
    %208 = vmatprep.subr.mxu0 0.0
    %209 = vmatpush1.msra.mxu0 0.0
    %210 = vmatprep.subr.mxu0 0.0
    %211 = vmatpush1.msra.mxu0 0.0
    %212 = vmatprep.subr.mxu0 %v176
    %213 = vmatpush1.msra.mxu0 %v174
    %214 = vmatprep.subr.mxu0 0.0
    %215 = vmatpush2.msra.mxu0 0.0
    %216 = vmatprep.subr.mxu0 0.0
    %217 = vmatpush2.msra.mxu0 0.0
    %218 = vmatprep.subr.mxu0 0.0
    %219 = vmatpush2.msra.mxu0 0.0
    %220 = vmatprep.subr.mxu0 0.0
    %221 = vmatpush2.msra.mxu0 0.0
    %222 = vmatprep.subr.mxu0 0.0
    %223 = vmatpush2.msra.mxu0 0.0
    %224 = vmatprep.subr.mxu0 0.0
    %225 = vmatpush2.msra.mxu0 0.0
    %226 = vmatprep.subr.mxu0 0.0
    %227 = vmatpush2.msra.mxu0 0.0
    %228 = vmatprep.subr.mxu0 0.0
    %229 = vmatpush2.msra.mxu0 0.0
    %230 = vmatprep.subr.mxu0 0.0
    %231 = vmatpush2.msra.mxu0 0.0
    %232 = vmatprep.subr.mxu0 0.0
    %233 = vmatpush2.msra.mxu0 0.0
    %234 = vmatprep.subr.mxu0 0.0
    %235 = vmatpush2.msra.mxu0 0.0
    %236 = vmatprep.subr.mxu0 0.0
    %237 = vmatpush2.msra.mxu0 0.0
    %238 = vmatprep.subr.mxu0 0.0
    %239 = vmatpush2.msra.mxu0 0.0
    %240 = vmatprep.subr.mxu0 0.0
    %241 = vmatpush2.msra.mxu0 0.0
    %242 = vmatprep.subr.mxu0 0.0
    %243 = vmatpush2.msra.mxu0 0.0
    %244 = vmatprep.subr.mxu0 0.0
    %245 = vmatpush2.msra.mxu0 0.0
    %246 = vmatprep.mubr.f32.mxu0 0.0
    %247 = vmatmul.mubr.f32.gmra.mxu0 %v171
    %v248 = vpop.f32.mrf.mxu0
    %v249 = vadd.f32 %v163, %v248
    %v250 = vpop.f32.mrf.mxu0
    %v251 = vadd.f32 %v163, %v250
    %252 = vdwg.mxu0
    %253 = vmatprep.subr.mxu0 0.0
    %254 = vmatpush1.msra.mxu0 0.0
    %255 = vmatprep.subr.mxu0 0.0
    %256 = vmatpush1.msra.mxu0 0.0
    %257 = vmatprep.subr.mxu0 0.0
    %258 = vmatpush1.msra.mxu0 0.0
    %259 = vmatprep.subr.mxu0 0.0
    %260 = vmatpush1.msra.mxu0 0.0
    %261 = vmatprep.subr.mxu0 0.0
    %262 = vmatpush1.msra.mxu0 0.0
    %263 = vmatprep.subr.mxu0 0.0
    %264 = vmatpush1.msra.mxu0 0.0
    %265 = vmatprep.subr.mxu0 0.0
    %266 = vmatpush1.msra.mxu0 0.0
    %267 = vmatprep.subr.mxu0 0.0
    %268 = vmatpush1.msra.mxu0 0.0
    %269 = vmatprep.subr.mxu0 0.0
    %270 = vmatpush1.msra.mxu0 0.0
    %271 = vmatprep.subr.mxu0 0.0
    %272 = vmatpush1.msra.mxu0 0.0
    %273 = vmatprep.subr.mxu0 0.0
    %274 = vmatpush1.msra.mxu0 0.0
    %275 = vmatprep.subr.mxu0 0.0
    %276 = vmatpush1.msra.mxu0 0.0
    %277 = vmatprep.subr.mxu0 0.0
    %278 = vmatpush1.msra.mxu0 0.0
    %279 = vmatprep.subr.mxu0 0.0
    %280 = vmatpush1.msra.mxu0 0.0
    %281 = vmatprep.subr.mxu0 0.0
    %282 = vmatpush1.msra.mxu0 0.0
    %283 = vmatprep.subr.mxu0 %v180
    %284 = vmatpush1.msra.mxu0 %v178
    %285 = vmatprep.subr.mxu0 0.0
    %286 = vmatpush2.msra.mxu0 0.0
    %287 = vmatprep.subr.mxu0 0.0
    %288 = vmatpush2.msra.mxu0 0.0
    %289 = vmatprep.subr.mxu0 0.0
    %290 = vmatpush2.msra.mxu0 0.0
    %291 = vmatprep.subr.mxu0 0.0
    %292 = vmatpush2.msra.mxu0 0.0
    %293 = vmatprep.subr.mxu0 0.0
    %294 = vmatpush2.msra.mxu0 0.0
    %295 = vmatprep.subr.mxu0 0.0
    %296 = vmatpush2.msra.mxu0 0.0
    %297 = vmatprep.subr.mxu0 0.0
    %298 = vmatpush2.msra.mxu0 0.0
    %299 = vmatprep.subr.mxu0 0.0
    %300 = vmatpush2.msra.mxu0 0.0
    %301 = vmatprep.subr.mxu0 0.0
    %302 = vmatpush2.msra.mxu0 0.0
    %303 = vmatprep.subr.mxu0 0.0
    %304 = vmatpush2.msra.mxu0 0.0
    %305 = vmatprep.subr.mxu0 0.0
    %306 = vmatpush2.msra.mxu0 0.0
    %307 = vmatprep.subr.mxu0 0.0
    %308 = vmatpush2.msra.mxu0 0.0
    %309 = vmatprep.subr.mxu0 0.0
    %310 = vmatpush2.msra.mxu0 0.0
    %311 = vmatprep.subr.mxu0 0.0
    %312 = vmatpush2.msra.mxu0 0.0
    %313 = vmatprep.subr.mxu0 0.0
    %314 = vmatpush2.msra.mxu0 0.0
    %315 = vmatprep.subr.mxu0 0.0
    %316 = vmatpush2.msra.mxu0 0.0
    %317 = vmatprep.mubr.f32.mxu0 0.0
    %318 = vmatmul.mubr.f32.gmra.mxu0 %v171
    %v319 = vpop.f32.mrf.mxu0
    %v320 = vadd.f32 %v163, %v319
    %v321 = vpop.f32.mrf.mxu0
    %v322 = vadd.f32 %v163, %v321
    %323 = vdwg.mxu0
    %v324 = vmax.f32 %v249, 0.0
    %v325 = vmax.f32 %v251, 0.0
    %v326 = vmax.f32 %v320, 0.0
    %v327 = vmax.f32 %v322, 0.0
    %v328 = vld [vmem:[#allocation7] sm:$0xf]
    %v329 = vld [vmem:[%s4] sm:$0xf]
    %331 = vset.pattern.permute.xlu0 0
    %332 = vperm.xlu0 %331, %v329
    %v333 = vpop.permute.xlu0 %332
    %v336 = vsel %vm169, %v328, 0
    %v339 = vsel %vm173, %v324, 0
    %v342 = vsel %vm173, %v325, 0
    %v345 = vsel %vm173, %v326, 0
    %v348 = vsel %vm173, %v327, 0
    %350 = vmatprep.subr.mxu0 0.0
    %351 = vmatpush1.msra.mxu0 0.0
    %352 = vmatprep.subr.mxu0 0.0
    %353 = vmatpush1.msra.mxu0 0.0
    %354 = vmatprep.subr.mxu0 0.0
    %355 = vmatpush1.msra.mxu0 0.0
    %356 = vmatprep.subr.mxu0 0.0
    %357 = vmatpush1.msra.mxu0 0.0
    %358 = vmatprep.subr.mxu0 0.0
    %359 = vmatpush1.msra.mxu0 0.0
    %360 = vmatprep.subr.mxu0 0.0
    %361 = vmatpush1.msra.mxu0 0.0
    %362 = vmatprep.subr.mxu0 0.0
    %363 = vmatpush1.msra.mxu0 0.0
    %364 = vmatprep.subr.mxu0 0.0
    %365 = vmatpush1.msra.mxu0 0.0
    %366 = vmatprep.subr.mxu0 0.0
    %367 = vmatpush1.msra.mxu0 0.0
    %368 = vmatprep.subr.mxu0 0.0
    %369 = vmatpush1.msra.mxu0 0.0
    %370 = vmatprep.subr.mxu0 0.0
    %371 = vmatpush1.msra.mxu0 0.0
    %372 = vmatprep.subr.mxu0 0.0
    %373 = vmatpush1.msra.mxu0 0.0
    %374 = vmatprep.subr.mxu0 0.0
    %375 = vmatpush1.msra.mxu0 0.0
    %376 = vmatprep.subr.mxu0 0.0
    %377 = vmatpush1.msra.mxu0 0.0
    %378 = vmatprep.subr.mxu0 0.0
    %379 = vmatpush1.msra.mxu0 0.0
    %380 = vmatprep.subr.mxu0 %v342
    %381 = vmatpush1.msra.mxu0 %v339
    %382 = vmatprep.subr.mxu0 0.0
    %383 = vmatpush2.msra.mxu0 0.0
    %384 = vmatprep.subr.mxu0 0.0
    %385 = vmatpush2.msra.mxu0 0.0
    %386 = vmatprep.subr.mxu0 0.0
    %387 = vmatpush2.msra.mxu0 0.0
    %388 = vmatprep.subr.mxu0 0.0
    %389 = vmatpush2.msra.mxu0 0.0
    %390 = vmatprep.subr.mxu0 0.0
    %391 = vmatpush2.msra.mxu0 0.0
    %392 = vmatprep.subr.mxu0 0.0
    %393 = vmatpush2.msra.mxu0 0.0
    %394 = vmatprep.subr.mxu0 0.0
    %395 = vmatpush2.msra.mxu0 0.0
    %396 = vmatprep.subr.mxu0 0.0
    %397 = vmatpush2.msra.mxu0 0.0
    %398 = vmatprep.subr.mxu0 0.0
    %399 = vmatpush2.msra.mxu0 0.0
    %400 = vmatprep.subr.mxu0 0.0
    %401 = vmatpush2.msra.mxu0 0.0
    %402 = vmatprep.subr.mxu0 0.0
    %403 = vmatpush2.msra.mxu0 0.0
    %404 = vmatprep.subr.mxu0 0.0
    %405 = vmatpush2.msra.mxu0 0.0
    %406 = vmatprep.subr.mxu0 0.0
    %407 = vmatpush2.msra.mxu0 0.0
    %408 = vmatprep.subr.mxu0 0.0
    %409 = vmatpush2.msra.mxu0 0.0
    %410 = vmatprep.subr.mxu0 0.0
    %411 = vmatpush2.msra.mxu0 0.0
    %412 = vmatprep.subr.mxu0 0.0
    %413 = vmatpush2.msra.mxu0 0.0
    %414 = vmatprep.mubr.f32.mxu0 0.0
    %415 = vmatmul.mubr.f32.gmra.mxu0 %v336
    %v416 = vpop.f32.mrf.mxu0
    %v417 = vadd.f32 %v333, %v416
    %v418 = vpop.f32.mrf.mxu0
    %v419 = vadd.f32 %v333, %v418
    %420 = vdwg.mxu0
    %421 = vmatprep.subr.mxu0 0.0
    %422 = vmatpush1.msra.mxu0 0.0
    %423 = vmatprep.subr.mxu0 0.0
    %424 = vmatpush1.msra.mxu0 0.0
    %425 = vmatprep.subr.mxu0 0.0
    %426 = vmatpush1.msra.mxu0 0.0
    %427 = vmatprep.subr.mxu0 0.0
    %428 = vmatpush1.msra.mxu0 0.0
    %429 = vmatprep.subr.mxu0 0.0
    %430 = vmatpush1.msra.mxu0 0.0
    %431 = vmatprep.subr.mxu0 0.0
    %432 = vmatpush1.msra.mxu0 0.0
    %433 = vmatprep.subr.mxu0 0.0
    %434 = vmatpush1.msra.mxu0 0.0
    %435 = vmatprep.subr.mxu0 0.0
    %436 = vmatpush1.msra.mxu0 0.0
    %437 = vmatprep.subr.mxu0 0.0
    %438 = vmatpush1.msra.mxu0 0.0
    %439 = vmatprep.subr.mxu0 0.0
    %440 = vmatpush1.msra.mxu0 0.0
    %441 = vmatprep.subr.mxu0 0.0
    %442 = vmatpush1.msra.mxu0 0.0
    %443 = vmatprep.subr.mxu0 0.0
    %444 = vmatpush1.msra.mxu0 0.0
    %445 = vmatprep.subr.mxu0 0.0
    %446 = vmatpush1.msra.mxu0 0.0
    %447 = vmatprep.subr.mxu0 0.0
    %448 = vmatpush1.msra.mxu0 0.0
    %449 = vmatprep.subr.mxu0 0.0
    %450 = vmatpush1.msra.mxu0 0.0
    %451 = vmatprep.subr.mxu0 %v348
    %452 = vmatpush1.msra.mxu0 %v345
    %453 = vmatprep.subr.mxu0 0.0
    %454 = vmatpush2.msra.mxu0 0.0
    %455 = vmatprep.subr.mxu0 0.0
    %456 = vmatpush2.msra.mxu0 0.0
    %457 = vmatprep.subr.mxu0 0.0
    %458 = vmatpush2.msra.mxu0 0.0
    %459 = vmatprep.subr.mxu0 0.0
    %460 = vmatpush2.msra.mxu0 0.0
    %461 = vmatprep.subr.mxu0 0.0
    %462 = vmatpush2.msra.mxu0 0.0
    %463 = vmatprep.subr.mxu0 0.0
    %464 = vmatpush2.msra.mxu0 0.0
    %465 = vmatprep.subr.mxu0 0.0
    %466 = vmatpush2.msra.mxu0 0.0
    %467 = vmatprep.subr.mxu0 0.0
    %468 = vmatpush2.msra.mxu0 0.0
    %469 = vmatprep.subr.mxu0 0.0
    %470 = vmatpush2.msra.mxu0 0.0
    %471 = vmatprep.subr.mxu0 0.0
    %472 = vmatpush2.msra.mxu0 0.0
    %473 = vmatprep.subr.mxu0 0.0
    %474 = vmatpush2.msra.mxu0 0.0
    %475 = vmatprep.subr.mxu0 0.0
    %476 = vmatpush2.msra.mxu0 0.0
    %477 = vmatprep.subr.mxu0 0.0
    %478 = vmatpush2.msra.mxu0 0.0
    %479 = vmatprep.subr.mxu0 0.0
    %480 = vmatpush2.msra.mxu0 0.0
    %481 = vmatprep.subr.mxu0 0.0
    %482 = vmatpush2.msra.mxu0 0.0
    %483 = vmatprep.subr.mxu0 0.0
    %484 = vmatpush2.msra.mxu0 0.0
    %485 = vmatprep.mubr.f32.mxu0 0.0
    %486 = vmatmul.mubr.f32.gmra.mxu0 %v336
    %v487 = vpop.f32.mrf.mxu0
    %v488 = vadd.f32 %v333, %v487
    %v489 = vpop.f32.mrf.mxu0
    %v490 = vadd.f32 %v333, %v489
    %491 = vdwg.mxu0
    %v492 = vmax.f32 %v417, 0.0
    %v493 = vmax.f32 %v419, 0.0
    %v494 = vmax.f32 %v488, 0.0
    %v495 = vmax.f32 %v490, 0.0
    %496 = vrot.lane.b32.xlu0 %v324, 1
    %v497 = vpop.permute.xlu0 %496
    %498 = vrot.lane.b32.xlu0 %v325, 1
    %v499 = vpop.permute.xlu0 %498
    %500 = vrot.lane.b32.xlu0 %v326, 1
    %v501 = vpop.permute.xlu0 %500
    %502 = vrot.lane.b32.xlu0 %v327, 1
    %v503 = vpop.permute.xlu0 %502
    %vm504 = vcmp.lt.s32.totalorder %v110, 1
    %v505 = vsel %vm504, %v501, %v503
    %v506 = vsel %vm504, %v499, %v501
    %v507 = vsel %vm504, %v497, %v499
    %v508 = vsel %vm504, %v503, %v497
    %v509 = vmul.f32 %v508, %v130
    %v510 = vmul.f32 %v507, %v131
    %v511 = vmul.f32 %v506, %v132
    %v512 = vmul.f32 %v505, %v133
    %513 = vrot.lane.b32.xlu0 %v492, 1
    %v514 = vpop.permute.xlu0 %513
    %515 = vrot.lane.b32.xlu0 %v493, 1
    %v516 = vpop.permute.xlu0 %515
    %517 = vrot.lane.b32.xlu0 %v494, 1
    %v518 = vpop.permute.xlu0 %517
    %519 = vrot.lane.b32.xlu0 %v495, 1
    %v520 = vpop.permute.xlu0 %519
    %v521 = vsel %vm504, %v518, %v520
    %v522 = vsel %vm504, %v516, %v518
    %v523 = vsel %vm504, %v514, %v516
    %v524 = vsel %vm504, %v520, %v514
    %v525 = vmul.f32 %v524, %v130
    %v526 = vmul.f32 %v523, %v131
    %v527 = vmul.f32 %v522, %v132
    %v528 = vmul.f32 %v521, %v133
    %531 = vrot.lane.b32.xlu0 %v107, 1
    %v532 = vpop.permute.xlu0 %531
    %533 = vrot.lane.b32.xlu0 %v167, 1
    %v534 = vpop.permute.xlu0 %533
    %535 = vrot.lane.b32.xlu0 %v108, 1
    %v536 = vpop.permute.xlu0 %535
    %537 = vrot.lane.b32.xlu0 %v168, 1
    %v538 = vpop.permute.xlu0 %537
    %v539 = vsel %vm504, %v536, %v538
    %v540 = vsel %vm504, %v534, %v536
    %v541 = vsel %vm504, %v532, %v534
    %v542 = vsel %vm504, %v538, %v532
    %v543 = vmul.f32 %v542, %v130
    %v544 = vmul.f32 %v541, %v131
    %v545 = vmul.f32 %v540, %v132
    %v546 = vmul.f32 %v539, %v133
    %547 = vrot.lane.b32.xlu0 %v324, 127
    %v548 = vpop.permute.xlu0 %547
    %549 = vrot.lane.b32.xlu0 %v325, 127
    %v550 = vpop.permute.xlu0 %549
    %551 = vrot.lane.b32.xlu0 %v326, 127
    %v552 = vpop.permute.xlu0 %551
    %553 = vrot.lane.b32.xlu0 %v327, 127
    %v554 = vpop.permute.xlu0 %553
    %vm555 = vcmp.lt.s32.totalorder %v110, 127
    %v556 = vsel %vm555, %v552, %v554
    %v557 = vsel %vm555, %v550, %v552
    %v558 = vsel %vm555, %v548, %v550
    %v559 = vsel %vm555, %v554, %v548
    %v560 = vmul.f32 %v558, %v138
    %v561 = vmul.f32 %v557, %v139
    %v562 = vmul.f32 %v556, %v140
    %v563 = vmul.f32 %v559, %v141
    %564 = vrot.lane.b32.xlu0 %v492, 127
    %v565 = vpop.permute.xlu0 %564
    %566 = vrot.lane.b32.xlu0 %v493, 127
    %v567 = vpop.permute.xlu0 %566
    %568 = vrot.lane.b32.xlu0 %v494, 127
    %v569 = vpop.permute.xlu0 %568
    %570 = vrot.lane.b32.xlu0 %v495, 127
    %v571 = vpop.permute.xlu0 %570
    %v572 = vsel %vm555, %v569, %v571
    %v573 = vsel %vm555, %v567, %v569
    %v574 = vsel %vm555, %v565, %v567
    %v575 = vsel %vm555, %v571, %v565
    %v576 = vmul.f32 %v574, %v138
    %v577 = vmul.f32 %v573, %v139
    %v578 = vmul.f32 %v572, %v140
    %v579 = vmul.f32 %v575, %v141
    %580 = vrot.lane.b32.xlu0 %v107, 127
    %v581 = vpop.permute.xlu0 %580
    %582 = vrot.lane.b32.xlu0 %v167, 127
    %v583 = vpop.permute.xlu0 %582
    %584 = vrot.lane.b32.xlu0 %v108, 127
    %v585 = vpop.permute.xlu0 %584
    %586 = vrot.lane.b32.xlu0 %v168, 127
    %v587 = vpop.permute.xlu0 %586
    %v588 = vsel %vm555, %v585, %v587
    %v589 = vsel %vm555, %v583, %v585
    %v590 = vsel %vm555, %v581, %v583
    %v591 = vsel %vm555, %v587, %v581
    %v592 = vmul.f32 %v590, %v138
    %v593 = vmul.f32 %v589, %v139
    %v594 = vmul.f32 %v588, %v140
    %v595 = vmul.f32 %v591, %v141
    %v600 = vrot.slane %v525, 4
    %v601 = vrot.slane %v526, 4
    %v602 = vrot.slane %v527, 4
    %v603 = vrot.slane %v528, 4
    %v608 = vrot.slane %v324, 4
    %v609 = vrot.slane %v325, 4
    %v610 = vrot.slane %v326, 4
    %v611 = vrot.slane %v327, 4
    %v616 = vcombine.low %v107, %v107
    %v617 = vcombine.low %v108, %v108
    %v624 = vrot.slane %v576, 4
    %v625 = vrot.slane %v577, 4
    %v626 = vrot.slane %v578, 4
    %v627 = vrot.slane %v579, 4
    %v632 = vsel %vm173, %v509, %v600
    %v633 = vsel %vm173, %v510, %v601
    %v634 = vsel %vm173, %v511, %v602
    %v635 = vsel %vm173, %v512, %v603
    %v636 = vsel %vm173, %v543, %v608
    %v637 = vsel %vm173, %v544, %v609
    %v638 = vsel %vm173, %v545, %v610
    %v639 = vsel %vm173, %v546, %v611
    %v640 = vsel %vm173, %v492, %v616
    %v641 = vsel %vm173, %v493, %v107
    %v642 = vsel %vm173, %v494, %v617
    %v643 = vsel %vm173, %v495, %v108
    %v644 = vsel %vm173, %v560, %v624
    %v645 = vsel %vm173, %v561, %v625
    %v646 = vsel %vm173, %v562, %v626
    %v647 = vsel %vm173, %v563, %v627
    %s648 = scalar_lea.vmem %s5, 16
    %v649 = vld [vmem:[%s648] sm:$0xff]
    %v650 = vld [vmem:[%s648 + $0x8] sm:$0xff]
    %651 = vrot.lane.b32.xlu0 %v632, 16
    %v652 = vpop.permute.xlu0 %651
    %653 = vrot.lane.b32.xlu0 %v636, 16
    %v654 = vpop.permute.xlu0 %653
    %655 = vrot.lane.b32.xlu0 %v640, 16
    %v656 = vpop.permute.xlu0 %655
    %657 = vrot.lane.b32.xlu0 %v644, 16
    %v658 = vpop.permute.xlu0 %657
    %659 = vrot.lane.b32.xlu0 %v592, 16
    %v660 = vpop.permute.xlu0 %659
    %661 = vrot.lane.b32.xlu0 %v633, 16
    %v662 = vpop.permute.xlu0 %661
    %663 = vrot.lane.b32.xlu0 %v637, 16
    %v664 = vpop.permute.xlu0 %663
    %665 = vrot.lane.b32.xlu0 %v641, 16
    %v666 = vpop.permute.xlu0 %665
    %667 = vrot.lane.b32.xlu0 %v645, 16
    %v668 = vpop.permute.xlu0 %667
    %669 = vrot.lane.b32.xlu0 %v593, 16
    %v670 = vpop.permute.xlu0 %669
    %671 = vrot.lane.b32.xlu0 %v634, 16
    %v672 = vpop.permute.xlu0 %671
    %673 = vrot.lane.b32.xlu0 %v638, 16
    %v674 = vpop.permute.xlu0 %673
    %675 = vrot.lane.b32.xlu0 %v642, 16
    %v676 = vpop.permute.xlu0 %675
    %677 = vrot.lane.b32.xlu0 %v646, 16
    %v678 = vpop.permute.xlu0 %677
    %679 = vrot.lane.b32.xlu0 %v594, 16
    %v680 = vpop.permute.xlu0 %679
    %681 = vrot.lane.b32.xlu0 %v635, 16
    %v682 = vpop.permute.xlu0 %681
    %683 = vrot.lane.b32.xlu0 %v639, 16
    %v684 = vpop.permute.xlu0 %683
    %685 = vrot.lane.b32.xlu0 %v643, 16
    %v686 = vpop.permute.xlu0 %685
    %687 = vrot.lane.b32.xlu0 %v647, 16
    %v688 = vpop.permute.xlu0 %687
    %689 = vrot.lane.b32.xlu0 %v595, 16
    %v690 = vpop.permute.xlu0 %689
    %vm691 = vcmp.lt.s32.totalorder %v110, 16
    %v692 = vsel %vm691, %v672, %v682
    %v693 = vsel %vm691, %v674, %v684
    %v694 = vsel %vm691, %v676, %v686
    %v695 = vsel %vm691, %v678, %v688
    %v696 = vsel %vm691, %v680, %v690
    %v697 = vsel %vm691, %v662, %v672
    %v698 = vsel %vm691, %v664, %v674
    %v699 = vsel %vm691, %v666, %v676
    %v700 = vsel %vm691, %v668, %v678
    %v701 = vsel %vm691, %v670, %v680
    %v702 = vsel %vm691, %v652, %v662
    %v703 = vsel %vm691, %v654, %v664
    %v704 = vsel %vm691, %v656, %v666
    %v705 = vsel %vm691, %v658, %v668
    %v706 = vsel %vm691, %v660, %v670
    %v707 = vsel %vm691, %v682, %v652
    %v708 = vsel %vm691, %v684, %v654
    %v709 = vsel %vm691, %v686, %v656
    %v710 = vsel %vm691, %v688, %v658
    %v711 = vsel %vm691, %v690, %v660
    %v712 = vmul.f32 %v707, %v146
    %v713 = vmul.f32 %v702, %v147
    %v714 = vmul.f32 %v697, %v148
    %v715 = vmul.f32 %v692, %v149
    %v716 = vmul.f32 %v708, %v146
    %v717 = vmul.f32 %v703, %v147
    %v718 = vmul.f32 %v698, %v148
    %v719 = vmul.f32 %v693, %v149
    %v720 = vmul.f32 %v709, %v146
    %v721 = vmul.f32 %v704, %v147
    %v722 = vmul.f32 %v699, %v148
    %v723 = vmul.f32 %v694, %v149
    %v724 = vmul.f32 %v710, %v146
    %v725 = vmul.f32 %v705, %v147
    %v726 = vmul.f32 %v700, %v148
    %v727 = vmul.f32 %v695, %v149
    %v728 = vmul.f32 %v711, %v146
    %v729 = vmul.f32 %v706, %v147
    %v730 = vmul.f32 %v701, %v148
    %v731 = vmul.f32 %v696, %v149
    %v732 = vld [vmem:[%s5] sm:$0xff]
    %v733 = vld [vmem:[%s5 + $0x8] sm:$0xff]
    %vm734 = vcmask 293888
    %v736 = vsel %vm734, %v732, 0
    %v739 = vsel %vm734, %v733, 0
    %v742 = vsel %vm173, %v728, 0
    %v745 = vsel %vm173, %v729, 0
    %v748 = vsel %vm173, %v730, 0
    %v751 = vsel %vm173, %v731, 0
    %753 = vmatprep.subr.mxu0 0.0
    %754 = vmatpush1.msra.mxu0 0.0
    %755 = vmatprep.subr.mxu0 0.0
    %756 = vmatpush1.msra.mxu0 0.0
    %757 = vmatprep.subr.mxu0 0.0
    %758 = vmatpush1.msra.mxu0 0.0
    %759 = vmatprep.subr.mxu0 0.0
    %760 = vmatpush1.msra.mxu0 0.0
    %761 = vmatprep.subr.mxu0 0.0
    %762 = vmatpush1.msra.mxu0 0.0
    %763 = vmatprep.subr.mxu0 0.0
    %764 = vmatpush1.msra.mxu0 0.0
    %765 = vmatprep.subr.mxu0 0.0
    %766 = vmatpush1.msra.mxu0 0.0
    %767 = vmatprep.subr.mxu0 0.0
    %768 = vmatpush1.msra.mxu0 0.0
    %769 = vmatprep.subr.mxu0 0.0
    %770 = vmatpush1.msra.mxu0 0.0
    %771 = vmatprep.subr.mxu0 0.0
    %772 = vmatpush1.msra.mxu0 0.0
    %773 = vmatprep.subr.mxu0 0.0
    %774 = vmatpush1.msra.mxu0 0.0
    %775 = vmatprep.subr.mxu0 %v745
    %776 = vmatpush1.msra.mxu0 %v742
    %777 = vmatprep.subr.mxu0 %v725
    %778 = vmatpush1.msra.mxu0 %v724
    %779 = vmatprep.subr.mxu0 %v721
    %780 = vmatpush1.msra.mxu0 %v720
    %781 = vmatprep.subr.mxu0 %v717
    %782 = vmatpush1.msra.mxu0 %v716
    %783 = vmatprep.subr.mxu0 %v713
    %784 = vmatpush1.msra.mxu0 %v712
    %785 = vmatprep.subr.mxu0 0.0
    %786 = vmatpush2.msra.mxu0 0.0
    %787 = vmatprep.subr.mxu0 0.0
    %788 = vmatpush2.msra.mxu0 0.0
    %789 = vmatprep.subr.mxu0 0.0
    %790 = vmatpush2.msra.mxu0 0.0
    %791 = vmatprep.subr.mxu0 0.0
    %792 = vmatpush2.msra.mxu0 0.0
    %793 = vmatprep.subr.mxu0 0.0
    %794 = vmatpush2.msra.mxu0 0.0
    %795 = vmatprep.subr.mxu0 0.0
    %796 = vmatpush2.msra.mxu0 0.0
    %797 = vmatprep.subr.mxu0 0.0
    %798 = vmatpush2.msra.mxu0 0.0
    %799 = vmatprep.subr.mxu0 0.0
    %800 = vmatpush2.msra.mxu0 0.0
    %801 = vmatprep.subr.mxu0 0.0
    %802 = vmatpush2.msra.mxu0 0.0
    %803 = vmatprep.subr.mxu0 0.0
    %804 = vmatpush2.msra.mxu0 0.0
    %805 = vmatprep.subr.mxu0 0.0
    %806 = vmatpush2.msra.mxu0 0.0
    %807 = vmatprep.subr.mxu0 0.0
    %808 = vmatpush2.msra.mxu0 0.0
    %809 = vmatprep.subr.mxu0 0.0
    %810 = vmatpush2.msra.mxu0 0.0
    %811 = vmatprep.subr.mxu0 0.0
    %812 = vmatpush2.msra.mxu0 0.0
    %813 = vmatprep.subr.mxu0 0.0
    %814 = vmatpush2.msra.mxu0 0.0
    %815 = vmatprep.subr.mxu0 0.0
    %816 = vmatpush2.msra.mxu0 0.0
    %817 = vmatprep.mubr.f32.mxu0 0.0
    %818 = vmatmul.mubr.f32.gmra.mxu0 %v736
    %v819 = vpop.f32.mrf.mxu0
    %v820 = vadd.f32 0.0, %v819
    %v821 = vpop.f32.mrf.mxu0
    %v822 = vadd.f32 0.0, %v821
    %823 = vmatprep.mubr.f32.mxu0 0.0
    %824 = vmatmul.mubr.f32.gmra.mxu0 %v739
    %v825 = vpop.f32.mrf.mxu0
    %v826 = vadd.f32 0.0, %v825
    %v827 = vpop.f32.mrf.mxu0
    %v828 = vadd.f32 0.0, %v827
    %829 = vdwg.mxu0
    %830 = vmatprep.subr.mxu0 0.0
    %831 = vmatpush1.msra.mxu0 0.0
    %832 = vmatprep.subr.mxu0 0.0
    %833 = vmatpush1.msra.mxu0 0.0
    %834 = vmatprep.subr.mxu0 0.0
    %835 = vmatpush1.msra.mxu0 0.0
    %836 = vmatprep.subr.mxu0 0.0
    %837 = vmatpush1.msra.mxu0 0.0
    %838 = vmatprep.subr.mxu0 0.0
    %839 = vmatpush1.msra.mxu0 0.0
    %840 = vmatprep.subr.mxu0 0.0
    %841 = vmatpush1.msra.mxu0 0.0
    %842 = vmatprep.subr.mxu0 0.0
    %843 = vmatpush1.msra.mxu0 0.0
    %844 = vmatprep.subr.mxu0 0.0
    %845 = vmatpush1.msra.mxu0 0.0
    %846 = vmatprep.subr.mxu0 0.0
    %847 = vmatpush1.msra.mxu0 0.0
    %848 = vmatprep.subr.mxu0 0.0
    %849 = vmatpush1.msra.mxu0 0.0
    %850 = vmatprep.subr.mxu0 0.0
    %851 = vmatpush1.msra.mxu0 0.0
    %852 = vmatprep.subr.mxu0 %v751
    %853 = vmatpush1.msra.mxu0 %v748
    %854 = vmatprep.subr.mxu0 %v727
    %855 = vmatpush1.msra.mxu0 %v726
    %856 = vmatprep.subr.mxu0 %v723
    %857 = vmatpush1.msra.mxu0 %v722
    %858 = vmatprep.subr.mxu0 %v719
    %859 = vmatpush1.msra.mxu0 %v718
    %860 = vmatprep.subr.mxu0 %v715
    %861 = vmatpush1.msra.mxu0 %v714
    %862 = vmatprep.subr.mxu0 0.0
    %863 = vmatpush2.msra.mxu0 0.0
    %864 = vmatprep.subr.mxu0 0.0
    %865 = vmatpush2.msra.mxu0 0.0
    %866 = vmatprep.subr.mxu0 0.0
    %867 = vmatpush2.msra.mxu0 0.0
    %868 = vmatprep.subr.mxu0 0.0
    %869 = vmatpush2.msra.mxu0 0.0
    %870 = vmatprep.subr.mxu0 0.0
    %871 = vmatpush2.msra.mxu0 0.0
    %872 = vmatprep.subr.mxu0 0.0
    %873 = vmatpush2.msra.mxu0 0.0
    %874 = vmatprep.subr.mxu0 0.0
    %875 = vmatpush2.msra.mxu0 0.0
    %876 = vmatprep.subr.mxu0 0.0
    %877 = vmatpush2.msra.mxu0 0.0
    %878 = vmatprep.subr.mxu0 0.0
    %879 = vmatpush2.msra.mxu0 0.0
    %880 = vmatprep.subr.mxu0 0.0
    %881 = vmatpush2.msra.mxu0 0.0
    %882 = vmatprep.subr.mxu0 0.0
    %883 = vmatpush2.msra.mxu0 0.0
    %884 = vmatprep.subr.mxu0 0.0
    %885 = vmatpush2.msra.mxu0 0.0
    %886 = vmatprep.subr.mxu0 0.0
    %887 = vmatpush2.msra.mxu0 0.0
    %888 = vmatprep.subr.mxu0 0.0
    %889 = vmatpush2.msra.mxu0 0.0
    %890 = vmatprep.subr.mxu0 0.0
    %891 = vmatpush2.msra.mxu0 0.0
    %892 = vmatprep.subr.mxu0 0.0
    %893 = vmatpush2.msra.mxu0 0.0
    %894 = vmatprep.mubr.f32.mxu0 0.0
    %895 = vmatmul.mubr.f32.gmra.mxu0 %v736
    %v896 = vpop.f32.mrf.mxu0
    %v897 = vadd.f32 0.0, %v896
    %v898 = vpop.f32.mrf.mxu0
    %v899 = vadd.f32 0.0, %v898
    %900 = vmatprep.mubr.f32.mxu0 0.0
    %901 = vmatmul.mubr.f32.gmra.mxu0 %v739
    %v902 = vpop.f32.mrf.mxu0
    %v903 = vadd.f32 0.0, %v902
    %v904 = vpop.f32.mrf.mxu0
    %v905 = vadd.f32 0.0, %v904
    %906 = vdwg.mxu0
    %v908 = vsel %vm734, %v649, 0
    %v911 = vsel %vm734, %v650, 0
    %v914 = vsel %vm173, %v592, 0
    %v917 = vsel %vm173, %v593, 0
    %v920 = vsel %vm173, %v594, 0
    %v923 = vsel %vm173, %v595, 0
    %925 = vmatprep.subr.mxu0 0.0
    %926 = vmatpush1.msra.mxu0 0.0
    %927 = vmatprep.subr.mxu0 0.0
    %928 = vmatpush1.msra.mxu0 0.0
    %929 = vmatprep.subr.mxu0 0.0
    %930 = vmatpush1.msra.mxu0 0.0
    %931 = vmatprep.subr.mxu0 0.0
    %932 = vmatpush1.msra.mxu0 0.0
    %933 = vmatprep.subr.mxu0 0.0
    %934 = vmatpush1.msra.mxu0 0.0
    %935 = vmatprep.subr.mxu0 0.0
    %936 = vmatpush1.msra.mxu0 0.0
    %937 = vmatprep.subr.mxu0 0.0
    %938 = vmatpush1.msra.mxu0 0.0
    %939 = vmatprep.subr.mxu0 0.0
    %940 = vmatpush1.msra.mxu0 0.0
    %941 = vmatprep.subr.mxu0 0.0
    %942 = vmatpush1.msra.mxu0 0.0
    %943 = vmatprep.subr.mxu0 0.0
    %944 = vmatpush1.msra.mxu0 0.0
    %945 = vmatprep.subr.mxu0 0.0
    %946 = vmatpush1.msra.mxu0 0.0
    %947 = vmatprep.subr.mxu0 %v917
    %948 = vmatpush1.msra.mxu0 %v914
    %949 = vmatprep.subr.mxu0 %v645
    %950 = vmatpush1.msra.mxu0 %v644
    %951 = vmatprep.subr.mxu0 %v641
    %952 = vmatpush1.msra.mxu0 %v640
    %953 = vmatprep.subr.mxu0 %v637
    %954 = vmatpush1.msra.mxu0 %v636
    %955 = vmatprep.subr.mxu0 %v633
    %956 = vmatpush1.msra.mxu0 %v632
    %957 = vmatprep.subr.mxu0 0.0
    %958 = vmatpush2.msra.mxu0 0.0
    %959 = vmatprep.subr.mxu0 0.0
    %960 = vmatpush2.msra.mxu0 0.0
    %961 = vmatprep.subr.mxu0 0.0
    %962 = vmatpush2.msra.mxu0 0.0
    %963 = vmatprep.subr.mxu0 0.0
    %964 = vmatpush2.msra.mxu0 0.0
    %965 = vmatprep.subr.mxu0 0.0
    %966 = vmatpush2.msra.mxu0 0.0
    %967 = vmatprep.subr.mxu0 0.0
    %968 = vmatpush2.msra.mxu0 0.0
    %969 = vmatprep.subr.mxu0 0.0
    %970 = vmatpush2.msra.mxu0 0.0
    %971 = vmatprep.subr.mxu0 0.0
    %972 = vmatpush2.msra.mxu0 0.0
    %973 = vmatprep.subr.mxu0 0.0
    %974 = vmatpush2.msra.mxu0 0.0
    %975 = vmatprep.subr.mxu0 0.0
    %976 = vmatpush2.msra.mxu0 0.0
    %977 = vmatprep.subr.mxu0 0.0
    %978 = vmatpush2.msra.mxu0 0.0
    %979 = vmatprep.subr.mxu0 0.0
    %980 = vmatpush2.msra.mxu0 0.0
    %981 = vmatprep.subr.mxu0 0.0
    %982 = vmatpush2.msra.mxu0 0.0
    %983 = vmatprep.subr.mxu0 0.0
    %984 = vmatpush2.msra.mxu0 0.0
    %985 = vmatprep.subr.mxu0 0.0
    %986 = vmatpush2.msra.mxu0 0.0
    %987 = vmatprep.subr.mxu0 0.0
    %988 = vmatpush2.msra.mxu0 0.0
    %989 = vmatprep.mubr.f32.mxu0 0.0
    %990 = vmatmul.mubr.f32.gmra.mxu0 %v908
    %v991 = vpop.f32.mrf.mxu0
    %v992 = vadd.f32 %v820, %v991
    %v993 = vpop.f32.mrf.mxu0
    %v994 = vadd.f32 %v822, %v993
    %995 = vmatprep.mubr.f32.mxu0 0.0
    %996 = vmatmul.mubr.f32.gmra.mxu0 %v911
    %v997 = vpop.f32.mrf.mxu0
    %v998 = vadd.f32 %v826, %v997
    %v999 = vpop.f32.mrf.mxu0
    %v1000 = vadd.f32 %v828, %v999
    %1001 = vdwg.mxu0
    %1002 = vmatprep.subr.mxu0 0.0
    %1003 = vmatpush1.msra.mxu0 0.0
    %1004 = vmatprep.subr.mxu0 0.0
    %1005 = vmatpush1.msra.mxu0 0.0
    %1006 = vmatprep.subr.mxu0 0.0
    %1007 = vmatpush1.msra.mxu0 0.0
    %1008 = vmatprep.subr.mxu0 0.0
    %1009 = vmatpush1.msra.mxu0 0.0
    %1010 = vmatprep.subr.mxu0 0.0
    %1011 = vmatpush1.msra.mxu0 0.0
    %1012 = vmatprep.subr.mxu0 0.0
    %1013 = vmatpush1.msra.mxu0 0.0
    %1014 = vmatprep.subr.mxu0 0.0
    %1015 = vmatpush1.msra.mxu0 0.0
    %1016 = vmatprep.subr.mxu0 0.0
    %1017 = vmatpush1.msra.mxu0 0.0
    %1018 = vmatprep.subr.mxu0 0.0
    %1019 = vmatpush1.msra.mxu0 0.0
    %1020 = vmatprep.subr.mxu0 0.0
    %1021 = vmatpush1.msra.mxu0 0.0
    %1022 = vmatprep.subr.mxu0 0.0
    %1023 = vmatpush1.msra.mxu0 0.0
    %1024 = vmatprep.subr.mxu0 %v923
    %1025 = vmatpush1.msra.mxu0 %v920
    %1026 = vmatprep.subr.mxu0 %v647
    %1027 = vmatpush1.msra.mxu0 %v646
    %1028 = vmatprep.subr.mxu0 %v643
    %1029 = vmatpush1.msra.mxu0 %v642
    %1030 = vmatprep.subr.mxu0 %v639
    %1031 = vmatpush1.msra.mxu0 %v638
    %1032 = vmatprep.subr.mxu0 %v635
    %1033 = vmatpush1.msra.mxu0 %v634
    %1034 = vmatprep.subr.mxu0 0.0
    %1035 = vmatpush2.msra.mxu0 0.0
    %1036 = vmatprep.subr.mxu0 0.0
    %1037 = vmatpush2.msra.mxu0 0.0
    %1038 = vmatprep.subr.mxu0 0.0
    %1039 = vmatpush2.msra.mxu0 0.0
    %1040 = vmatprep.subr.mxu0 0.0
    %1041 = vmatpush2.msra.mxu0 0.0
    %1042 = vmatprep.subr.mxu0 0.0
    %1043 = vmatpush2.msra.mxu0 0.0
    %1044 = vmatprep.subr.mxu0 0.0
    %1045 = vmatpush2.msra.mxu0 0.0
    %1046 = vmatprep.subr.mxu0 0.0
    %1047 = vmatpush2.msra.mxu0 0.0
    %1048 = vmatprep.subr.mxu0 0.0
    %1049 = vmatpush2.msra.mxu0 0.0
    %1050 = vmatprep.subr.mxu0 0.0
    %1051 = vmatpush2.msra.mxu0 0.0
    %1052 = vmatprep.subr.mxu0 0.0
    %1053 = vmatpush2.msra.mxu0 0.0
    %1054 = vmatprep.subr.mxu0 0.0
    %1055 = vmatpush2.msra.mxu0 0.0
    %1056 = vmatprep.subr.mxu0 0.0
    %1057 = vmatpush2.msra.mxu0 0.0
    %1058 = vmatprep.subr.mxu0 0.0
    %1059 = vmatpush2.msra.mxu0 0.0
    %1060 = vmatprep.subr.mxu0 0.0
    %1061 = vmatpush2.msra.mxu0 0.0
    %1062 = vmatprep.subr.mxu0 0.0
    %1063 = vmatpush2.msra.mxu0 0.0
    %1064 = vmatprep.subr.mxu0 0.0
    %1065 = vmatpush2.msra.mxu0 0.0
    %1066 = vmatprep.mubr.f32.mxu0 0.0
    %1067 = vmatmul.mubr.f32.gmra.mxu0 %v908
    %v1068 = vpop.f32.mrf.mxu0
    %v1069 = vadd.f32 %v897, %v1068
    %v1070 = vpop.f32.mrf.mxu0
    %v1071 = vadd.f32 %v899, %v1070
    %1072 = vmatprep.mubr.f32.mxu0 0.0
    %1073 = vmatmul.mubr.f32.gmra.mxu0 %v911
    %v1074 = vpop.f32.mrf.mxu0
    %v1075 = vadd.f32 %v903, %v1074
    %v1076 = vpop.f32.mrf.mxu0
    %v1077 = vadd.f32 %v905, %v1076
    %1078 = vdwg.mxu0
    %1079 = vrot.lane.b32.xlu0 %v632, 112
    %v1080 = vpop.permute.xlu0 %1079
    %1081 = vrot.lane.b32.xlu0 %v636, 112
    %v1082 = vpop.permute.xlu0 %1081
    %1083 = vrot.lane.b32.xlu0 %v640, 112
    %v1084 = vpop.permute.xlu0 %1083
    %1085 = vrot.lane.b32.xlu0 %v644, 112
    %v1086 = vpop.permute.xlu0 %1085
    %1087 = vrot.lane.b32.xlu0 %v592, 112
    %v1088 = vpop.permute.xlu0 %1087
    %1089 = vrot.lane.b32.xlu0 %v633, 112
    %v1090 = vpop.permute.xlu0 %1089
    %1091 = vrot.lane.b32.xlu0 %v637, 112
    %v1092 = vpop.permute.xlu0 %1091
    %1093 = vrot.lane.b32.xlu0 %v641, 112
    %v1094 = vpop.permute.xlu0 %1093
    %1095 = vrot.lane.b32.xlu0 %v645, 112
    %v1096 = vpop.permute.xlu0 %1095
    %1097 = vrot.lane.b32.xlu0 %v593, 112
    %v1098 = vpop.permute.xlu0 %1097
    %1099 = vrot.lane.b32.xlu0 %v634, 112
    %v1100 = vpop.permute.xlu0 %1099
    %1101 = vrot.lane.b32.xlu0 %v638, 112
    %v1102 = vpop.permute.xlu0 %1101
    %1103 = vrot.lane.b32.xlu0 %v642, 112
    %v1104 = vpop.permute.xlu0 %1103
    %1105 = vrot.lane.b32.xlu0 %v646, 112
    %v1106 = vpop.permute.xlu0 %1105
    %1107 = vrot.lane.b32.xlu0 %v594, 112
    %v1108 = vpop.permute.xlu0 %1107
    %1109 = vrot.lane.b32.xlu0 %v635, 112
    %v1110 = vpop.permute.xlu0 %1109
    %1111 = vrot.lane.b32.xlu0 %v639, 112
    %v1112 = vpop.permute.xlu0 %1111
    %1113 = vrot.lane.b32.xlu0 %v643, 112
    %v1114 = vpop.permute.xlu0 %1113
    %1115 = vrot.lane.b32.xlu0 %v647, 112
    %v1116 = vpop.permute.xlu0 %1115
    %1117 = vrot.lane.b32.xlu0 %v595, 112
    %v1118 = vpop.permute.xlu0 %1117
    %vm1119 = vcmp.lt.s32.totalorder %v110, 112
    %v1120 = vsel %vm1119, %v1100, %v1110
    %v1121 = vsel %vm1119, %v1102, %v1112
    %v1122 = vsel %vm1119, %v1104, %v1114
    %v1123 = vsel %vm1119, %v1106, %v1116
    %v1124 = vsel %vm1119, %v1108, %v1118
    %v1125 = vsel %vm1119, %v1090, %v1100
    %v1126 = vsel %vm1119, %v1092, %v1102
    %v1127 = vsel %vm1119, %v1094, %v1104
    %v1128 = vsel %vm1119, %v1096, %v1106
    %v1129 = vsel %vm1119, %v1098, %v1108
    %v1130 = vsel %vm1119, %v1080, %v1090
    %v1131 = vsel %vm1119, %v1082, %v1092
    %v1132 = vsel %vm1119, %v1084, %v1094
    %v1133 = vsel %vm1119, %v1086, %v1096
    %v1134 = vsel %vm1119, %v1088, %v1098
    %v1135 = vsel %vm1119, %v1110, %v1080
    %v1136 = vsel %vm1119, %v1112, %v1082
    %v1137 = vsel %vm1119, %v1114, %v1084
    %v1138 = vsel %vm1119, %v1116, %v1086
    %v1139 = vsel %vm1119, %v1118, %v1088
    %v1140 = vmul.f32 %v1130, %v154
    %v1141 = vmul.f32 %v1125, %v155
    %v1142 = vmul.f32 %v1120, %v156
    %v1143 = vmul.f32 %v1135, %v157
    %v1144 = vmul.f32 %v1131, %v154
    %v1145 = vmul.f32 %v1126, %v155
    %v1146 = vmul.f32 %v1121, %v156
    %v1147 = vmul.f32 %v1136, %v157
    %v1148 = vmul.f32 %v1132, %v154
    %v1149 = vmul.f32 %v1127, %v155
    %v1150 = vmul.f32 %v1122, %v156
    %v1151 = vmul.f32 %v1137, %v157
    %v1152 = vmul.f32 %v1133, %v154
    %v1153 = vmul.f32 %v1128, %v155
    %v1154 = vmul.f32 %v1123, %v156
    %v1155 = vmul.f32 %v1138, %v157
    %v1156 = vmul.f32 %v1134, %v154
    %v1157 = vmul.f32 %v1129, %v155
    %v1158 = vmul.f32 %v1124, %v156
    %v1159 = vmul.f32 %v1139, %v157
    %s1160 = scalar_lea.vmem %s5, 32
    %v1161 = vld [vmem:[%s1160] sm:$0xff]
    %v1162 = vld [vmem:[%s1160 + $0x8] sm:$0xff]
    %v1164 = vsel %vm734, %v1161, 0
    %v1167 = vsel %vm734, %v1162, 0
    %v1170 = vsel %vm173, %v1156, 0
    %v1173 = vsel %vm173, %v1157, 0
    %v1176 = vsel %vm173, %v1158, 0
    %v1179 = vsel %vm173, %v1159, 0
    %1181 = vmatprep.subr.mxu0 0.0
    %1182 = vmatpush1.msra.mxu0 0.0
    %1183 = vmatprep.subr.mxu0 0.0
    %1184 = vmatpush1.msra.mxu0 0.0
    %1185 = vmatprep.subr.mxu0 0.0
    %1186 = vmatpush1.msra.mxu0 0.0
    %1187 = vmatprep.subr.mxu0 0.0
    %1188 = vmatpush1.msra.mxu0 0.0
    %1189 = vmatprep.subr.mxu0 0.0
    %1190 = vmatpush1.msra.mxu0 0.0
    %1191 = vmatprep.subr.mxu0 0.0
    %1192 = vmatpush1.msra.mxu0 0.0
    %1193 = vmatprep.subr.mxu0 0.0
    %1194 = vmatpush1.msra.mxu0 0.0
    %1195 = vmatprep.subr.mxu0 0.0
    %1196 = vmatpush1.msra.mxu0 0.0
    %1197 = vmatprep.subr.mxu0 0.0
    %1198 = vmatpush1.msra.mxu0 0.0
    %1199 = vmatprep.subr.mxu0 0.0
    %1200 = vmatpush1.msra.mxu0 0.0
    %1201 = vmatprep.subr.mxu0 0.0
    %1202 = vmatpush1.msra.mxu0 0.0
    %1203 = vmatprep.subr.mxu0 %v1173
    %1204 = vmatpush1.msra.mxu0 %v1170
    %1205 = vmatprep.subr.mxu0 %v1153
    %1206 = vmatpush1.msra.mxu0 %v1152
    %1207 = vmatprep.subr.mxu0 %v1149
    %1208 = vmatpush1.msra.mxu0 %v1148
    %1209 = vmatprep.subr.mxu0 %v1145
    %1210 = vmatpush1.msra.mxu0 %v1144
    %1211 = vmatprep.subr.mxu0 %v1141
    %1212 = vmatpush1.msra.mxu0 %v1140
    %1213 = vmatprep.subr.mxu0 0.0
    %1214 = vmatpush2.msra.mxu0 0.0
    %1215 = vmatprep.subr.mxu0 0.0
    %1216 = vmatpush2.msra.mxu0 0.0
    %1217 = vmatprep.subr.mxu0 0.0
    %1218 = vmatpush2.msra.mxu0 0.0
    %1219 = vmatprep.subr.mxu0 0.0
    %1220 = vmatpush2.msra.mxu0 0.0
    %1221 = vmatprep.subr.mxu0 0.0
    %1222 = vmatpush2.msra.mxu0 0.0
    %1223 = vmatprep.subr.mxu0 0.0
    %1224 = vmatpush2.msra.mxu0 0.0
    %1225 = vmatprep.subr.mxu0 0.0
    %1226 = vmatpush2.msra.mxu0 0.0
    %1227 = vmatprep.subr.mxu0 0.0
    %1228 = vmatpush2.msra.mxu0 0.0
    %1229 = vmatprep.subr.mxu0 0.0
    %1230 = vmatpush2.msra.mxu0 0.0
    %1231 = vmatprep.subr.mxu0 0.0
    %1232 = vmatpush2.msra.mxu0 0.0
    %1233 = vmatprep.subr.mxu0 0.0
    %1234 = vmatpush2.msra.mxu0 0.0
    %1235 = vmatprep.subr.mxu0 0.0
    %1236 = vmatpush2.msra.mxu0 0.0
    %1237 = vmatprep.subr.mxu0 0.0
    %1238 = vmatpush2.msra.mxu0 0.0
    %1239 = vmatprep.subr.mxu0 0.0
    %1240 = vmatpush2.msra.mxu0 0.0
    %1241 = vmatprep.subr.mxu0 0.0
    %1242 = vmatpush2.msra.mxu0 0.0
    %1243 = vmatprep.subr.mxu0 0.0
    %1244 = vmatpush2.msra.mxu0 0.0
    %1245 = vmatprep.mubr.f32.mxu0 0.0
    %1246 = vmatmul.mubr.f32.gmra.mxu0 %v1164
    %v1247 = vpop.f32.mrf.mxu0
    %v1248 = vadd.f32 0.0, %v1247
    %v1249 = vpop.f32.mrf.mxu0
    %v1250 = vadd.f32 0.0, %v1249
    %1251 = vmatprep.mubr.f32.mxu0 0.0
    %1252 = vmatmul.mubr.f32.gmra.mxu0 %v1167
    %v1253 = vpop.f32.mrf.mxu0
    %v1254 = vadd.f32 0.0, %v1253
    %v1255 = vpop.f32.mrf.mxu0
    %v1256 = vadd.f32 0.0, %v1255
    %1257 = vdwg.mxu0
    %1258 = vmatprep.subr.mxu0 0.0
    %1259 = vmatpush1.msra.mxu0 0.0
    %1260 = vmatprep.subr.mxu0 0.0
    %1261 = vmatpush1.msra.mxu0 0.0
    %1262 = vmatprep.subr.mxu0 0.0
    %1263 = vmatpush1.msra.mxu0 0.0
    %1264 = vmatprep.subr.mxu0 0.0
    %1265 = vmatpush1.msra.mxu0 0.0
    %1266 = vmatprep.subr.mxu0 0.0
    %1267 = vmatpush1.msra.mxu0 0.0
    %1268 = vmatprep.subr.mxu0 0.0
    %1269 = vmatpush1.msra.mxu0 0.0
    %1270 = vmatprep.subr.mxu0 0.0
    %1271 = vmatpush1.msra.mxu0 0.0
    %1272 = vmatprep.subr.mxu0 0.0
    %1273 = vmatpush1.msra.mxu0 0.0
    %1274 = vmatprep.subr.mxu0 0.0
    %1275 = vmatpush1.msra.mxu0 0.0
    %1276 = vmatprep.subr.mxu0 0.0
    %1277 = vmatpush1.msra.mxu0 0.0
    %1278 = vmatprep.subr.mxu0 0.0
    %1279 = vmatpush1.msra.mxu0 0.0
    %1280 = vmatprep.subr.mxu0 %v1179
    %1281 = vmatpush1.msra.mxu0 %v1176
    %1282 = vmatprep.subr.mxu0 %v1155
    %1283 = vmatpush1.msra.mxu0 %v1154
    %1284 = vmatprep.subr.mxu0 %v1151
    %1285 = vmatpush1.msra.mxu0 %v1150
    %1286 = vmatprep.subr.mxu0 %v1147
    %1287 = vmatpush1.msra.mxu0 %v1146
    %1288 = vmatprep.subr.mxu0 %v1143
    %1289 = vmatpush1.msra.mxu0 %v1142
    %1290 = vmatprep.subr.mxu0 0.0
    %1291 = vmatpush2.msra.mxu0 0.0
    %1292 = vmatprep.subr.mxu0 0.0
    %1293 = vmatpush2.msra.mxu0 0.0
    %1294 = vmatprep.subr.mxu0 0.0
    %1295 = vmatpush2.msra.mxu0 0.0
    %1296 = vmatprep.subr.mxu0 0.0
    %1297 = vmatpush2.msra.mxu0 0.0
    %1298 = vmatprep.subr.mxu0 0.0
    %1299 = vmatpush2.msra.mxu0 0.0
    %1300 = vmatprep.subr.mxu0 0.0
    %1301 = vmatpush2.msra.mxu0 0.0
    %1302 = vmatprep.subr.mxu0 0.0
    %1303 = vmatpush2.msra.mxu0 0.0
    %1304 = vmatprep.subr.mxu0 0.0
    %1305 = vmatpush2.msra.mxu0 0.0
    %1306 = vmatprep.subr.mxu0 0.0
    %1307 = vmatpush2.msra.mxu0 0.0
    %1308 = vmatprep.subr.mxu0 0.0
    %1309 = vmatpush2.msra.mxu0 0.0
    %1310 = vmatprep.subr.mxu0 0.0
    %1311 = vmatpush2.msra.mxu0 0.0
    %1312 = vmatprep.subr.mxu0 0.0
    %1313 = vmatpush2.msra.mxu0 0.0
    %1314 = vmatprep.subr.mxu0 0.0
    %1315 = vmatpush2.msra.mxu0 0.0
    %1316 = vmatprep.subr.mxu0 0.0
    %1317 = vmatpush2.msra.mxu0 0.0
    %1318 = vmatprep.subr.mxu0 0.0
    %1319 = vmatpush2.msra.mxu0 0.0
    %1320 = vmatprep.subr.mxu0 0.0
    %1321 = vmatpush2.msra.mxu0 0.0
    %1322 = vmatprep.mubr.f32.mxu0 0.0
    %1323 = vmatmul.mubr.f32.gmra.mxu0 %v1164
    %v1324 = vpop.f32.mrf.mxu0
    %v1325 = vadd.f32 0.0, %v1324
    %v1326 = vpop.f32.mrf.mxu0
    %v1327 = vadd.f32 0.0, %v1326
    %1328 = vmatprep.mubr.f32.mxu0 0.0
    %1329 = vmatmul.mubr.f32.gmra.mxu0 %v1167
    %v1330 = vpop.f32.mrf.mxu0
    %v1331 = vadd.f32 0.0, %v1330
    %v1332 = vpop.f32.mrf.mxu0
    %v1333 = vadd.f32 0.0, %v1332
    %1334 = vdwg.mxu0
    %v1335 = vadd.f32 %v992, %v1248
    %v1336 = vadd.f32 %v994, %v1250
    %v1337 = vadd.f32 %v1069, %v1325
    %v1338 = vadd.f32 %v1071, %v1327
    %v1339 = vadd.f32 %v998, %v1254
    %v1340 = vadd.f32 %v1000, %v1256
    %v1341 = vadd.f32 %v1075, %v1331
    %v1342 = vadd.f32 %v1077, %v1333
    %v1343 = vld [vmem:[%s6] sm:$0xff]
    %v1344 = vld [vmem:[%s6 + $0x8] sm:$0xff]
    %1346 = vset.pattern.permute.xlu0 0
    %1347 = vperm.xlu0 %1346, %v1343
    %v1348 = vpop.permute.xlu0 %1347
    %1351 = vset.pattern.permute.xlu0 0
    %1352 = vperm.xlu0 %1351, %v1344
    %v1353 = vpop.permute.xlu0 %1352
    %v1355 = vadd.f32 %v1335, %v1348
    %v1356 = vadd.f32 %v1336, %v1348
    %v1357 = vadd.f32 %v1337, %v1348
    %v1358 = vadd.f32 %v1338, %v1348
    %v1359 = vadd.f32 %v1339, %v1353
    %v1360 = vadd.f32 %v1340, %v1353
    %v1361 = vadd.f32 %v1341, %v1353
    %v1362 = vadd.f32 %v1342, %v1353
    %v1363 = vmax.f32 %v1355, 0.0
    %v1364 = vmax.f32 %v1356, 0.0
    %v1365 = vmax.f32 %v1357, 0.0
    %v1366 = vmax.f32 %v1358, 0.0
    %v1367 = vmax.f32 %v1359, 0.0
    %v1368 = vmax.f32 %v1360, 0.0
    %v1369 = vmax.f32 %v1361, 0.0
    %v1370 = vmax.f32 %v1362, 0.0
    %1371 = vrot.lane.b32.xlu0 %v1363, 1
    %v1372 = vpop.permute.xlu0 %1371
    %1373 = vrot.lane.b32.xlu0 %v1367, 1
    %v1374 = vpop.permute.xlu0 %1373
    %1375 = vrot.lane.b32.xlu0 %v1364, 1
    %v1376 = vpop.permute.xlu0 %1375
    %1377 = vrot.lane.b32.xlu0 %v1368, 1
    %v1378 = vpop.permute.xlu0 %1377
    %1379 = vrot.lane.b32.xlu0 %v1365, 1
    %v1380 = vpop.permute.xlu0 %1379
    %1381 = vrot.lane.b32.xlu0 %v1369, 1
    %v1382 = vpop.permute.xlu0 %1381
    %1383 = vrot.lane.b32.xlu0 %v1366, 1
    %v1384 = vpop.permute.xlu0 %1383
    %1385 = vrot.lane.b32.xlu0 %v1370, 1
    %v1386 = vpop.permute.xlu0 %1385
    %v1387 = vsel %vm504, %v1380, %v1384
    %v1388 = vsel %vm504, %v1382, %v1386
    %v1389 = vsel %vm504, %v1376, %v1380
    %v1390 = vsel %vm504, %v1378, %v1382
    %v1391 = vsel %vm504, %v1372, %v1376
    %v1392 = vsel %vm504, %v1374, %v1378
    %v1393 = vsel %vm504, %v1384, %v1372
    %v1394 = vsel %vm504, %v1386, %v1374
    %v1395 = vmul.f32 %v1393, %v130
    %v1396 = vmul.f32 %v1391, %v131
    %v1397 = vmul.f32 %v1389, %v132
    %v1398 = vmul.f32 %v1387, %v133
    %v1399 = vmul.f32 %v1394, %v130
    %v1400 = vmul.f32 %v1392, %v131
    %v1401 = vmul.f32 %v1390, %v132
    %v1402 = vmul.f32 %v1388, %v133
    %1403 = vrot.lane.b32.xlu0 %v1363, 127
    %v1404 = vpop.permute.xlu0 %1403
    %1405 = vrot.lane.b32.xlu0 %v1367, 127
    %v1406 = vpop.permute.xlu0 %1405
    %1407 = vrot.lane.b32.xlu0 %v1364, 127
    %v1408 = vpop.permute.xlu0 %1407
    %1409 = vrot.lane.b32.xlu0 %v1368, 127
    %v1410 = vpop.permute.xlu0 %1409
    %1411 = vrot.lane.b32.xlu0 %v1365, 127
    %v1412 = vpop.permute.xlu0 %1411
    %1413 = vrot.lane.b32.xlu0 %v1369, 127
    %v1414 = vpop.permute.xlu0 %1413
    %1415 = vrot.lane.b32.xlu0 %v1366, 127
    %v1416 = vpop.permute.xlu0 %1415
    %1417 = vrot.lane.b32.xlu0 %v1370, 127
    %v1418 = vpop.permute.xlu0 %1417
    %v1419 = vsel %vm555, %v1412, %v1416
    %v1420 = vsel %vm555, %v1414, %v1418
    %v1421 = vsel %vm555, %v1408, %v1412
    %v1422 = vsel %vm555, %v1410, %v1414
    %v1423 = vsel %vm555, %v1404, %v1408
    %v1424 = vsel %vm555, %v1406, %v1410
    %v1425 = vsel %vm555, %v1416, %v1404
    %v1426 = vsel %vm555, %v1418, %v1406
    %v1427 = vmul.f32 %v1423, %v138
    %v1428 = vmul.f32 %v1421, %v139
    %v1429 = vmul.f32 %v1419, %v140
    %v1430 = vmul.f32 %v1425, %v141
    %v1431 = vmul.f32 %v1424, %v138
    %v1432 = vmul.f32 %v1422, %v139
    %v1433 = vmul.f32 %v1420, %v140
    %v1434 = vmul.f32 %v1426, %v141
    %s1435 = scalar_lea.vmem [#allocation8], 16
    %v1436 = vld [vmem:[%s1435] sm:$0xff]
    %v1437 = vld [vmem:[%s1435 + $0x8] sm:$0xff]
    %1438 = vrot.lane.b32.xlu0 %v1395, 16
    %v1439 = vpop.permute.xlu0 %1438
    %1440 = vrot.lane.b32.xlu0 %v1399, 16
    %v1441 = vpop.permute.xlu0 %1440
    %1442 = vrot.lane.b32.xlu0 %v1363, 16
    %v1443 = vpop.permute.xlu0 %1442
    %1444 = vrot.lane.b32.xlu0 %v1367, 16
    %v1445 = vpop.permute.xlu0 %1444
    %1446 = vrot.lane.b32.xlu0 %v1427, 16
    %v1447 = vpop.permute.xlu0 %1446
    %1448 = vrot.lane.b32.xlu0 %v1431, 16
    %v1449 = vpop.permute.xlu0 %1448
    %1450 = vrot.lane.b32.xlu0 %v1396, 16
    %v1451 = vpop.permute.xlu0 %1450
    %1452 = vrot.lane.b32.xlu0 %v1400, 16
    %v1453 = vpop.permute.xlu0 %1452
    %1454 = vrot.lane.b32.xlu0 %v1364, 16
    %v1455 = vpop.permute.xlu0 %1454
    %1456 = vrot.lane.b32.xlu0 %v1368, 16
    %v1457 = vpop.permute.xlu0 %1456
    %1458 = vrot.lane.b32.xlu0 %v1428, 16
    %v1459 = vpop.permute.xlu0 %1458
    %1460 = vrot.lane.b32.xlu0 %v1432, 16
    %v1461 = vpop.permute.xlu0 %1460
    %1462 = vrot.lane.b32.xlu0 %v1397, 16
    %v1463 = vpop.permute.xlu0 %1462
    %1464 = vrot.lane.b32.xlu0 %v1401, 16
    %v1465 = vpop.permute.xlu0 %1464
    %1466 = vrot.lane.b32.xlu0 %v1365, 16
    %v1467 = vpop.permute.xlu0 %1466
    %1468 = vrot.lane.b32.xlu0 %v1369, 16
    %v1469 = vpop.permute.xlu0 %1468
    %1470 = vrot.lane.b32.xlu0 %v1429, 16
    %v1471 = vpop.permute.xlu0 %1470
    %1472 = vrot.lane.b32.xlu0 %v1433, 16
    %v1473 = vpop.permute.xlu0 %1472
    %1474 = vrot.lane.b32.xlu0 %v1398, 16
    %v1475 = vpop.permute.xlu0 %1474
    %1476 = vrot.lane.b32.xlu0 %v1402, 16
    %v1477 = vpop.permute.xlu0 %1476
    %1478 = vrot.lane.b32.xlu0 %v1366, 16
    %v1479 = vpop.permute.xlu0 %1478
    %1480 = vrot.lane.b32.xlu0 %v1370, 16
    %v1481 = vpop.permute.xlu0 %1480
    %1482 = vrot.lane.b32.xlu0 %v1430, 16
    %v1483 = vpop.permute.xlu0 %1482
    %1484 = vrot.lane.b32.xlu0 %v1434, 16
    %v1485 = vpop.permute.xlu0 %1484
    %v1486 = vsel %vm691, %v1463, %v1475
    %v1487 = vsel %vm691, %v1465, %v1477
    %v1488 = vsel %vm691, %v1467, %v1479
    %v1489 = vsel %vm691, %v1469, %v1481
    %v1490 = vsel %vm691, %v1471, %v1483
    %v1491 = vsel %vm691, %v1473, %v1485
    %v1492 = vsel %vm691, %v1451, %v1463
    %v1493 = vsel %vm691, %v1453, %v1465
    %v1494 = vsel %vm691, %v1455, %v1467
    %v1495 = vsel %vm691, %v1457, %v1469
    %v1496 = vsel %vm691, %v1459, %v1471
    %v1497 = vsel %vm691, %v1461, %v1473
    %v1498 = vsel %vm691, %v1439, %v1451
    %v1499 = vsel %vm691, %v1441, %v1453
    %v1500 = vsel %vm691, %v1443, %v1455
    %v1501 = vsel %vm691, %v1445, %v1457
    %v1502 = vsel %vm691, %v1447, %v1459
    %v1503 = vsel %vm691, %v1449, %v1461
    %v1504 = vsel %vm691, %v1475, %v1439
    %v1505 = vsel %vm691, %v1477, %v1441
    %v1506 = vsel %vm691, %v1479, %v1443
    %v1507 = vsel %vm691, %v1481, %v1445
    %v1508 = vsel %vm691, %v1483, %v1447
    %v1509 = vsel %vm691, %v1485, %v1449
    %v1510 = vmul.f32 %v1504, %v146
    %v1511 = vmul.f32 %v1498, %v147
    %v1512 = vmul.f32 %v1492, %v148
    %v1513 = vmul.f32 %v1486, %v149
    %v1514 = vmul.f32 %v1505, %v146
    %v1515 = vmul.f32 %v1499, %v147
    %v1516 = vmul.f32 %v1493, %v148
    %v1517 = vmul.f32 %v1487, %v149
    %v1518 = vmul.f32 %v1506, %v146
    %v1519 = vmul.f32 %v1500, %v147
    %v1520 = vmul.f32 %v1494, %v148
    %v1521 = vmul.f32 %v1488, %v149
    %v1522 = vmul.f32 %v1507, %v146
    %v1523 = vmul.f32 %v1501, %v147
    %v1524 = vmul.f32 %v1495, %v148
    %v1525 = vmul.f32 %v1489, %v149
    %v1526 = vmul.f32 %v1508, %v146
    %v1527 = vmul.f32 %v1502, %v147
    %v1528 = vmul.f32 %v1496, %v148
    %v1529 = vmul.f32 %v1490, %v149
    %v1530 = vmul.f32 %v1509, %v146
    %v1531 = vmul.f32 %v1503, %v147
    %v1532 = vmul.f32 %v1497, %v148
    %v1533 = vmul.f32 %v1491, %v149
    %v1534 = vld [vmem:[#allocation8] sm:$0xff]
    %v1535 = vld [vmem:[#allocation8 + $0x8] sm:$0xff]
    %vm1536 = vcmask 392192
    %v1538 = vsel %vm1536, %v1534, 0
    %v1541 = vsel %vm1536, %v1535, 0
    %1543 = vmatprep.subr.mxu0 0.0
    %1544 = vmatpush1.msra.mxu0 0.0
    %1545 = vmatprep.subr.mxu0 0.0
    %1546 = vmatpush1.msra.mxu0 0.0
    %1547 = vmatprep.subr.mxu0 0.0
    %1548 = vmatpush1.msra.mxu0 0.0
    %1549 = vmatprep.subr.mxu0 0.0
    %1550 = vmatpush1.msra.mxu0 0.0
    %1551 = vmatprep.subr.mxu0 0.0
    %1552 = vmatpush1.msra.mxu0 0.0
    %1553 = vmatprep.subr.mxu0 0.0
    %1554 = vmatpush1.msra.mxu0 0.0
    %1555 = vmatprep.subr.mxu0 0.0
    %1556 = vmatpush1.msra.mxu0 0.0
    %1557 = vmatprep.subr.mxu0 0.0
    %1558 = vmatpush1.msra.mxu0 0.0
    %1559 = vmatprep.subr.mxu0 0.0
    %1560 = vmatpush1.msra.mxu0 0.0
    %1561 = vmatprep.subr.mxu0 0.0
    %1562 = vmatpush1.msra.mxu0 0.0
    %1563 = vmatprep.subr.mxu0 %v1531
    %1564 = vmatpush1.msra.mxu0 %v1530
    %1565 = vmatprep.subr.mxu0 %v1527
    %1566 = vmatpush1.msra.mxu0 %v1526
    %1567 = vmatprep.subr.mxu0 %v1523
    %1568 = vmatpush1.msra.mxu0 %v1522
    %1569 = vmatprep.subr.mxu0 %v1519
    %1570 = vmatpush1.msra.mxu0 %v1518
    %1571 = vmatprep.subr.mxu0 %v1515
    %1572 = vmatpush1.msra.mxu0 %v1514
    %1573 = vmatprep.subr.mxu0 %v1511
    %1574 = vmatpush1.msra.mxu0 %v1510
    %1575 = vmatprep.subr.mxu0 0.0
    %1576 = vmatpush2.msra.mxu0 0.0
    %1577 = vmatprep.subr.mxu0 0.0
    %1578 = vmatpush2.msra.mxu0 0.0
    %1579 = vmatprep.subr.mxu0 0.0
    %1580 = vmatpush2.msra.mxu0 0.0
    %1581 = vmatprep.subr.mxu0 0.0
    %1582 = vmatpush2.msra.mxu0 0.0
    %1583 = vmatprep.subr.mxu0 0.0
    %1584 = vmatpush2.msra.mxu0 0.0
    %1585 = vmatprep.subr.mxu0 0.0
    %1586 = vmatpush2.msra.mxu0 0.0
    %1587 = vmatprep.subr.mxu0 0.0
    %1588 = vmatpush2.msra.mxu0 0.0
    %1589 = vmatprep.subr.mxu0 0.0
    %1590 = vmatpush2.msra.mxu0 0.0
    %1591 = vmatprep.subr.mxu0 0.0
    %1592 = vmatpush2.msra.mxu0 0.0
    %1593 = vmatprep.subr.mxu0 0.0
    %1594 = vmatpush2.msra.mxu0 0.0
    %1595 = vmatprep.subr.mxu0 0.0
    %1596 = vmatpush2.msra.mxu0 0.0
    %1597 = vmatprep.subr.mxu0 0.0
    %1598 = vmatpush2.msra.mxu0 0.0
    %1599 = vmatprep.subr.mxu0 0.0
    %1600 = vmatpush2.msra.mxu0 0.0
    %1601 = vmatprep.subr.mxu0 0.0
    %1602 = vmatpush2.msra.mxu0 0.0
    %1603 = vmatprep.subr.mxu0 0.0
    %1604 = vmatpush2.msra.mxu0 0.0
    %1605 = vmatprep.subr.mxu0 0.0
    %1606 = vmatpush2.msra.mxu0 0.0
    %1607 = vmatprep.mubr.f32.mxu0 0.0
    %1608 = vmatmul.mubr.f32.gmra.mxu0 %v1538
    %v1609 = vpop.f32.mrf.mxu0
    %v1610 = vadd.f32 0.0, %v1609
    %v1611 = vpop.f32.mrf.mxu0
    %v1612 = vadd.f32 0.0, %v1611
    %1613 = vmatprep.mubr.f32.mxu0 0.0
    %1614 = vmatmul.mubr.f32.gmra.mxu0 %v1541
    %v1615 = vpop.f32.mrf.mxu0
    %v1616 = vadd.f32 0.0, %v1615
    %v1617 = vpop.f32.mrf.mxu0
    %v1618 = vadd.f32 0.0, %v1617
    %1619 = vdwg.mxu0
    %1620 = vmatprep.subr.mxu0 0.0
    %1621 = vmatpush1.msra.mxu0 0.0
    %1622 = vmatprep.subr.mxu0 0.0
    %1623 = vmatpush1.msra.mxu0 0.0
    %1624 = vmatprep.subr.mxu0 0.0
    %1625 = vmatpush1.msra.mxu0 0.0
    %1626 = vmatprep.subr.mxu0 0.0
    %1627 = vmatpush1.msra.mxu0 0.0
    %1628 = vmatprep.subr.mxu0 0.0
    %1629 = vmatpush1.msra.mxu0 0.0
    %1630 = vmatprep.subr.mxu0 0.0
    %1631 = vmatpush1.msra.mxu0 0.0
    %1632 = vmatprep.subr.mxu0 0.0
    %1633 = vmatpush1.msra.mxu0 0.0
    %1634 = vmatprep.subr.mxu0 0.0
    %1635 = vmatpush1.msra.mxu0 0.0
    %1636 = vmatprep.subr.mxu0 0.0
    %1637 = vmatpush1.msra.mxu0 0.0
    %1638 = vmatprep.subr.mxu0 0.0
    %1639 = vmatpush1.msra.mxu0 0.0
    %1640 = vmatprep.subr.mxu0 %v1533
    %1641 = vmatpush1.msra.mxu0 %v1532
    %1642 = vmatprep.subr.mxu0 %v1529
    %1643 = vmatpush1.msra.mxu0 %v1528
    %1644 = vmatprep.subr.mxu0 %v1525
    %1645 = vmatpush1.msra.mxu0 %v1524
    %1646 = vmatprep.subr.mxu0 %v1521
    %1647 = vmatpush1.msra.mxu0 %v1520
    %1648 = vmatprep.subr.mxu0 %v1517
    %1649 = vmatpush1.msra.mxu0 %v1516
    %1650 = vmatprep.subr.mxu0 %v1513
    %1651 = vmatpush1.msra.mxu0 %v1512
    %1652 = vmatprep.subr.mxu0 0.0
    %1653 = vmatpush2.msra.mxu0 0.0
    %1654 = vmatprep.subr.mxu0 0.0
    %1655 = vmatpush2.msra.mxu0 0.0
    %1656 = vmatprep.subr.mxu0 0.0
    %1657 = vmatpush2.msra.mxu0 0.0
    %1658 = vmatprep.subr.mxu0 0.0
    %1659 = vmatpush2.msra.mxu0 0.0
    %1660 = vmatprep.subr.mxu0 0.0
    %1661 = vmatpush2.msra.mxu0 0.0
    %1662 = vmatprep.subr.mxu0 0.0
    %1663 = vmatpush2.msra.mxu0 0.0
    %1664 = vmatprep.subr.mxu0 0.0
    %1665 = vmatpush2.msra.mxu0 0.0
    %1666 = vmatprep.subr.mxu0 0.0
    %1667 = vmatpush2.msra.mxu0 0.0
    %1668 = vmatprep.subr.mxu0 0.0
    %1669 = vmatpush2.msra.mxu0 0.0
    %1670 = vmatprep.subr.mxu0 0.0
    %1671 = vmatpush2.msra.mxu0 0.0
    %1672 = vmatprep.subr.mxu0 0.0
    %1673 = vmatpush2.msra.mxu0 0.0
    %1674 = vmatprep.subr.mxu0 0.0
    %1675 = vmatpush2.msra.mxu0 0.0
    %1676 = vmatprep.subr.mxu0 0.0
    %1677 = vmatpush2.msra.mxu0 0.0
    %1678 = vmatprep.subr.mxu0 0.0
    %1679 = vmatpush2.msra.mxu0 0.0
    %1680 = vmatprep.subr.mxu0 0.0
    %1681 = vmatpush2.msra.mxu0 0.0
    %1682 = vmatprep.subr.mxu0 0.0
    %1683 = vmatpush2.msra.mxu0 0.0
    %1684 = vmatprep.mubr.f32.mxu0 0.0
    %1685 = vmatmul.mubr.f32.gmra.mxu0 %v1538
    %v1686 = vpop.f32.mrf.mxu0
    %v1687 = vadd.f32 0.0, %v1686
    %v1688 = vpop.f32.mrf.mxu0
    %v1689 = vadd.f32 0.0, %v1688
    %1690 = vmatprep.mubr.f32.mxu0 0.0
    %1691 = vmatmul.mubr.f32.gmra.mxu0 %v1541
    %v1692 = vpop.f32.mrf.mxu0
    %v1693 = vadd.f32 0.0, %v1692
    %v1694 = vpop.f32.mrf.mxu0
    %v1695 = vadd.f32 0.0, %v1694
    %1696 = vdwg.mxu0
    %v1698 = vsel %vm1536, %v1436, 0
    %v1701 = vsel %vm1536, %v1437, 0
    %1703 = vmatprep.subr.mxu0 0.0
    %1704 = vmatpush1.msra.mxu0 0.0
    %1705 = vmatprep.subr.mxu0 0.0
    %1706 = vmatpush1.msra.mxu0 0.0
    %1707 = vmatprep.subr.mxu0 0.0
    %1708 = vmatpush1.msra.mxu0 0.0
    %1709 = vmatprep.subr.mxu0 0.0
    %1710 = vmatpush1.msra.mxu0 0.0
    %1711 = vmatprep.subr.mxu0 0.0
    %1712 = vmatpush1.msra.mxu0 0.0
    %1713 = vmatprep.subr.mxu0 0.0
    %1714 = vmatpush1.msra.mxu0 0.0
    %1715 = vmatprep.subr.mxu0 0.0
    %1716 = vmatpush1.msra.mxu0 0.0
    %1717 = vmatprep.subr.mxu0 0.0
    %1718 = vmatpush1.msra.mxu0 0.0
    %1719 = vmatprep.subr.mxu0 0.0
    %1720 = vmatpush1.msra.mxu0 0.0
    %1721 = vmatprep.subr.mxu0 0.0
    %1722 = vmatpush1.msra.mxu0 0.0
    %1723 = vmatprep.subr.mxu0 %v1432
    %1724 = vmatpush1.msra.mxu0 %v1431
    %1725 = vmatprep.subr.mxu0 %v1428
    %1726 = vmatpush1.msra.mxu0 %v1427
    %1727 = vmatprep.subr.mxu0 %v1368
    %1728 = vmatpush1.msra.mxu0 %v1367
    %1729 = vmatprep.subr.mxu0 %v1364
    %1730 = vmatpush1.msra.mxu0 %v1363
    %1731 = vmatprep.subr.mxu0 %v1400
    %1732 = vmatpush1.msra.mxu0 %v1399
    %1733 = vmatprep.subr.mxu0 %v1396
    %1734 = vmatpush1.msra.mxu0 %v1395
    %1735 = vmatprep.subr.mxu0 0.0
    %1736 = vmatpush2.msra.mxu0 0.0
    %1737 = vmatprep.subr.mxu0 0.0
    %1738 = vmatpush2.msra.mxu0 0.0
    %1739 = vmatprep.subr.mxu0 0.0
    %1740 = vmatpush2.msra.mxu0 0.0
    %1741 = vmatprep.subr.mxu0 0.0
    %1742 = vmatpush2.msra.mxu0 0.0
    %1743 = vmatprep.subr.mxu0 0.0
    %1744 = vmatpush2.msra.mxu0 0.0
    %1745 = vmatprep.subr.mxu0 0.0
    %1746 = vmatpush2.msra.mxu0 0.0
    %1747 = vmatprep.subr.mxu0 0.0
    %1748 = vmatpush2.msra.mxu0 0.0
    %1749 = vmatprep.subr.mxu0 0.0
    %1750 = vmatpush2.msra.mxu0 0.0
    %1751 = vmatprep.subr.mxu0 0.0
    %1752 = vmatpush2.msra.mxu0 0.0
    %1753 = vmatprep.subr.mxu0 0.0
    %1754 = vmatpush2.msra.mxu0 0.0
    %1755 = vmatprep.subr.mxu0 0.0
    %1756 = vmatpush2.msra.mxu0 0.0
    %1757 = vmatprep.subr.mxu0 0.0
    %1758 = vmatpush2.msra.mxu0 0.0
    %1759 = vmatprep.subr.mxu0 0.0
    %1760 = vmatpush2.msra.mxu0 0.0
    %1761 = vmatprep.subr.mxu0 0.0
    %1762 = vmatpush2.msra.mxu0 0.0
    %1763 = vmatprep.subr.mxu0 0.0
    %1764 = vmatpush2.msra.mxu0 0.0
    %1765 = vmatprep.subr.mxu0 0.0
    %1766 = vmatpush2.msra.mxu0 0.0
    %1767 = vmatprep.mubr.f32.mxu0 0.0
    %1768 = vmatmul.mubr.f32.gmra.mxu0 %v1698
    %v1769 = vpop.f32.mrf.mxu0
    %v1770 = vadd.f32 %v1610, %v1769
    %v1771 = vpop.f32.mrf.mxu0
    %v1772 = vadd.f32 %v1612, %v1771
    %1773 = vmatprep.mubr.f32.mxu0 0.0
    %1774 = vmatmul.mubr.f32.gmra.mxu0 %v1701
    %v1775 = vpop.f32.mrf.mxu0
    %v1776 = vadd.f32 %v1616, %v1775
    %v1777 = vpop.f32.mrf.mxu0
    %v1778 = vadd.f32 %v1618, %v1777
    %1779 = vdwg.mxu0
    %1780 = vmatprep.subr.mxu0 0.0
    %1781 = vmatpush1.msra.mxu0 0.0
    %1782 = vmatprep.subr.mxu0 0.0
    %1783 = vmatpush1.msra.mxu0 0.0
    %1784 = vmatprep.subr.mxu0 0.0
    %1785 = vmatpush1.msra.mxu0 0.0
    %1786 = vmatprep.subr.mxu0 0.0
    %1787 = vmatpush1.msra.mxu0 0.0
    %1788 = vmatprep.subr.mxu0 0.0
    %1789 = vmatpush1.msra.mxu0 0.0
    %1790 = vmatprep.subr.mxu0 0.0
    %1791 = vmatpush1.msra.mxu0 0.0
    %1792 = vmatprep.subr.mxu0 0.0
    %1793 = vmatpush1.msra.mxu0 0.0
    %1794 = vmatprep.subr.mxu0 0.0
    %1795 = vmatpush1.msra.mxu0 0.0
    %1796 = vmatprep.subr.mxu0 0.0
    %1797 = vmatpush1.msra.mxu0 0.0
    %1798 = vmatprep.subr.mxu0 0.0
    %1799 = vmatpush1.msra.mxu0 0.0
    %1800 = vmatprep.subr.mxu0 %v1434
    %1801 = vmatpush1.msra.mxu0 %v1433
    %1802 = vmatprep.subr.mxu0 %v1430
    %1803 = vmatpush1.msra.mxu0 %v1429
    %1804 = vmatprep.subr.mxu0 %v1370
    %1805 = vmatpush1.msra.mxu0 %v1369
    %1806 = vmatprep.subr.mxu0 %v1366
    %1807 = vmatpush1.msra.mxu0 %v1365
    %1808 = vmatprep.subr.mxu0 %v1402
    %1809 = vmatpush1.msra.mxu0 %v1401
    %1810 = vmatprep.subr.mxu0 %v1398
    %1811 = vmatpush1.msra.mxu0 %v1397
    %1812 = vmatprep.subr.mxu0 0.0
    %1813 = vmatpush2.msra.mxu0 0.0
    %1814 = vmatprep.subr.mxu0 0.0
    %1815 = vmatpush2.msra.mxu0 0.0
    %1816 = vmatprep.subr.mxu0 0.0
    %1817 = vmatpush2.msra.mxu0 0.0
    %1818 = vmatprep.subr.mxu0 0.0
    %1819 = vmatpush2.msra.mxu0 0.0
    %1820 = vmatprep.subr.mxu0 0.0
    %1821 = vmatpush2.msra.mxu0 0.0
    %1822 = vmatprep.subr.mxu0 0.0
    %1823 = vmatpush2.msra.mxu0 0.0
    %1824 = vmatprep.subr.mxu0 0.0
    %1825 = vmatpush2.msra.mxu0 0.0
    %1826 = vmatprep.subr.mxu0 0.0
    %1827 = vmatpush2.msra.mxu0 0.0
    %1828 = vmatprep.subr.mxu0 0.0
    %1829 = vmatpush2.msra.mxu0 0.0
    %1830 = vmatprep.subr.mxu0 0.0
    %1831 = vmatpush2.msra.mxu0 0.0
    %1832 = vmatprep.subr.mxu0 0.0
    %1833 = vmatpush2.msra.mxu0 0.0
    %1834 = vmatprep.subr.mxu0 0.0
    %1835 = vmatpush2.msra.mxu0 0.0
    %1836 = vmatprep.subr.mxu0 0.0
    %1837 = vmatpush2.msra.mxu0 0.0
    %1838 = vmatprep.subr.mxu0 0.0
    %1839 = vmatpush2.msra.mxu0 0.0
    %1840 = vmatprep.subr.mxu0 0.0
    %1841 = vmatpush2.msra.mxu0 0.0
    %1842 = vmatprep.subr.mxu0 0.0
    %1843 = vmatpush2.msra.mxu0 0.0
    %1844 = vmatprep.mubr.f32.mxu0 0.0
    %1845 = vmatmul.mubr.f32.gmra.mxu0 %v1698
    %v1846 = vpop.f32.mrf.mxu0
    %v1847 = vadd.f32 %v1687, %v1846
    %v1848 = vpop.f32.mrf.mxu0
    %v1849 = vadd.f32 %v1689, %v1848
    %1850 = vmatprep.mubr.f32.mxu0 0.0
    %1851 = vmatmul.mubr.f32.gmra.mxu0 %v1701
    %v1852 = vpop.f32.mrf.mxu0
    %v1853 = vadd.f32 %v1693, %v1852
    %v1854 = vpop.f32.mrf.mxu0
    %v1855 = vadd.f32 %v1695, %v1854
    %1856 = vdwg.mxu0
    %1857 = vrot.lane.b32.xlu0 %v1395, 112
    %v1858 = vpop.permute.xlu0 %1857
    %1859 = vrot.lane.b32.xlu0 %v1399, 112
    %v1860 = vpop.permute.xlu0 %1859
    %1861 = vrot.lane.b32.xlu0 %v1363, 112
    %v1862 = vpop.permute.xlu0 %1861
    %1863 = vrot.lane.b32.xlu0 %v1367, 112
    %v1864 = vpop.permute.xlu0 %1863
    %1865 = vrot.lane.b32.xlu0 %v1427, 112
    %v1866 = vpop.permute.xlu0 %1865
    %1867 = vrot.lane.b32.xlu0 %v1431, 112
    %v1868 = vpop.permute.xlu0 %1867
    %1869 = vrot.lane.b32.xlu0 %v1396, 112
    %v1870 = vpop.permute.xlu0 %1869
    %1871 = vrot.lane.b32.xlu0 %v1400, 112
    %v1872 = vpop.permute.xlu0 %1871
    %1873 = vrot.lane.b32.xlu0 %v1364, 112
    %v1874 = vpop.permute.xlu0 %1873
    %1875 = vrot.lane.b32.xlu0 %v1368, 112
    %v1876 = vpop.permute.xlu0 %1875
    %1877 = vrot.lane.b32.xlu0 %v1428, 112
    %v1878 = vpop.permute.xlu0 %1877
    %1879 = vrot.lane.b32.xlu0 %v1432, 112
    %v1880 = vpop.permute.xlu0 %1879
    %1881 = vrot.lane.b32.xlu0 %v1397, 112
    %v1882 = vpop.permute.xlu0 %1881
    %1883 = vrot.lane.b32.xlu0 %v1401, 112
    %v1884 = vpop.permute.xlu0 %1883
    %1885 = vrot.lane.b32.xlu0 %v1365, 112
    %v1886 = vpop.permute.xlu0 %1885
    %1887 = vrot.lane.b32.xlu0 %v1369, 112
    %v1888 = vpop.permute.xlu0 %1887
    %1889 = vrot.lane.b32.xlu0 %v1429, 112
    %v1890 = vpop.permute.xlu0 %1889
    %1891 = vrot.lane.b32.xlu0 %v1433, 112
    %v1892 = vpop.permute.xlu0 %1891
    %1893 = vrot.lane.b32.xlu0 %v1398, 112
    %v1894 = vpop.permute.xlu0 %1893
    %1895 = vrot.lane.b32.xlu0 %v1402, 112
    %v1896 = vpop.permute.xlu0 %1895
    %1897 = vrot.lane.b32.xlu0 %v1366, 112
    %v1898 = vpop.permute.xlu0 %1897
    %1899 = vrot.lane.b32.xlu0 %v1370, 112
    %v1900 = vpop.permute.xlu0 %1899
    %1901 = vrot.lane.b32.xlu0 %v1430, 112
    %v1902 = vpop.permute.xlu0 %1901
    %1903 = vrot.lane.b32.xlu0 %v1434, 112
    %v1904 = vpop.permute.xlu0 %1903
    %v1905 = vsel %vm1119, %v1882, %v1894
    %v1906 = vsel %vm1119, %v1884, %v1896
    %v1907 = vsel %vm1119, %v1886, %v1898
    %v1908 = vsel %vm1119, %v1888, %v1900
    %v1909 = vsel %vm1119, %v1890, %v1902
    %v1910 = vsel %vm1119, %v1892, %v1904
    %v1911 = vsel %vm1119, %v1870, %v1882
    %v1912 = vsel %vm1119, %v1872, %v1884
    %v1913 = vsel %vm1119, %v1874, %v1886
    %v1914 = vsel %vm1119, %v1876, %v1888
    %v1915 = vsel %vm1119, %v1878, %v1890
    %v1916 = vsel %vm1119, %v1880, %v1892
    %v1917 = vsel %vm1119, %v1858, %v1870
    %v1918 = vsel %vm1119, %v1860, %v1872
    %v1919 = vsel %vm1119, %v1862, %v1874
    %v1920 = vsel %vm1119, %v1864, %v1876
    %v1921 = vsel %vm1119, %v1866, %v1878
    %v1922 = vsel %vm1119, %v1868, %v1880
    %v1923 = vsel %vm1119, %v1894, %v1858
    %v1924 = vsel %vm1119, %v1896, %v1860
    %v1925 = vsel %vm1119, %v1898, %v1862
    %v1926 = vsel %vm1119, %v1900, %v1864
    %v1927 = vsel %vm1119, %v1902, %v1866
    %v1928 = vsel %vm1119, %v1904, %v1868
    %v1929 = vmul.f32 %v1917, %v154
    %v1930 = vmul.f32 %v1911, %v155
    %v1931 = vmul.f32 %v1905, %v156
    %v1932 = vmul.f32 %v1923, %v157
    %v1933 = vmul.f32 %v1918, %v154
    %v1934 = vmul.f32 %v1912, %v155
    %v1935 = vmul.f32 %v1906, %v156
    %v1936 = vmul.f32 %v1924, %v157
    %v1937 = vmul.f32 %v1919, %v154
    %v1938 = vmul.f32 %v1913, %v155
    %v1939 = vmul.f32 %v1907, %v156
    %v1940 = vmul.f32 %v1925, %v157
    %v1941 = vmul.f32 %v1920, %v154
    %v1942 = vmul.f32 %v1914, %v155
    %v1943 = vmul.f32 %v1908, %v156
    %v1944 = vmul.f32 %v1926, %v157
    %v1945 = vmul.f32 %v1921, %v154
    %v1946 = vmul.f32 %v1915, %v155
    %v1947 = vmul.f32 %v1909, %v156
    %v1948 = vmul.f32 %v1927, %v157
    %v1949 = vmul.f32 %v1922, %v154
    %v1950 = vmul.f32 %v1916, %v155
    %v1951 = vmul.f32 %v1910, %v156
    %v1952 = vmul.f32 %v1928, %v157
    %s1953 = scalar_lea.vmem [#allocation8], 32
    %v1954 = vld [vmem:[%s1953] sm:$0xff]
    %v1955 = vld [vmem:[%s1953 + $0x8] sm:$0xff]
    %v1957 = vsel %vm1536, %v1954, 0
    %v1960 = vsel %vm1536, %v1955, 0
    %1962 = vmatprep.subr.mxu0 0.0
    %1963 = vmatpush1.msra.mxu0 0.0
    %1964 = vmatprep.subr.mxu0 0.0
    %1965 = vmatpush1.msra.mxu0 0.0
    %1966 = vmatprep.subr.mxu0 0.0
    %1967 = vmatpush1.msra.mxu0 0.0
    %1968 = vmatprep.subr.mxu0 0.0
    %1969 = vmatpush1.msra.mxu0 0.0
    %1970 = vmatprep.subr.mxu0 0.0
    %1971 = vmatpush1.msra.mxu0 0.0
    %1972 = vmatprep.subr.mxu0 0.0
    %1973 = vmatpush1.msra.mxu0 0.0
    %1974 = vmatprep.subr.mxu0 0.0
    %1975 = vmatpush1.msra.mxu0 0.0
    %1976 = vmatprep.subr.mxu0 0.0
    %1977 = vmatpush1.msra.mxu0 0.0
    %1978 = vmatprep.subr.mxu0 0.0
    %1979 = vmatpush1.msra.mxu0 0.0
    %1980 = vmatprep.subr.mxu0 0.0
    %1981 = vmatpush1.msra.mxu0 0.0
    %1982 = vmatprep.subr.mxu0 %v1950
    %1983 = vmatpush1.msra.mxu0 %v1949
    %1984 = vmatprep.subr.mxu0 %v1946
    %1985 = vmatpush1.msra.mxu0 %v1945
    %1986 = vmatprep.subr.mxu0 %v1942
    %1987 = vmatpush1.msra.mxu0 %v1941
    %1988 = vmatprep.subr.mxu0 %v1938
    %1989 = vmatpush1.msra.mxu0 %v1937
    %1990 = vmatprep.subr.mxu0 %v1934
    %1991 = vmatpush1.msra.mxu0 %v1933
    %1992 = vmatprep.subr.mxu0 %v1930
    %1993 = vmatpush1.msra.mxu0 %v1929
    %1994 = vmatprep.subr.mxu0 0.0
    %1995 = vmatpush2.msra.mxu0 0.0
    %1996 = vmatprep.subr.mxu0 0.0
    %1997 = vmatpush2.msra.mxu0 0.0
    %1998 = vmatprep.subr.mxu0 0.0
    %1999 = vmatpush2.msra.mxu0 0.0
    %2000 = vmatprep.subr.mxu0 0.0
    %2001 = vmatpush2.msra.mxu0 0.0
    %2002 = vmatprep.subr.mxu0 0.0
    %2003 = vmatpush2.msra.mxu0 0.0
    %2004 = vmatprep.subr.mxu0 0.0
    %2005 = vmatpush2.msra.mxu0 0.0
    %2006 = vmatprep.subr.mxu0 0.0
    %2007 = vmatpush2.msra.mxu0 0.0
    %2008 = vmatprep.subr.mxu0 0.0
    %2009 = vmatpush2.msra.mxu0 0.0
    %2010 = vmatprep.subr.mxu0 0.0
    %2011 = vmatpush2.msra.mxu0 0.0
    %2012 = vmatprep.subr.mxu0 0.0
    %2013 = vmatpush2.msra.mxu0 0.0
    %2014 = vmatprep.subr.mxu0 0.0
    %2015 = vmatpush2.msra.mxu0 0.0
    %2016 = vmatprep.subr.mxu0 0.0
    %2017 = vmatpush2.msra.mxu0 0.0
    %2018 = vmatprep.subr.mxu0 0.0
    %2019 = vmatpush2.msra.mxu0 0.0
    %2020 = vmatprep.subr.mxu0 0.0
    %2021 = vmatpush2.msra.mxu0 0.0
    %2022 = vmatprep.subr.mxu0 0.0
    %2023 = vmatpush2.msra.mxu0 0.0
    %2024 = vmatprep.subr.mxu0 0.0
    %2025 = vmatpush2.msra.mxu0 0.0
    %2026 = vmatprep.mubr.f32.mxu0 0.0
    %2027 = vmatmul.mubr.f32.gmra.mxu0 %v1957
    %v2028 = vpop.f32.mrf.mxu0
    %v2029 = vadd.f32 0.0, %v2028
    %v2030 = vpop.f32.mrf.mxu0
    %v2031 = vadd.f32 0.0, %v2030
    %2032 = vmatprep.mubr.f32.mxu0 0.0
    %2033 = vmatmul.mubr.f32.gmra.mxu0 %v1960
    %v2034 = vpop.f32.mrf.mxu0
    %v2035 = vadd.f32 0.0, %v2034
    %v2036 = vpop.f32.mrf.mxu0
    %v2037 = vadd.f32 0.0, %v2036
    %2038 = vdwg.mxu0
    %2039 = vmatprep.subr.mxu0 0.0
    %2040 = vmatpush1.msra.mxu0 0.0
    %2041 = vmatprep.subr.mxu0 0.0
    %2042 = vmatpush1.msra.mxu0 0.0
    %2043 = vmatprep.subr.mxu0 0.0
    %2044 = vmatpush1.msra.mxu0 0.0
    %2045 = vmatprep.subr.mxu0 0.0
    %2046 = vmatpush1.msra.mxu0 0.0
    %2047 = vmatprep.subr.mxu0 0.0
    %2048 = vmatpush1.msra.mxu0 0.0
    %2049 = vmatprep.subr.mxu0 0.0
    %2050 = vmatpush1.msra.mxu0 0.0
    %2051 = vmatprep.subr.mxu0 0.0
    %2052 = vmatpush1.msra.mxu0 0.0
    %2053 = vmatprep.subr.mxu0 0.0
    %2054 = vmatpush1.msra.mxu0 0.0
    %2055 = vmatprep.subr.mxu0 0.0
    %2056 = vmatpush1.msra.mxu0 0.0
    %2057 = vmatprep.subr.mxu0 0.0
    %2058 = vmatpush1.msra.mxu0 0.0
    %2059 = vmatprep.subr.mxu0 %v1952
    %2060 = vmatpush1.msra.mxu0 %v1951
    %2061 = vmatprep.subr.mxu0 %v1948
    %2062 = vmatpush1.msra.mxu0 %v1947
    %2063 = vmatprep.subr.mxu0 %v1944
    %2064 = vmatpush1.msra.mxu0 %v1943
    %2065 = vmatprep.subr.mxu0 %v1940
    %2066 = vmatpush1.msra.mxu0 %v1939
    %2067 = vmatprep.subr.mxu0 %v1936
    %2068 = vmatpush1.msra.mxu0 %v1935
    %2069 = vmatprep.subr.mxu0 %v1932
    %2070 = vmatpush1.msra.mxu0 %v1931
    %2071 = vmatprep.subr.mxu0 0.0
    %2072 = vmatpush2.msra.mxu0 0.0
    %2073 = vmatprep.subr.mxu0 0.0
    %2074 = vmatpush2.msra.mxu0 0.0
    %2075 = vmatprep.subr.mxu0 0.0
    %2076 = vmatpush2.msra.mxu0 0.0
    %2077 = vmatprep.subr.mxu0 0.0
    %2078 = vmatpush2.msra.mxu0 0.0
    %2079 = vmatprep.subr.mxu0 0.0
    %2080 = vmatpush2.msra.mxu0 0.0
    %2081 = vmatprep.subr.mxu0 0.0
    %2082 = vmatpush2.msra.mxu0 0.0
    %2083 = vmatprep.subr.mxu0 0.0
    %2084 = vmatpush2.msra.mxu0 0.0
    %2085 = vmatprep.subr.mxu0 0.0
    %2086 = vmatpush2.msra.mxu0 0.0
    %2087 = vmatprep.subr.mxu0 0.0
    %2088 = vmatpush2.msra.mxu0 0.0
    %2089 = vmatprep.subr.mxu0 0.0
    %2090 = vmatpush2.msra.mxu0 0.0
    %2091 = vmatprep.subr.mxu0 0.0
    %2092 = vmatpush2.msra.mxu0 0.0
    %2093 = vmatprep.subr.mxu0 0.0
    %2094 = vmatpush2.msra.mxu0 0.0
    %2095 = vmatprep.subr.mxu0 0.0
    %2096 = vmatpush2.msra.mxu0 0.0
    %2097 = vmatprep.subr.mxu0 0.0
    %2098 = vmatpush2.msra.mxu0 0.0
    %2099 = vmatprep.subr.mxu0 0.0
    %2100 = vmatpush2.msra.mxu0 0.0
    %2101 = vmatprep.subr.mxu0 0.0
    %2102 = vmatpush2.msra.mxu0 0.0
    %2103 = vmatprep.mubr.f32.mxu0 0.0
    %2104 = vmatmul.mubr.f32.gmra.mxu0 %v1957
    %v2105 = vpop.f32.mrf.mxu0
    %v2106 = vadd.f32 0.0, %v2105
    %v2107 = vpop.f32.mrf.mxu0
    %v2108 = vadd.f32 0.0, %v2107
    %2109 = vmatprep.mubr.f32.mxu0 0.0
    %2110 = vmatmul.mubr.f32.gmra.mxu0 %v1960
    %v2111 = vpop.f32.mrf.mxu0
    %v2112 = vadd.f32 0.0, %v2111
    %v2113 = vpop.f32.mrf.mxu0
    %v2114 = vadd.f32 0.0, %v2113
    %2115 = vdwg.mxu0
    %v2116 = vadd.f32 %v1770, %v2029
    %v2117 = vadd.f32 %v1772, %v2031
    %v2118 = vadd.f32 %v1847, %v2106
    %v2119 = vadd.f32 %v1849, %v2108
    %v2120 = vadd.f32 %v1776, %v2035
    %v2121 = vadd.f32 %v1778, %v2037
    %v2122 = vadd.f32 %v1853, %v2112
    %v2123 = vadd.f32 %v1855, %v2114
    %v2124 = vld [vmem:[%s8] sm:$0xff]
    %v2125 = vld [vmem:[%s8 + $0x8] sm:$0xff]
    %2127 = vset.pattern.permute.xlu0 0
    %2128 = vperm.xlu0 %2127, %v2124
    %v2129 = vpop.permute.xlu0 %2128
    %2132 = vset.pattern.permute.xlu0 0
    %2133 = vperm.xlu0 %2132, %v2125
    %v2134 = vpop.permute.xlu0 %2133
    %v2136 = vadd.f32 %v2116, %v2129
    %v2137 = vadd.f32 %v2117, %v2129
    %v2138 = vadd.f32 %v2118, %v2129
    %v2139 = vadd.f32 %v2119, %v2129
    %v2140 = vadd.f32 %v2120, %v2134
    %v2141 = vadd.f32 %v2121, %v2134
    %v2142 = vadd.f32 %v2122, %v2134
    %v2143 = vadd.f32 %v2123, %v2134
    %v2144 = vmax.f32 %v2136, 0.0
    %v2145 = vmax.f32 %v2137, 0.0
    %v2146 = vmax.f32 %v2138, 0.0
    %v2147 = vmax.f32 %v2139, 0.0
    %v2148 = vmax.f32 %v2140, 0.0
    %v2149 = vmax.f32 %v2141, 0.0
    %v2150 = vmax.f32 %v2142, 0.0
    %v2151 = vmax.f32 %v2143, 0.0
    %2152 = vrot.lane.b32.xlu0 %v2144, 1
    %v2153 = vpop.permute.xlu0 %2152
    %2154 = vrot.lane.b32.xlu0 %v2148, 1
    %v2155 = vpop.permute.xlu0 %2154
    %2156 = vrot.lane.b32.xlu0 %v2145, 1
    %v2157 = vpop.permute.xlu0 %2156
    %2158 = vrot.lane.b32.xlu0 %v2149, 1
    %v2159 = vpop.permute.xlu0 %2158
    %2160 = vrot.lane.b32.xlu0 %v2146, 1
    %v2161 = vpop.permute.xlu0 %2160
    %2162 = vrot.lane.b32.xlu0 %v2150, 1
    %v2163 = vpop.permute.xlu0 %2162
    %2164 = vrot.lane.b32.xlu0 %v2147, 1
    %v2165 = vpop.permute.xlu0 %2164
    %2166 = vrot.lane.b32.xlu0 %v2151, 1
    %v2167 = vpop.permute.xlu0 %2166
    %v2168 = vsel %vm504, %v2161, %v2165
    %v2169 = vsel %vm504, %v2163, %v2167
    %v2170 = vsel %vm504, %v2157, %v2161
    %v2171 = vsel %vm504, %v2159, %v2163
    %v2172 = vsel %vm504, %v2153, %v2157
    %v2173 = vsel %vm504, %v2155, %v2159
    %v2174 = vsel %vm504, %v2165, %v2153
    %v2175 = vsel %vm504, %v2167, %v2155
    %v2176 = vmul.f32 %v2174, %v130
    %v2177 = vmul.f32 %v2172, %v131
    %v2178 = vmul.f32 %v2170, %v132
    %v2179 = vmul.f32 %v2168, %v133
    %v2180 = vmul.f32 %v2175, %v130
    %v2181 = vmul.f32 %v2173, %v131
    %v2182 = vmul.f32 %v2171, %v132
    %v2183 = vmul.f32 %v2169, %v133
    %2184 = vrot.lane.b32.xlu0 %v2144, 127
    %v2185 = vpop.permute.xlu0 %2184
    %2186 = vrot.lane.b32.xlu0 %v2148, 127
    %v2187 = vpop.permute.xlu0 %2186
    %2188 = vrot.lane.b32.xlu0 %v2145, 127
    %v2189 = vpop.permute.xlu0 %2188
    %2190 = vrot.lane.b32.xlu0 %v2149, 127
    %v2191 = vpop.permute.xlu0 %2190
    %2192 = vrot.lane.b32.xlu0 %v2146, 127
    %v2193 = vpop.permute.xlu0 %2192
    %2194 = vrot.lane.b32.xlu0 %v2150, 127
    %v2195 = vpop.permute.xlu0 %2194
    %2196 = vrot.lane.b32.xlu0 %v2147, 127
    %v2197 = vpop.permute.xlu0 %2196
    %2198 = vrot.lane.b32.xlu0 %v2151, 127
    %v2199 = vpop.permute.xlu0 %2198
    %v2200 = vsel %vm555, %v2193, %v2197
    %v2201 = vsel %vm555, %v2195, %v2199
    %v2202 = vsel %vm555, %v2189, %v2193
    %v2203 = vsel %vm555, %v2191, %v2195
    %v2204 = vsel %vm555, %v2185, %v2189
    %v2205 = vsel %vm555, %v2187, %v2191
    %v2206 = vsel %vm555, %v2197, %v2185
    %v2207 = vsel %vm555, %v2199, %v2187
    %v2208 = vmul.f32 %v2204, %v138
    %v2209 = vmul.f32 %v2202, %v139
    %v2210 = vmul.f32 %v2200, %v140
    %v2211 = vmul.f32 %v2206, %v141
    %v2212 = vmul.f32 %v2205, %v138
    %v2213 = vmul.f32 %v2203, %v139
    %v2214 = vmul.f32 %v2201, %v140
    %v2215 = vmul.f32 %v2207, %v141
    %s2216 = scalar_lea.vmem [#allocation10], 16
    %v2217 = vld [vmem:[%s2216] sm:$0xff]
    %v2218 = vld [vmem:[%s2216 + $0x8] sm:$0xff]
    %2219 = vrot.lane.b32.xlu0 %v2176, 16
    %v2220 = vpop.permute.xlu0 %2219
    %2221 = vrot.lane.b32.xlu0 %v2180, 16
    %v2222 = vpop.permute.xlu0 %2221
    %2223 = vrot.lane.b32.xlu0 %v2144, 16
    %v2224 = vpop.permute.xlu0 %2223
    %2225 = vrot.lane.b32.xlu0 %v2148, 16
    %v2226 = vpop.permute.xlu0 %2225
    %2227 = vrot.lane.b32.xlu0 %v2208, 16
    %v2228 = vpop.permute.xlu0 %2227
    %2229 = vrot.lane.b32.xlu0 %v2212, 16
    %v2230 = vpop.permute.xlu0 %2229
    %2231 = vrot.lane.b32.xlu0 %v2177, 16
    %v2232 = vpop.permute.xlu0 %2231
    %2233 = vrot.lane.b32.xlu0 %v2181, 16
    %v2234 = vpop.permute.xlu0 %2233
    %2235 = vrot.lane.b32.xlu0 %v2145, 16
    %v2236 = vpop.permute.xlu0 %2235
    %2237 = vrot.lane.b32.xlu0 %v2149, 16
    %v2238 = vpop.permute.xlu0 %2237
    %2239 = vrot.lane.b32.xlu0 %v2209, 16
    %v2240 = vpop.permute.xlu0 %2239
    %2241 = vrot.lane.b32.xlu0 %v2213, 16
    %v2242 = vpop.permute.xlu0 %2241
    %2243 = vrot.lane.b32.xlu0 %v2178, 16
    %v2244 = vpop.permute.xlu0 %2243
    %2245 = vrot.lane.b32.xlu0 %v2182, 16
    %v2246 = vpop.permute.xlu0 %2245
    %2247 = vrot.lane.b32.xlu0 %v2146, 16
    %v2248 = vpop.permute.xlu0 %2247
    %2249 = vrot.lane.b32.xlu0 %v2150, 16
    %v2250 = vpop.permute.xlu0 %2249
    %2251 = vrot.lane.b32.xlu0 %v2210, 16
    %v2252 = vpop.permute.xlu0 %2251
    %2253 = vrot.lane.b32.xlu0 %v2214, 16
    %v2254 = vpop.permute.xlu0 %2253
    %2255 = vrot.lane.b32.xlu0 %v2179, 16
    %v2256 = vpop.permute.xlu0 %2255
    %2257 = vrot.lane.b32.xlu0 %v2183, 16
    %v2258 = vpop.permute.xlu0 %2257
    %2259 = vrot.lane.b32.xlu0 %v2147, 16
    %v2260 = vpop.permute.xlu0 %2259
    %2261 = vrot.lane.b32.xlu0 %v2151, 16
    %v2262 = vpop.permute.xlu0 %2261
    %2263 = vrot.lane.b32.xlu0 %v2211, 16
    %v2264 = vpop.permute.xlu0 %2263
    %2265 = vrot.lane.b32.xlu0 %v2215, 16
    %v2266 = vpop.permute.xlu0 %2265
    %v2267 = vsel %vm691, %v2244, %v2256
    %v2268 = vsel %vm691, %v2246, %v2258
    %v2269 = vsel %vm691, %v2248, %v2260
    %v2270 = vsel %vm691, %v2250, %v2262
    %v2271 = vsel %vm691, %v2252, %v2264
    %v2272 = vsel %vm691, %v2254, %v2266
    %v2273 = vsel %vm691, %v2232, %v2244
    %v2274 = vsel %vm691, %v2234, %v2246
    %v2275 = vsel %vm691, %v2236, %v2248
    %v2276 = vsel %vm691, %v2238, %v2250
    %v2277 = vsel %vm691, %v2240, %v2252
    %v2278 = vsel %vm691, %v2242, %v2254
    %v2279 = vsel %vm691, %v2220, %v2232
    %v2280 = vsel %vm691, %v2222, %v2234
    %v2281 = vsel %vm691, %v2224, %v2236
    %v2282 = vsel %vm691, %v2226, %v2238
    %v2283 = vsel %vm691, %v2228, %v2240
    %v2284 = vsel %vm691, %v2230, %v2242
    %v2285 = vsel %vm691, %v2256, %v2220
    %v2286 = vsel %vm691, %v2258, %v2222
    %v2287 = vsel %vm691, %v2260, %v2224
    %v2288 = vsel %vm691, %v2262, %v2226
    %v2289 = vsel %vm691, %v2264, %v2228
    %v2290 = vsel %vm691, %v2266, %v2230
    %v2291 = vmul.f32 %v2285, %v146
    %v2292 = vmul.f32 %v2279, %v147
    %v2293 = vmul.f32 %v2273, %v148
    %v2294 = vmul.f32 %v2267, %v149
    %v2295 = vmul.f32 %v2286, %v146
    %v2296 = vmul.f32 %v2280, %v147
    %v2297 = vmul.f32 %v2274, %v148
    %v2298 = vmul.f32 %v2268, %v149
    %v2299 = vmul.f32 %v2287, %v146
    %v2300 = vmul.f32 %v2281, %v147
    %v2301 = vmul.f32 %v2275, %v148
    %v2302 = vmul.f32 %v2269, %v149
    %v2303 = vmul.f32 %v2288, %v146
    %v2304 = vmul.f32 %v2282, %v147
    %v2305 = vmul.f32 %v2276, %v148
    %v2306 = vmul.f32 %v2270, %v149
    %v2307 = vmul.f32 %v2289, %v146
    %v2308 = vmul.f32 %v2283, %v147
    %v2309 = vmul.f32 %v2277, %v148
    %v2310 = vmul.f32 %v2271, %v149
    %v2311 = vmul.f32 %v2290, %v146
    %v2312 = vmul.f32 %v2284, %v147
    %v2313 = vmul.f32 %v2278, %v148
    %v2314 = vmul.f32 %v2272, %v149
    %v2315 = vld [vmem:[#allocation10] sm:$0xff]
    %v2316 = vld [vmem:[#allocation10 + $0x8] sm:$0xff]
    %v2318 = vsel %vm1536, %v2315, 0
    %v2321 = vsel %vm1536, %v2316, 0
    %2323 = vmatprep.subr.mxu0 0.0
    %2324 = vmatpush1.msra.mxu0 0.0
    %2325 = vmatprep.subr.mxu0 0.0
    %2326 = vmatpush1.msra.mxu0 0.0
    %2327 = vmatprep.subr.mxu0 0.0
    %2328 = vmatpush1.msra.mxu0 0.0
    %2329 = vmatprep.subr.mxu0 0.0
    %2330 = vmatpush1.msra.mxu0 0.0
    %2331 = vmatprep.subr.mxu0 0.0
    %2332 = vmatpush1.msra.mxu0 0.0
    %2333 = vmatprep.subr.mxu0 0.0
    %2334 = vmatpush1.msra.mxu0 0.0
    %2335 = vmatprep.subr.mxu0 0.0
    %2336 = vmatpush1.msra.mxu0 0.0
    %2337 = vmatprep.subr.mxu0 0.0
    %2338 = vmatpush1.msra.mxu0 0.0
    %2339 = vmatprep.subr.mxu0 0.0
    %2340 = vmatpush1.msra.mxu0 0.0
    %2341 = vmatprep.subr.mxu0 0.0
    %2342 = vmatpush1.msra.mxu0 0.0
    %2343 = vmatprep.subr.mxu0 %v2312
    %2344 = vmatpush1.msra.mxu0 %v2311
    %2345 = vmatprep.subr.mxu0 %v2308
    %2346 = vmatpush1.msra.mxu0 %v2307
    %2347 = vmatprep.subr.mxu0 %v2304
    %2348 = vmatpush1.msra.mxu0 %v2303
    %2349 = vmatprep.subr.mxu0 %v2300
    %2350 = vmatpush1.msra.mxu0 %v2299
    %2351 = vmatprep.subr.mxu0 %v2296
    %2352 = vmatpush1.msra.mxu0 %v2295
    %2353 = vmatprep.subr.mxu0 %v2292
    %2354 = vmatpush1.msra.mxu0 %v2291
    %2355 = vmatprep.subr.mxu0 0.0
    %2356 = vmatpush2.msra.mxu0 0.0
    %2357 = vmatprep.subr.mxu0 0.0
    %2358 = vmatpush2.msra.mxu0 0.0
    %2359 = vmatprep.subr.mxu0 0.0
    %2360 = vmatpush2.msra.mxu0 0.0
    %2361 = vmatprep.subr.mxu0 0.0
    %2362 = vmatpush2.msra.mxu0 0.0
    %2363 = vmatprep.subr.mxu0 0.0
    %2364 = vmatpush2.msra.mxu0 0.0
    %2365 = vmatprep.subr.mxu0 0.0
    %2366 = vmatpush2.msra.mxu0 0.0
    %2367 = vmatprep.subr.mxu0 0.0
    %2368 = vmatpush2.msra.mxu0 0.0
    %2369 = vmatprep.subr.mxu0 0.0
    %2370 = vmatpush2.msra.mxu0 0.0
    %2371 = vmatprep.subr.mxu0 0.0
    %2372 = vmatpush2.msra.mxu0 0.0
    %2373 = vmatprep.subr.mxu0 0.0
    %2374 = vmatpush2.msra.mxu0 0.0
    %2375 = vmatprep.subr.mxu0 0.0
    %2376 = vmatpush2.msra.mxu0 0.0
    %2377 = vmatprep.subr.mxu0 0.0
    %2378 = vmatpush2.msra.mxu0 0.0
    %2379 = vmatprep.subr.mxu0 0.0
    %2380 = vmatpush2.msra.mxu0 0.0
    %2381 = vmatprep.subr.mxu0 0.0
    %2382 = vmatpush2.msra.mxu0 0.0
    %2383 = vmatprep.subr.mxu0 0.0
    %2384 = vmatpush2.msra.mxu0 0.0
    %2385 = vmatprep.subr.mxu0 0.0
    %2386 = vmatpush2.msra.mxu0 0.0
    %2387 = vmatprep.mubr.f32.mxu0 0.0
    %2388 = vmatmul.mubr.f32.gmra.mxu0 %v2318
    %v2389 = vpop.f32.mrf.mxu0
    %v2390 = vadd.f32 0.0, %v2389
    %v2391 = vpop.f32.mrf.mxu0
    %v2392 = vadd.f32 0.0, %v2391
    %2393 = vmatprep.mubr.f32.mxu0 0.0
    %2394 = vmatmul.mubr.f32.gmra.mxu0 %v2321
    %v2395 = vpop.f32.mrf.mxu0
    %v2396 = vadd.f32 0.0, %v2395
    %v2397 = vpop.f32.mrf.mxu0
    %v2398 = vadd.f32 0.0, %v2397
    %2399 = vdwg.mxu0
    %2400 = vmatprep.subr.mxu0 0.0
    %2401 = vmatpush1.msra.mxu0 0.0
    %2402 = vmatprep.subr.mxu0 0.0
    %2403 = vmatpush1.msra.mxu0 0.0
    %2404 = vmatprep.subr.mxu0 0.0
    %2405 = vmatpush1.msra.mxu0 0.0
    %2406 = vmatprep.subr.mxu0 0.0
    %2407 = vmatpush1.msra.mxu0 0.0
    %2408 = vmatprep.subr.mxu0 0.0
    %2409 = vmatpush1.msra.mxu0 0.0
    %2410 = vmatprep.subr.mxu0 0.0
    %2411 = vmatpush1.msra.mxu0 0.0
    %2412 = vmatprep.subr.mxu0 0.0
    %2413 = vmatpush1.msra.mxu0 0.0
    %2414 = vmatprep.subr.mxu0 0.0
    %2415 = vmatpush1.msra.mxu0 0.0
    %2416 = vmatprep.subr.mxu0 0.0
    %2417 = vmatpush1.msra.mxu0 0.0
    %2418 = vmatprep.subr.mxu0 0.0
    %2419 = vmatpush1.msra.mxu0 0.0
    %2420 = vmatprep.subr.mxu0 %v2314
    %2421 = vmatpush1.msra.mxu0 %v2313
    %2422 = vmatprep.subr.mxu0 %v2310
    %2423 = vmatpush1.msra.mxu0 %v2309
    %2424 = vmatprep.subr.mxu0 %v2306
    %2425 = vmatpush1.msra.mxu0 %v2305
    %2426 = vmatprep.subr.mxu0 %v2302
    %2427 = vmatpush1.msra.mxu0 %v2301
    %2428 = vmatprep.subr.mxu0 %v2298
    %2429 = vmatpush1.msra.mxu0 %v2297
    %2430 = vmatprep.subr.mxu0 %v2294
    %2431 = vmatpush1.msra.mxu0 %v2293
    %2432 = vmatprep.subr.mxu0 0.0
    %2433 = vmatpush2.msra.mxu0 0.0
    %2434 = vmatprep.subr.mxu0 0.0
    %2435 = vmatpush2.msra.mxu0 0.0
    %2436 = vmatprep.subr.mxu0 0.0
    %2437 = vmatpush2.msra.mxu0 0.0
    %2438 = vmatprep.subr.mxu0 0.0
    %2439 = vmatpush2.msra.mxu0 0.0
    %2440 = vmatprep.subr.mxu0 0.0
    %2441 = vmatpush2.msra.mxu0 0.0
    %2442 = vmatprep.subr.mxu0 0.0
    %2443 = vmatpush2.msra.mxu0 0.0
    %2444 = vmatprep.subr.mxu0 0.0
    %2445 = vmatpush2.msra.mxu0 0.0
    %2446 = vmatprep.subr.mxu0 0.0
    %2447 = vmatpush2.msra.mxu0 0.0
    %2448 = vmatprep.subr.mxu0 0.0
    %2449 = vmatpush2.msra.mxu0 0.0
    %2450 = vmatprep.subr.mxu0 0.0
    %2451 = vmatpush2.msra.mxu0 0.0
    %2452 = vmatprep.subr.mxu0 0.0
    %2453 = vmatpush2.msra.mxu0 0.0
    %2454 = vmatprep.subr.mxu0 0.0
    %2455 = vmatpush2.msra.mxu0 0.0
    %2456 = vmatprep.subr.mxu0 0.0
    %2457 = vmatpush2.msra.mxu0 0.0
    %2458 = vmatprep.subr.mxu0 0.0
    %2459 = vmatpush2.msra.mxu0 0.0
    %2460 = vmatprep.subr.mxu0 0.0
    %2461 = vmatpush2.msra.mxu0 0.0
    %2462 = vmatprep.subr.mxu0 0.0
    %2463 = vmatpush2.msra.mxu0 0.0
    %2464 = vmatprep.mubr.f32.mxu0 0.0
    %2465 = vmatmul.mubr.f32.gmra.mxu0 %v2318
    %v2466 = vpop.f32.mrf.mxu0
    %v2467 = vadd.f32 0.0, %v2466
    %v2468 = vpop.f32.mrf.mxu0
    %v2469 = vadd.f32 0.0, %v2468
    %2470 = vmatprep.mubr.f32.mxu0 0.0
    %2471 = vmatmul.mubr.f32.gmra.mxu0 %v2321
    %v2472 = vpop.f32.mrf.mxu0
    %v2473 = vadd.f32 0.0, %v2472
    %v2474 = vpop.f32.mrf.mxu0
    %v2475 = vadd.f32 0.0, %v2474
    %2476 = vdwg.mxu0
    %v2478 = vsel %vm1536, %v2217, 0
    %v2481 = vsel %vm1536, %v2218, 0
    %2483 = vmatprep.subr.mxu0 0.0
    %2484 = vmatpush1.msra.mxu0 0.0
    %2485 = vmatprep.subr.mxu0 0.0
    %2486 = vmatpush1.msra.mxu0 0.0
    %2487 = vmatprep.subr.mxu0 0.0
    %2488 = vmatpush1.msra.mxu0 0.0
    %2489 = vmatprep.subr.mxu0 0.0
    %2490 = vmatpush1.msra.mxu0 0.0
    %2491 = vmatprep.subr.mxu0 0.0
    %2492 = vmatpush1.msra.mxu0 0.0
    %2493 = vmatprep.subr.mxu0 0.0
    %2494 = vmatpush1.msra.mxu0 0.0
    %2495 = vmatprep.subr.mxu0 0.0
    %2496 = vmatpush1.msra.mxu0 0.0
    %2497 = vmatprep.subr.mxu0 0.0
    %2498 = vmatpush1.msra.mxu0 0.0
    %2499 = vmatprep.subr.mxu0 0.0
    %2500 = vmatpush1.msra.mxu0 0.0
    %2501 = vmatprep.subr.mxu0 0.0
    %2502 = vmatpush1.msra.mxu0 0.0
    %2503 = vmatprep.subr.mxu0 %v2213
    %2504 = vmatpush1.msra.mxu0 %v2212
    %2505 = vmatprep.subr.mxu0 %v2209
    %2506 = vmatpush1.msra.mxu0 %v2208
    %2507 = vmatprep.subr.mxu0 %v2149
    %2508 = vmatpush1.msra.mxu0 %v2148
    %2509 = vmatprep.subr.mxu0 %v2145
    %2510 = vmatpush1.msra.mxu0 %v2144
    %2511 = vmatprep.subr.mxu0 %v2181
    %2512 = vmatpush1.msra.mxu0 %v2180
    %2513 = vmatprep.subr.mxu0 %v2177
    %2514 = vmatpush1.msra.mxu0 %v2176
    %2515 = vmatprep.subr.mxu0 0.0
    %2516 = vmatpush2.msra.mxu0 0.0
    %2517 = vmatprep.subr.mxu0 0.0
    %2518 = vmatpush2.msra.mxu0 0.0
    %2519 = vmatprep.subr.mxu0 0.0
    %2520 = vmatpush2.msra.mxu0 0.0
    %2521 = vmatprep.subr.mxu0 0.0
    %2522 = vmatpush2.msra.mxu0 0.0
    %2523 = vmatprep.subr.mxu0 0.0
    %2524 = vmatpush2.msra.mxu0 0.0
    %2525 = vmatprep.subr.mxu0 0.0
    %2526 = vmatpush2.msra.mxu0 0.0
    %2527 = vmatprep.subr.mxu0 0.0
    %2528 = vmatpush2.msra.mxu0 0.0
    %2529 = vmatprep.subr.mxu0 0.0
    %2530 = vmatpush2.msra.mxu0 0.0
    %2531 = vmatprep.subr.mxu0 0.0
    %2532 = vmatpush2.msra.mxu0 0.0
    %2533 = vmatprep.subr.mxu0 0.0
    %2534 = vmatpush2.msra.mxu0 0.0
    %2535 = vmatprep.subr.mxu0 0.0
    %2536 = vmatpush2.msra.mxu0 0.0
    %2537 = vmatprep.subr.mxu0 0.0
    %2538 = vmatpush2.msra.mxu0 0.0
    %2539 = vmatprep.subr.mxu0 0.0
    %2540 = vmatpush2.msra.mxu0 0.0
    %2541 = vmatprep.subr.mxu0 0.0
    %2542 = vmatpush2.msra.mxu0 0.0
    %2543 = vmatprep.subr.mxu0 0.0
    %2544 = vmatpush2.msra.mxu0 0.0
    %2545 = vmatprep.subr.mxu0 0.0
    %2546 = vmatpush2.msra.mxu0 0.0
    %2547 = vmatprep.mubr.f32.mxu0 0.0
    %2548 = vmatmul.mubr.f32.gmra.mxu0 %v2478
    %v2549 = vpop.f32.mrf.mxu0
    %v2550 = vadd.f32 %v2390, %v2549
    %v2551 = vpop.f32.mrf.mxu0
    %v2552 = vadd.f32 %v2392, %v2551
    %2553 = vmatprep.mubr.f32.mxu0 0.0
    %2554 = vmatmul.mubr.f32.gmra.mxu0 %v2481
    %v2555 = vpop.f32.mrf.mxu0
    %v2556 = vadd.f32 %v2396, %v2555
    %v2557 = vpop.f32.mrf.mxu0
    %v2558 = vadd.f32 %v2398, %v2557
    %2559 = vdwg.mxu0
    %2560 = vmatprep.subr.mxu0 0.0
    %2561 = vmatpush1.msra.mxu0 0.0
    %2562 = vmatprep.subr.mxu0 0.0
    %2563 = vmatpush1.msra.mxu0 0.0
    %2564 = vmatprep.subr.mxu0 0.0
    %2565 = vmatpush1.msra.mxu0 0.0
    %2566 = vmatprep.subr.mxu0 0.0
    %2567 = vmatpush1.msra.mxu0 0.0
    %2568 = vmatprep.subr.mxu0 0.0
    %2569 = vmatpush1.msra.mxu0 0.0
    %2570 = vmatprep.subr.mxu0 0.0
    %2571 = vmatpush1.msra.mxu0 0.0
    %2572 = vmatprep.subr.mxu0 0.0
    %2573 = vmatpush1.msra.mxu0 0.0
    %2574 = vmatprep.subr.mxu0 0.0
    %2575 = vmatpush1.msra.mxu0 0.0
    %2576 = vmatprep.subr.mxu0 0.0
    %2577 = vmatpush1.msra.mxu0 0.0
    %2578 = vmatprep.subr.mxu0 0.0
    %2579 = vmatpush1.msra.mxu0 0.0
    %2580 = vmatprep.subr.mxu0 %v2215
    %2581 = vmatpush1.msra.mxu0 %v2214
    %2582 = vmatprep.subr.mxu0 %v2211
    %2583 = vmatpush1.msra.mxu0 %v2210
    %2584 = vmatprep.subr.mxu0 %v2151
    %2585 = vmatpush1.msra.mxu0 %v2150
    %2586 = vmatprep.subr.mxu0 %v2147
    %2587 = vmatpush1.msra.mxu0 %v2146
    %2588 = vmatprep.subr.mxu0 %v2183
    %2589 = vmatpush1.msra.mxu0 %v2182
    %2590 = vmatprep.subr.mxu0 %v2179
    %2591 = vmatpush1.msra.mxu0 %v2178
    %2592 = vmatprep.subr.mxu0 0.0
    %2593 = vmatpush2.msra.mxu0 0.0
    %2594 = vmatprep.subr.mxu0 0.0
    %2595 = vmatpush2.msra.mxu0 0.0
    %2596 = vmatprep.subr.mxu0 0.0
    %2597 = vmatpush2.msra.mxu0 0.0
    %2598 = vmatprep.subr.mxu0 0.0
    %2599 = vmatpush2.msra.mxu0 0.0
    %2600 = vmatprep.subr.mxu0 0.0
    %2601 = vmatpush2.msra.mxu0 0.0
    %2602 = vmatprep.subr.mxu0 0.0
    %2603 = vmatpush2.msra.mxu0 0.0
    %2604 = vmatprep.subr.mxu0 0.0
    %2605 = vmatpush2.msra.mxu0 0.0
    %2606 = vmatprep.subr.mxu0 0.0
    %2607 = vmatpush2.msra.mxu0 0.0
    %2608 = vmatprep.subr.mxu0 0.0
    %2609 = vmatpush2.msra.mxu0 0.0
    %2610 = vmatprep.subr.mxu0 0.0
    %2611 = vmatpush2.msra.mxu0 0.0
    %2612 = vmatprep.subr.mxu0 0.0
    %2613 = vmatpush2.msra.mxu0 0.0
    %2614 = vmatprep.subr.mxu0 0.0
    %2615 = vmatpush2.msra.mxu0 0.0
    %2616 = vmatprep.subr.mxu0 0.0
    %2617 = vmatpush2.msra.mxu0 0.0
    %2618 = vmatprep.subr.mxu0 0.0
    %2619 = vmatpush2.msra.mxu0 0.0
    %2620 = vmatprep.subr.mxu0 0.0
    %2621 = vmatpush2.msra.mxu0 0.0
    %2622 = vmatprep.subr.mxu0 0.0
    %2623 = vmatpush2.msra.mxu0 0.0
    %2624 = vmatprep.mubr.f32.mxu0 0.0
    %2625 = vmatmul.mubr.f32.gmra.mxu0 %v2478
    %v2626 = vpop.f32.mrf.mxu0
    %v2627 = vadd.f32 %v2467, %v2626
    %v2628 = vpop.f32.mrf.mxu0
    %v2629 = vadd.f32 %v2469, %v2628
    %2630 = vmatprep.mubr.f32.mxu0 0.0
    %2631 = vmatmul.mubr.f32.gmra.mxu0 %v2481
    %v2632 = vpop.f32.mrf.mxu0
    %v2633 = vadd.f32 %v2473, %v2632
    %v2634 = vpop.f32.mrf.mxu0
    %v2635 = vadd.f32 %v2475, %v2634
    %2636 = vdwg.mxu0
    %2637 = vrot.lane.b32.xlu0 %v2176, 112
    %v2638 = vpop.permute.xlu0 %2637
    %2639 = vrot.lane.b32.xlu0 %v2180, 112
    %v2640 = vpop.permute.xlu0 %2639
    %2641 = vrot.lane.b32.xlu0 %v2144, 112
    %v2642 = vpop.permute.xlu0 %2641
    %2643 = vrot.lane.b32.xlu0 %v2148, 112
    %v2644 = vpop.permute.xlu0 %2643
    %2645 = vrot.lane.b32.xlu0 %v2208, 112
    %v2646 = vpop.permute.xlu0 %2645
    %2647 = vrot.lane.b32.xlu0 %v2212, 112
    %v2648 = vpop.permute.xlu0 %2647
    %2649 = vrot.lane.b32.xlu0 %v2177, 112
    %v2650 = vpop.permute.xlu0 %2649
    %2651 = vrot.lane.b32.xlu0 %v2181, 112
    %v2652 = vpop.permute.xlu0 %2651
    %2653 = vrot.lane.b32.xlu0 %v2145, 112
    %v2654 = vpop.permute.xlu0 %2653
    %2655 = vrot.lane.b32.xlu0 %v2149, 112
    %v2656 = vpop.permute.xlu0 %2655
    %2657 = vrot.lane.b32.xlu0 %v2209, 112
    %v2658 = vpop.permute.xlu0 %2657
    %2659 = vrot.lane.b32.xlu0 %v2213, 112
    %v2660 = vpop.permute.xlu0 %2659
    %2661 = vrot.lane.b32.xlu0 %v2178, 112
    %v2662 = vpop.permute.xlu0 %2661
    %2663 = vrot.lane.b32.xlu0 %v2182, 112
    %v2664 = vpop.permute.xlu0 %2663
    %2665 = vrot.lane.b32.xlu0 %v2146, 112
    %v2666 = vpop.permute.xlu0 %2665
    %2667 = vrot.lane.b32.xlu0 %v2150, 112
    %v2668 = vpop.permute.xlu0 %2667
    %2669 = vrot.lane.b32.xlu0 %v2210, 112
    %v2670 = vpop.permute.xlu0 %2669
    %2671 = vrot.lane.b32.xlu0 %v2214, 112
    %v2672 = vpop.permute.xlu0 %2671
    %2673 = vrot.lane.b32.xlu0 %v2179, 112
    %v2674 = vpop.permute.xlu0 %2673
    %2675 = vrot.lane.b32.xlu0 %v2183, 112
    %v2676 = vpop.permute.xlu0 %2675
    %2677 = vrot.lane.b32.xlu0 %v2147, 112
    %v2678 = vpop.permute.xlu0 %2677
    %2679 = vrot.lane.b32.xlu0 %v2151, 112
    %v2680 = vpop.permute.xlu0 %2679
    %2681 = vrot.lane.b32.xlu0 %v2211, 112
    %v2682 = vpop.permute.xlu0 %2681
    %2683 = vrot.lane.b32.xlu0 %v2215, 112
    %v2684 = vpop.permute.xlu0 %2683
    %v2685 = vsel %vm1119, %v2662, %v2674
    %v2686 = vsel %vm1119, %v2664, %v2676
    %v2687 = vsel %vm1119, %v2666, %v2678
    %v2688 = vsel %vm1119, %v2668, %v2680
    %v2689 = vsel %vm1119, %v2670, %v2682
    %v2690 = vsel %vm1119, %v2672, %v2684
    %v2691 = vsel %vm1119, %v2650, %v2662
    %v2692 = vsel %vm1119, %v2652, %v2664
    %v2693 = vsel %vm1119, %v2654, %v2666
    %v2694 = vsel %vm1119, %v2656, %v2668
    %v2695 = vsel %vm1119, %v2658, %v2670
    %v2696 = vsel %vm1119, %v2660, %v2672
    %v2697 = vsel %vm1119, %v2638, %v2650
    %v2698 = vsel %vm1119, %v2640, %v2652
    %v2699 = vsel %vm1119, %v2642, %v2654
    %v2700 = vsel %vm1119, %v2644, %v2656
    %v2701 = vsel %vm1119, %v2646, %v2658
    %v2702 = vsel %vm1119, %v2648, %v2660
    %v2703 = vsel %vm1119, %v2674, %v2638
    %v2704 = vsel %vm1119, %v2676, %v2640
    %v2705 = vsel %vm1119, %v2678, %v2642
    %v2706 = vsel %vm1119, %v2680, %v2644
    %v2707 = vsel %vm1119, %v2682, %v2646
    %v2708 = vsel %vm1119, %v2684, %v2648
    %v2709 = vmul.f32 %v2697, %v154
    %v2710 = vmul.f32 %v2691, %v155
    %v2711 = vmul.f32 %v2685, %v156
    %v2712 = vmul.f32 %v2703, %v157
    %v2713 = vmul.f32 %v2698, %v154
    %v2714 = vmul.f32 %v2692, %v155
    %v2715 = vmul.f32 %v2686, %v156
    %v2716 = vmul.f32 %v2704, %v157
    %v2717 = vmul.f32 %v2699, %v154
    %v2718 = vmul.f32 %v2693, %v155
    %v2719 = vmul.f32 %v2687, %v156
    %v2720 = vmul.f32 %v2705, %v157
    %v2721 = vmul.f32 %v2700, %v154
    %v2722 = vmul.f32 %v2694, %v155
    %v2723 = vmul.f32 %v2688, %v156
    %v2724 = vmul.f32 %v2706, %v157
    %v2725 = vmul.f32 %v2701, %v154
    %v2726 = vmul.f32 %v2695, %v155
    %v2727 = vmul.f32 %v2689, %v156
    %v2728 = vmul.f32 %v2707, %v157
    %v2729 = vmul.f32 %v2702, %v154
    %v2730 = vmul.f32 %v2696, %v155
    %v2731 = vmul.f32 %v2690, %v156
    %v2732 = vmul.f32 %v2708, %v157
    %s2733 = scalar_lea.vmem [#allocation10], 32
    %v2734 = vld [vmem:[%s2733] sm:$0xff]
    %v2735 = vld [vmem:[%s2733 + $0x8] sm:$0xff]
    %v2737 = vsel %vm1536, %v2734, 0
    %v2740 = vsel %vm1536, %v2735, 0
    %2742 = vmatprep.subr.mxu0 0.0
    %2743 = vmatpush1.msra.mxu0 0.0
    %2744 = vmatprep.subr.mxu0 0.0
    %2745 = vmatpush1.msra.mxu0 0.0
    %2746 = vmatprep.subr.mxu0 0.0
    %2747 = vmatpush1.msra.mxu0 0.0
    %2748 = vmatprep.subr.mxu0 0.0
    %2749 = vmatpush1.msra.mxu0 0.0
    %2750 = vmatprep.subr.mxu0 0.0
    %2751 = vmatpush1.msra.mxu0 0.0
    %2752 = vmatprep.subr.mxu0 0.0
    %2753 = vmatpush1.msra.mxu0 0.0
    %2754 = vmatprep.subr.mxu0 0.0
    %2755 = vmatpush1.msra.mxu0 0.0
    %2756 = vmatprep.subr.mxu0 0.0
    %2757 = vmatpush1.msra.mxu0 0.0
    %2758 = vmatprep.subr.mxu0 0.0
    %2759 = vmatpush1.msra.mxu0 0.0
    %2760 = vmatprep.subr.mxu0 0.0
    %2761 = vmatpush1.msra.mxu0 0.0
    %2762 = vmatprep.subr.mxu0 %v2730
    %2763 = vmatpush1.msra.mxu0 %v2729
    %2764 = vmatprep.subr.mxu0 %v2726
    %2765 = vmatpush1.msra.mxu0 %v2725
    %2766 = vmatprep.subr.mxu0 %v2722
    %2767 = vmatpush1.msra.mxu0 %v2721
    %2768 = vmatprep.subr.mxu0 %v2718
    %2769 = vmatpush1.msra.mxu0 %v2717
    %2770 = vmatprep.subr.mxu0 %v2714
    %2771 = vmatpush1.msra.mxu0 %v2713
    %2772 = vmatprep.subr.mxu0 %v2710
    %2773 = vmatpush1.msra.mxu0 %v2709
    %2774 = vmatprep.subr.mxu0 0.0
    %2775 = vmatpush2.msra.mxu0 0.0
    %2776 = vmatprep.subr.mxu0 0.0
    %2777 = vmatpush2.msra.mxu0 0.0
    %2778 = vmatprep.subr.mxu0 0.0
    %2779 = vmatpush2.msra.mxu0 0.0
    %2780 = vmatprep.subr.mxu0 0.0
    %2781 = vmatpush2.msra.mxu0 0.0
    %2782 = vmatprep.subr.mxu0 0.0
    %2783 = vmatpush2.msra.mxu0 0.0
    %2784 = vmatprep.subr.mxu0 0.0
    %2785 = vmatpush2.msra.mxu0 0.0
    %2786 = vmatprep.subr.mxu0 0.0
    %2787 = vmatpush2.msra.mxu0 0.0
    %2788 = vmatprep.subr.mxu0 0.0
    %2789 = vmatpush2.msra.mxu0 0.0
    %2790 = vmatprep.subr.mxu0 0.0
    %2791 = vmatpush2.msra.mxu0 0.0
    %2792 = vmatprep.subr.mxu0 0.0
    %2793 = vmatpush2.msra.mxu0 0.0
    %2794 = vmatprep.subr.mxu0 0.0
    %2795 = vmatpush2.msra.mxu0 0.0
    %2796 = vmatprep.subr.mxu0 0.0
    %2797 = vmatpush2.msra.mxu0 0.0
    %2798 = vmatprep.subr.mxu0 0.0
    %2799 = vmatpush2.msra.mxu0 0.0
    %2800 = vmatprep.subr.mxu0 0.0
    %2801 = vmatpush2.msra.mxu0 0.0
    %2802 = vmatprep.subr.mxu0 0.0
    %2803 = vmatpush2.msra.mxu0 0.0
    %2804 = vmatprep.subr.mxu0 0.0
    %2805 = vmatpush2.msra.mxu0 0.0
    %2806 = vmatprep.mubr.f32.mxu0 0.0
    %2807 = vmatmul.mubr.f32.gmra.mxu0 %v2737
    %v2808 = vpop.f32.mrf.mxu0
    %v2809 = vadd.f32 0.0, %v2808
    %v2810 = vpop.f32.mrf.mxu0
    %v2811 = vadd.f32 0.0, %v2810
    %2812 = vmatprep.mubr.f32.mxu0 0.0
    %2813 = vmatmul.mubr.f32.gmra.mxu0 %v2740
    %v2814 = vpop.f32.mrf.mxu0
    %v2815 = vadd.f32 0.0, %v2814
    %v2816 = vpop.f32.mrf.mxu0
    %v2817 = vadd.f32 0.0, %v2816
    %2818 = vdwg.mxu0
    %2819 = vmatprep.subr.mxu0 0.0
    %2820 = vmatpush1.msra.mxu0 0.0
    %2821 = vmatprep.subr.mxu0 0.0
    %2822 = vmatpush1.msra.mxu0 0.0
    %2823 = vmatprep.subr.mxu0 0.0
    %2824 = vmatpush1.msra.mxu0 0.0
    %2825 = vmatprep.subr.mxu0 0.0
    %2826 = vmatpush1.msra.mxu0 0.0
    %2827 = vmatprep.subr.mxu0 0.0
    %2828 = vmatpush1.msra.mxu0 0.0
    %2829 = vmatprep.subr.mxu0 0.0
    %2830 = vmatpush1.msra.mxu0 0.0
    %2831 = vmatprep.subr.mxu0 0.0
    %2832 = vmatpush1.msra.mxu0 0.0
    %2833 = vmatprep.subr.mxu0 0.0
    %2834 = vmatpush1.msra.mxu0 0.0
    %2835 = vmatprep.subr.mxu0 0.0
    %2836 = vmatpush1.msra.mxu0 0.0
    %2837 = vmatprep.subr.mxu0 0.0
    %2838 = vmatpush1.msra.mxu0 0.0
    %2839 = vmatprep.subr.mxu0 %v2732
    %2840 = vmatpush1.msra.mxu0 %v2731
    %2841 = vmatprep.subr.mxu0 %v2728
    %2842 = vmatpush1.msra.mxu0 %v2727
    %2843 = vmatprep.subr.mxu0 %v2724
    %2844 = vmatpush1.msra.mxu0 %v2723
    %2845 = vmatprep.subr.mxu0 %v2720
    %2846 = vmatpush1.msra.mxu0 %v2719
    %2847 = vmatprep.subr.mxu0 %v2716
    %2848 = vmatpush1.msra.mxu0 %v2715
    %2849 = vmatprep.subr.mxu0 %v2712
    %2850 = vmatpush1.msra.mxu0 %v2711
    %2851 = vmatprep.subr.mxu0 0.0
    %2852 = vmatpush2.msra.mxu0 0.0
    %2853 = vmatprep.subr.mxu0 0.0
    %2854 = vmatpush2.msra.mxu0 0.0
    %2855 = vmatprep.subr.mxu0 0.0
    %2856 = vmatpush2.msra.mxu0 0.0
    %2857 = vmatprep.subr.mxu0 0.0
    %2858 = vmatpush2.msra.mxu0 0.0
    %2859 = vmatprep.subr.mxu0 0.0
    %2860 = vmatpush2.msra.mxu0 0.0
    %2861 = vmatprep.subr.mxu0 0.0
    %2862 = vmatpush2.msra.mxu0 0.0
    %2863 = vmatprep.subr.mxu0 0.0
    %2864 = vmatpush2.msra.mxu0 0.0
    %2865 = vmatprep.subr.mxu0 0.0
    %2866 = vmatpush2.msra.mxu0 0.0
    %2867 = vmatprep.subr.mxu0 0.0
    %2868 = vmatpush2.msra.mxu0 0.0
    %2869 = vmatprep.subr.mxu0 0.0
    %2870 = vmatpush2.msra.mxu0 0.0
    %2871 = vmatprep.subr.mxu0 0.0
    %2872 = vmatpush2.msra.mxu0 0.0
    %2873 = vmatprep.subr.mxu0 0.0
    %2874 = vmatpush2.msra.mxu0 0.0
    %2875 = vmatprep.subr.mxu0 0.0
    %2876 = vmatpush2.msra.mxu0 0.0
    %2877 = vmatprep.subr.mxu0 0.0
    %2878 = vmatpush2.msra.mxu0 0.0
    %2879 = vmatprep.subr.mxu0 0.0
    %2880 = vmatpush2.msra.mxu0 0.0
    %2881 = vmatprep.subr.mxu0 0.0
    %2882 = vmatpush2.msra.mxu0 0.0
    %2883 = vmatprep.mubr.f32.mxu0 0.0
    %2884 = vmatmul.mubr.f32.gmra.mxu0 %v2737
    %v2885 = vpop.f32.mrf.mxu0
    %v2886 = vadd.f32 0.0, %v2885
    %v2887 = vpop.f32.mrf.mxu0
    %v2888 = vadd.f32 0.0, %v2887
    %2889 = vmatprep.mubr.f32.mxu0 0.0
    %2890 = vmatmul.mubr.f32.gmra.mxu0 %v2740
    %v2891 = vpop.f32.mrf.mxu0
    %v2892 = vadd.f32 0.0, %v2891
    %v2893 = vpop.f32.mrf.mxu0
    %v2894 = vadd.f32 0.0, %v2893
    %2895 = vdwg.mxu0
    %v2896 = vadd.f32 %v2550, %v2809
    %v2897 = vadd.f32 %v2552, %v2811
    %v2898 = vadd.f32 %v2627, %v2886
    %v2899 = vadd.f32 %v2629, %v2888
    %v2900 = vadd.f32 %v2556, %v2815
    %v2901 = vadd.f32 %v2558, %v2817
    %v2902 = vadd.f32 %v2633, %v2892
    %v2903 = vadd.f32 %v2635, %v2894
    %v2904 = vld [vmem:[%s10] sm:$0xff]
    %v2905 = vld [vmem:[%s10 + $0x8] sm:$0xff]
    %2907 = vset.pattern.permute.xlu0 0
    %2908 = vperm.xlu0 %2907, %v2904
    %v2909 = vpop.permute.xlu0 %2908
    %2912 = vset.pattern.permute.xlu0 0
    %2913 = vperm.xlu0 %2912, %v2905
    %v2914 = vpop.permute.xlu0 %2913
    %v2916 = vadd.f32 %v2896, %v2909
    %v2917 = vadd.f32 %v2897, %v2909
    %v2918 = vadd.f32 %v2898, %v2909
    %v2919 = vadd.f32 %v2899, %v2909
    %v2920 = vadd.f32 %v2900, %v2914
    %v2921 = vadd.f32 %v2901, %v2914
    %v2922 = vadd.f32 %v2902, %v2914
    %v2923 = vadd.f32 %v2903, %v2914
    %v2924 = vmax.f32 %v2916, 0.0
    %v2925 = vmax.f32 %v2917, 0.0
    %v2926 = vmax.f32 %v2918, 0.0
    %v2927 = vmax.f32 %v2919, 0.0
    %v2928 = vmax.f32 %v2920, 0.0
    %v2929 = vmax.f32 %v2921, 0.0
    %v2930 = vmax.f32 %v2922, 0.0
    %v2931 = vmax.f32 %v2923, 0.0
    %2932 = vrot.lane.b32.xlu0 %v2924, 1
    %v2933 = vpop.permute.xlu0 %2932
    %2934 = vrot.lane.b32.xlu0 %v2928, 1
    %v2935 = vpop.permute.xlu0 %2934
    %2936 = vrot.lane.b32.xlu0 %v2925, 1
    %v2937 = vpop.permute.xlu0 %2936
    %2938 = vrot.lane.b32.xlu0 %v2929, 1
    %v2939 = vpop.permute.xlu0 %2938
    %2940 = vrot.lane.b32.xlu0 %v2926, 1
    %v2941 = vpop.permute.xlu0 %2940
    %2942 = vrot.lane.b32.xlu0 %v2930, 1
    %v2943 = vpop.permute.xlu0 %2942
    %2944 = vrot.lane.b32.xlu0 %v2927, 1
    %v2945 = vpop.permute.xlu0 %2944
    %2946 = vrot.lane.b32.xlu0 %v2931, 1
    %v2947 = vpop.permute.xlu0 %2946
    %v2948 = vsel %vm504, %v2941, %v2945
    %v2949 = vsel %vm504, %v2943, %v2947
    %v2950 = vsel %vm504, %v2937, %v2941
    %v2951 = vsel %vm504, %v2939, %v2943
    %v2952 = vsel %vm504, %v2933, %v2937
    %v2953 = vsel %vm504, %v2935, %v2939
    %v2954 = vsel %vm504, %v2945, %v2933
    %v2955 = vsel %vm504, %v2947, %v2935
    %v2956 = vmul.f32 %v2954, %v130
    %v2957 = vmul.f32 %v2952, %v131
    %v2958 = vmul.f32 %v2950, %v132
    %v2959 = vmul.f32 %v2948, %v133
    %v2960 = vmul.f32 %v2955, %v130
    %v2961 = vmul.f32 %v2953, %v131
    %v2962 = vmul.f32 %v2951, %v132
    %v2963 = vmul.f32 %v2949, %v133
    %2964 = vrot.lane.b32.xlu0 %v2924, 127
    %v2965 = vpop.permute.xlu0 %2964
    %2966 = vrot.lane.b32.xlu0 %v2928, 127
    %v2967 = vpop.permute.xlu0 %2966
    %2968 = vrot.lane.b32.xlu0 %v2925, 127
    %v2969 = vpop.permute.xlu0 %2968
    %2970 = vrot.lane.b32.xlu0 %v2929, 127
    %v2971 = vpop.permute.xlu0 %2970
    %2972 = vrot.lane.b32.xlu0 %v2926, 127
    %v2973 = vpop.permute.xlu0 %2972
    %2974 = vrot.lane.b32.xlu0 %v2930, 127
    %v2975 = vpop.permute.xlu0 %2974
    %2976 = vrot.lane.b32.xlu0 %v2927, 127
    %v2977 = vpop.permute.xlu0 %2976
    %2978 = vrot.lane.b32.xlu0 %v2931, 127
    %v2979 = vpop.permute.xlu0 %2978
    %v2980 = vsel %vm555, %v2973, %v2977
    %v2981 = vsel %vm555, %v2975, %v2979
    %v2982 = vsel %vm555, %v2969, %v2973
    %v2983 = vsel %vm555, %v2971, %v2975
    %v2984 = vsel %vm555, %v2965, %v2969
    %v2985 = vsel %vm555, %v2967, %v2971
    %v2986 = vsel %vm555, %v2977, %v2965
    %v2987 = vsel %vm555, %v2979, %v2967
    %v2988 = vmul.f32 %v2984, %v138
    %v2989 = vmul.f32 %v2982, %v139
    %v2990 = vmul.f32 %v2980, %v140
    %v2991 = vmul.f32 %v2986, %v141
    %v2992 = vmul.f32 %v2985, %v138
    %v2993 = vmul.f32 %v2983, %v139
    %v2994 = vmul.f32 %v2981, %v140
    %v2995 = vmul.f32 %v2987, %v141
    %v3004 = vrot.slane %v1363, 4
    %v3005 = vrot.slane %v1364, 4
    %v3006 = vrot.slane %v1365, 4
    %v3007 = vrot.slane %v1366, 4
    %v3008 = vrot.slane %v1367, 4
    %v3009 = vsel %vm173, %v3004, %v3008
    %v3010 = vrot.slane %v1368, 4
    %v3011 = vsel %vm173, %v3005, %v3010
    %v3012 = vrot.slane %v1369, 4
    %v3013 = vsel %vm173, %v3006, %v3012
    %v3014 = vrot.slane %v1370, 4
    %v3015 = vsel %vm173, %v3007, %v3014
    %v3036 = vrot.slane %v2144, 4
    %v3037 = vrot.slane %v2145, 4
    %v3038 = vrot.slane %v2146, 4
    %v3039 = vrot.slane %v2147, 4
    %v3040 = vrot.slane %v2148, 4
    %v3041 = vsel %vm173, %v3036, %v3040
    %v3042 = vrot.slane %v2149, 4
    %v3043 = vsel %vm173, %v3037, %v3042
    %v3044 = vrot.slane %v2150, 4
    %v3045 = vsel %vm173, %v3038, %v3044
    %v3046 = vrot.slane %v2151, 4
    %v3047 = vsel %vm173, %v3039, %v3046
    %v3068 = vrot.slane %v2924, 4
    %v3069 = vrot.slane %v2925, 4
    %v3070 = vrot.slane %v2926, 4
    %v3071 = vrot.slane %v2927, 4
    %v3072 = vrot.slane %v2928, 4
    %v3073 = vsel %vm173, %v3068, %v3072
    %v3074 = vrot.slane %v2929, 4
    %v3075 = vsel %vm173, %v3069, %v3074
    %v3076 = vrot.slane %v2930, 4
    %v3077 = vsel %vm173, %v3070, %v3076
    %v3078 = vrot.slane %v2931, 4
    %v3079 = vsel %vm173, %v3071, %v3078
    %v3092 = vsel %vm173, %v543, %v3004
    %v3093 = vsel %vm173, %v544, %v3005
    %v3094 = vsel %vm173, %v545, %v3006
    %v3095 = vsel %vm173, %v546, %v3007
    %v3096 = vsel %vm173, %v3008, %v3036
    %v3097 = vsel %vm173, %v3010, %v3037
    %v3098 = vsel %vm173, %v3012, %v3038
    %v3099 = vsel %vm173, %v3014, %v3039
    %v3100 = vsel %vm173, %v3040, %v3068
    %v3101 = vsel %vm173, %v3042, %v3069
    %v3102 = vsel %vm173, %v3044, %v3070
    %v3103 = vsel %vm173, %v3046, %v3071
    %v3104 = vsel %vm173, %v3072, %v616
    %v3105 = vsel %vm173, %v3074, %v107
    %v3106 = vsel %vm173, %v3076, %v617
    %v3107 = vsel %vm173, %v3078, %v108
    %s3108 = scalar_lea.vmem %s11, 8
    %v3109 = vld [vmem:[%s3108] sm:$0x77]
    %3110 = vrot.lane.b32.xlu0 %v2956, 16
    %v3111 = vpop.permute.xlu0 %3110
    %3112 = vrot.lane.b32.xlu0 %v2960, 16
    %v3113 = vpop.permute.xlu0 %3112
    %3114 = vrot.lane.b32.xlu0 %v3092, 16
    %v3115 = vpop.permute.xlu0 %3114
    %3116 = vrot.lane.b32.xlu0 %v3009, 16
    %v3117 = vpop.permute.xlu0 %3116
    %3118 = vrot.lane.b32.xlu0 %v3096, 16
    %v3119 = vpop.permute.xlu0 %3118
    %3120 = vrot.lane.b32.xlu0 %v3041, 16
    %v3121 = vpop.permute.xlu0 %3120
    %3122 = vrot.lane.b32.xlu0 %v3100, 16
    %v3123 = vpop.permute.xlu0 %3122
    %3124 = vrot.lane.b32.xlu0 %v3073, 16
    %v3125 = vpop.permute.xlu0 %3124
    %3126 = vrot.lane.b32.xlu0 %v3104, 16
    %v3127 = vpop.permute.xlu0 %3126
    %3128 = vrot.lane.b32.xlu0 %v2988, 16
    %v3129 = vpop.permute.xlu0 %3128
    %3130 = vrot.lane.b32.xlu0 %v2992, 16
    %v3131 = vpop.permute.xlu0 %3130
    %3132 = vrot.lane.b32.xlu0 %v2957, 16
    %v3133 = vpop.permute.xlu0 %3132
    %3134 = vrot.lane.b32.xlu0 %v2961, 16
    %v3135 = vpop.permute.xlu0 %3134
    %3136 = vrot.lane.b32.xlu0 %v3093, 16
    %v3137 = vpop.permute.xlu0 %3136
    %3138 = vrot.lane.b32.xlu0 %v3011, 16
    %v3139 = vpop.permute.xlu0 %3138
    %3140 = vrot.lane.b32.xlu0 %v3097, 16
    %v3141 = vpop.permute.xlu0 %3140
    %3142 = vrot.lane.b32.xlu0 %v3043, 16
    %v3143 = vpop.permute.xlu0 %3142
    %3144 = vrot.lane.b32.xlu0 %v3101, 16
    %v3145 = vpop.permute.xlu0 %3144
    %3146 = vrot.lane.b32.xlu0 %v3075, 16
    %v3147 = vpop.permute.xlu0 %3146
    %3148 = vrot.lane.b32.xlu0 %v3105, 16
    %v3149 = vpop.permute.xlu0 %3148
    %3150 = vrot.lane.b32.xlu0 %v2989, 16
    %v3151 = vpop.permute.xlu0 %3150
    %3152 = vrot.lane.b32.xlu0 %v2993, 16
    %v3153 = vpop.permute.xlu0 %3152
    %3154 = vrot.lane.b32.xlu0 %v2958, 16
    %v3155 = vpop.permute.xlu0 %3154
    %3156 = vrot.lane.b32.xlu0 %v2962, 16
    %v3157 = vpop.permute.xlu0 %3156
    %3158 = vrot.lane.b32.xlu0 %v3094, 16
    %v3159 = vpop.permute.xlu0 %3158
    %3160 = vrot.lane.b32.xlu0 %v3013, 16
    %v3161 = vpop.permute.xlu0 %3160
    %3162 = vrot.lane.b32.xlu0 %v3098, 16
    %v3163 = vpop.permute.xlu0 %3162
    %3164 = vrot.lane.b32.xlu0 %v3045, 16
    %v3165 = vpop.permute.xlu0 %3164
    %3166 = vrot.lane.b32.xlu0 %v3102, 16
    %v3167 = vpop.permute.xlu0 %3166
    %3168 = vrot.lane.b32.xlu0 %v3077, 16
    %v3169 = vpop.permute.xlu0 %3168
    %3170 = vrot.lane.b32.xlu0 %v3106, 16
    %v3171 = vpop.permute.xlu0 %3170
    %3172 = vrot.lane.b32.xlu0 %v2990, 16
    %v3173 = vpop.permute.xlu0 %3172
    %3174 = vrot.lane.b32.xlu0 %v2994, 16
    %v3175 = vpop.permute.xlu0 %3174
    %3176 = vrot.lane.b32.xlu0 %v2959, 16
    %v3177 = vpop.permute.xlu0 %3176
    %3178 = vrot.lane.b32.xlu0 %v2963, 16
    %v3179 = vpop.permute.xlu0 %3178
    %3180 = vrot.lane.b32.xlu0 %v3095, 16
    %v3181 = vpop.permute.xlu0 %3180
    %3182 = vrot.lane.b32.xlu0 %v3015, 16
    %v3183 = vpop.permute.xlu0 %3182
    %3184 = vrot.lane.b32.xlu0 %v3099, 16
    %v3185 = vpop.permute.xlu0 %3184
    %3186 = vrot.lane.b32.xlu0 %v3047, 16
    %v3187 = vpop.permute.xlu0 %3186
    %3188 = vrot.lane.b32.xlu0 %v3103, 16
    %v3189 = vpop.permute.xlu0 %3188
    %3190 = vrot.lane.b32.xlu0 %v3079, 16
    %v3191 = vpop.permute.xlu0 %3190
    %3192 = vrot.lane.b32.xlu0 %v3107, 16
    %v3193 = vpop.permute.xlu0 %3192
    %3194 = vrot.lane.b32.xlu0 %v2991, 16
    %v3195 = vpop.permute.xlu0 %3194
    %3196 = vrot.lane.b32.xlu0 %v2995, 16
    %v3197 = vpop.permute.xlu0 %3196
    %v3198 = vsel %vm691, %v3155, %v3177
    %v3199 = vsel %vm691, %v3157, %v3179
    %v3200 = vsel %vm691, %v3159, %v3181
    %v3201 = vsel %vm691, %v3161, %v3183
    %v3202 = vsel %vm691, %v3163, %v3185
    %v3203 = vsel %vm691, %v3165, %v3187
    %v3204 = vsel %vm691, %v3167, %v3189
    %v3205 = vsel %vm691, %v3169, %v3191
    %v3206 = vsel %vm691, %v3171, %v3193
    %v3207 = vsel %vm691, %v3173, %v3195
    %v3208 = vsel %vm691, %v3175, %v3197
    %v3209 = vsel %vm691, %v3133, %v3155
    %v3210 = vsel %vm691, %v3135, %v3157
    %v3211 = vsel %vm691, %v3137, %v3159
    %v3212 = vsel %vm691, %v3139, %v3161
    %v3213 = vsel %vm691, %v3141, %v3163
    %v3214 = vsel %vm691, %v3143, %v3165
    %v3215 = vsel %vm691, %v3145, %v3167
    %v3216 = vsel %vm691, %v3147, %v3169
    %v3217 = vsel %vm691, %v3149, %v3171
    %v3218 = vsel %vm691, %v3151, %v3173
    %v3219 = vsel %vm691, %v3153, %v3175
    %v3220 = vsel %vm691, %v3111, %v3133
    %v3221 = vsel %vm691, %v3113, %v3135
    %v3222 = vsel %vm691, %v3115, %v3137
    %v3223 = vsel %vm691, %v3117, %v3139
    %v3224 = vsel %vm691, %v3119, %v3141
    %v3225 = vsel %vm691, %v3121, %v3143
    %v3226 = vsel %vm691, %v3123, %v3145
    %v3227 = vsel %vm691, %v3125, %v3147
    %v3228 = vsel %vm691, %v3127, %v3149
    %v3229 = vsel %vm691, %v3129, %v3151
    %v3230 = vsel %vm691, %v3131, %v3153
    %v3231 = vsel %vm691, %v3177, %v3111
    %v3232 = vsel %vm691, %v3179, %v3113
    %v3233 = vsel %vm691, %v3181, %v3115
    %v3234 = vsel %vm691, %v3183, %v3117
    %v3235 = vsel %vm691, %v3185, %v3119
    %v3236 = vsel %vm691, %v3187, %v3121
    %v3237 = vsel %vm691, %v3189, %v3123
    %v3238 = vsel %vm691, %v3191, %v3125
    %v3239 = vsel %vm691, %v3193, %v3127
    %v3240 = vsel %vm691, %v3195, %v3129
    %v3241 = vsel %vm691, %v3197, %v3131
    %v3242 = vmul.f32 %v3231, %v146
    %v3243 = vmul.f32 %v3220, %v147
    %v3244 = vmul.f32 %v3209, %v148
    %v3245 = vmul.f32 %v3198, %v149
    %v3246 = vmul.f32 %v3232, %v146
    %v3247 = vmul.f32 %v3221, %v147
    %v3248 = vmul.f32 %v3210, %v148
    %v3249 = vmul.f32 %v3199, %v149
    %v3250 = vmul.f32 %v3233, %v146
    %v3251 = vmul.f32 %v3222, %v147
    %v3252 = vmul.f32 %v3211, %v148
    %v3253 = vmul.f32 %v3200, %v149
    %v3254 = vmul.f32 %v3234, %v146
    %v3255 = vmul.f32 %v3223, %v147
    %v3256 = vmul.f32 %v3212, %v148
    %v3257 = vmul.f32 %v3201, %v149
    %v3258 = vmul.f32 %v3235, %v146
    %v3259 = vmul.f32 %v3224, %v147
    %v3260 = vmul.f32 %v3213, %v148
    %v3261 = vmul.f32 %v3202, %v149
    %v3262 = vmul.f32 %v3236, %v146
    %v3263 = vmul.f32 %v3225, %v147
    %v3264 = vmul.f32 %v3214, %v148
    %v3265 = vmul.f32 %v3203, %v149
    %v3266 = vmul.f32 %v3237, %v146
    %v3267 = vmul.f32 %v3226, %v147
    %v3268 = vmul.f32 %v3215, %v148
    %v3269 = vmul.f32 %v3204, %v149
    %v3270 = vmul.f32 %v3238, %v146
    %v3271 = vmul.f32 %v3227, %v147
    %v3272 = vmul.f32 %v3216, %v148
    %v3273 = vmul.f32 %v3205, %v149
    %v3274 = vmul.f32 %v3239, %v146
    %v3275 = vmul.f32 %v3228, %v147
    %v3276 = vmul.f32 %v3217, %v148
    %v3277 = vmul.f32 %v3206, %v149
    %v3278 = vmul.f32 %v3240, %v146
    %v3279 = vmul.f32 %v3229, %v147
    %v3280 = vmul.f32 %v3218, %v148
    %v3281 = vmul.f32 %v3207, %v149
    %v3282 = vmul.f32 %v3241, %v146
    %v3283 = vmul.f32 %v3230, %v147
    %v3284 = vmul.f32 %v3219, %v148
    %v3285 = vmul.f32 %v3208, %v149
    %v3286 = vld [vmem:[%s11] sm:$0x77]
    %v3288 = vcombine.high %v3286, %v3286
    %vm3289 = vcmask 228352
    %v3290 = vsel %vm3289, %v3288, 0
    %3292 = vmatprep.subr.mxu0 %v2308
    %3293 = vmatpush1.msra.mxu0 %v2307
    %3294 = vmatprep.subr.mxu0 %v1531
    %3295 = vmatpush1.msra.mxu0 %v1530
    %3296 = vmatprep.subr.mxu0 %v1527
    %3297 = vmatpush1.msra.mxu0 %v1526
    %3298 = vmatprep.subr.mxu0 %v3275
    %3299 = vmatpush1.msra.mxu0 %v3274
    %3300 = vmatprep.subr.mxu0 %v3271
    %3301 = vmatpush1.msra.mxu0 %v3270
    %3302 = vmatprep.subr.mxu0 %v3267
    %3303 = vmatpush1.msra.mxu0 %v3266
    %3304 = vmatprep.subr.mxu0 %v3263
    %3305 = vmatpush1.msra.mxu0 %v3262
    %3306 = vmatprep.subr.mxu0 %v3259
    %3307 = vmatpush1.msra.mxu0 %v3258
    %3308 = vmatprep.subr.mxu0 %v3255
    %3309 = vmatpush1.msra.mxu0 %v3254
    %3310 = vmatprep.subr.mxu0 %v3251
    %3311 = vmatpush1.msra.mxu0 %v3250
    %3312 = vmatprep.subr.mxu0 %v3247
    %3313 = vmatpush1.msra.mxu0 %v3246
    %3314 = vmatprep.subr.mxu0 %v3243
    %3315 = vmatpush1.msra.mxu0 %v3242
    %3316 = vmatprep.subr.mxu0 %v2296
    %3317 = vmatpush1.msra.mxu0 %v2295
    %3318 = vmatprep.subr.mxu0 %v2292
    %3319 = vmatpush1.msra.mxu0 %v2291
    %3320 = vmatprep.subr.mxu0 %v1515
    %3321 = vmatpush1.msra.mxu0 %v1514
    %3322 = vmatprep.subr.mxu0 %v1511
    %3323 = vmatpush1.msra.mxu0 %v1510
    %3324 = vmatprep.subr.mxu0 0.0
    %3325 = vmatpush2.msra.mxu0 0.0
    %3326 = vmatprep.subr.mxu0 0.0
    %3327 = vmatpush2.msra.mxu0 0.0
    %3328 = vmatprep.subr.mxu0 0.0
    %3329 = vmatpush2.msra.mxu0 0.0
    %3330 = vmatprep.subr.mxu0 0.0
    %3331 = vmatpush2.msra.mxu0 0.0
    %3332 = vmatprep.subr.mxu0 0.0
    %3333 = vmatpush2.msra.mxu0 0.0
    %3334 = vmatprep.subr.mxu0 0.0
    %3335 = vmatpush2.msra.mxu0 0.0
    %3336 = vmatprep.subr.mxu0 0.0
    %3337 = vmatpush2.msra.mxu0 0.0
    %3338 = vmatprep.subr.mxu0 0.0
    %3339 = vmatpush2.msra.mxu0 0.0
    %3340 = vmatprep.subr.mxu0 0.0
    %3341 = vmatpush2.msra.mxu0 0.0
    %3342 = vmatprep.subr.mxu0 0.0
    %3343 = vmatpush2.msra.mxu0 0.0
    %3344 = vmatprep.subr.mxu0 0.0
    %3345 = vmatpush2.msra.mxu0 0.0
    %3346 = vmatprep.subr.mxu0 0.0
    %3347 = vmatpush2.msra.mxu0 0.0
    %3348 = vmatprep.subr.mxu0 %v745
    %3349 = vmatpush2.msra.mxu0 %v742
    %3350 = vmatprep.subr.mxu0 %v3283
    %3351 = vmatpush2.msra.mxu0 %v3282
    %3352 = vmatprep.subr.mxu0 %v3279
    %3353 = vmatpush2.msra.mxu0 %v3278
    %3354 = vmatprep.subr.mxu0 %v2312
    %3355 = vmatpush2.msra.mxu0 %v2311
    %3356 = vmatprep.mubr.f32.mxu0 %v3290
    %3357 = vmatmul.mubr.f32.gmra.mxu0 %v3286
    %v3358 = vpop.f32.mrf.mxu0
    %v3359 = vadd.f32 0.0, %v3358
    %v3360 = vpop.f32.mrf.mxu0
    %v3361 = vadd.f32 0.0, %v3360
    %3362 = vdwg.mxu0
    %3363 = vmatprep.subr.mxu0 %v2310
    %3364 = vmatpush1.msra.mxu0 %v2309
    %3365 = vmatprep.subr.mxu0 %v1533
    %3366 = vmatpush1.msra.mxu0 %v1532
    %3367 = vmatprep.subr.mxu0 %v1529
    %3368 = vmatpush1.msra.mxu0 %v1528
    %3369 = vmatprep.subr.mxu0 %v3277
    %3370 = vmatpush1.msra.mxu0 %v3276
    %3371 = vmatprep.subr.mxu0 %v3273
    %3372 = vmatpush1.msra.mxu0 %v3272
    %3373 = vmatprep.subr.mxu0 %v3269
    %3374 = vmatpush1.msra.mxu0 %v3268
    %3375 = vmatprep.subr.mxu0 %v3265
    %3376 = vmatpush1.msra.mxu0 %v3264
    %3377 = vmatprep.subr.mxu0 %v3261
    %3378 = vmatpush1.msra.mxu0 %v3260
    %3379 = vmatprep.subr.mxu0 %v3257
    %3380 = vmatpush1.msra.mxu0 %v3256
    %3381 = vmatprep.subr.mxu0 %v3253
    %3382 = vmatpush1.msra.mxu0 %v3252
    %3383 = vmatprep.subr.mxu0 %v3249
    %3384 = vmatpush1.msra.mxu0 %v3248
    %3385 = vmatprep.subr.mxu0 %v3245
    %3386 = vmatpush1.msra.mxu0 %v3244
    %3387 = vmatprep.subr.mxu0 %v2298
    %3388 = vmatpush1.msra.mxu0 %v2297
    %3389 = vmatprep.subr.mxu0 %v2294
    %3390 = vmatpush1.msra.mxu0 %v2293
    %3391 = vmatprep.subr.mxu0 %v1517
    %3392 = vmatpush1.msra.mxu0 %v1516
    %3393 = vmatprep.subr.mxu0 %v1513
    %3394 = vmatpush1.msra.mxu0 %v1512
    %3395 = vmatprep.subr.mxu0 0.0
    %3396 = vmatpush2.msra.mxu0 0.0
    %3397 = vmatprep.subr.mxu0 0.0
    %3398 = vmatpush2.msra.mxu0 0.0
    %3399 = vmatprep.subr.mxu0 0.0
    %3400 = vmatpush2.msra.mxu0 0.0
    %3401 = vmatprep.subr.mxu0 0.0
    %3402 = vmatpush2.msra.mxu0 0.0
    %3403 = vmatprep.subr.mxu0 0.0
    %3404 = vmatpush2.msra.mxu0 0.0
    %3405 = vmatprep.subr.mxu0 0.0
    %3406 = vmatpush2.msra.mxu0 0.0
    %3407 = vmatprep.subr.mxu0 0.0
    %3408 = vmatpush2.msra.mxu0 0.0
    %3409 = vmatprep.subr.mxu0 0.0
    %3410 = vmatpush2.msra.mxu0 0.0
    %3411 = vmatprep.subr.mxu0 0.0
    %3412 = vmatpush2.msra.mxu0 0.0
    %3413 = vmatprep.subr.mxu0 0.0
    %3414 = vmatpush2.msra.mxu0 0.0
    %3415 = vmatprep.subr.mxu0 0.0
    %3416 = vmatpush2.msra.mxu0 0.0
    %3417 = vmatprep.subr.mxu0 0.0
    %3418 = vmatpush2.msra.mxu0 0.0
    %3419 = vmatprep.subr.mxu0 %v751
    %3420 = vmatpush2.msra.mxu0 %v748
    %3421 = vmatprep.subr.mxu0 %v3285
    %3422 = vmatpush2.msra.mxu0 %v3284
    %3423 = vmatprep.subr.mxu0 %v3281
    %3424 = vmatpush2.msra.mxu0 %v3280
    %3425 = vmatprep.subr.mxu0 %v2314
    %3426 = vmatpush2.msra.mxu0 %v2313
    %3427 = vmatprep.mubr.f32.mxu0 %v3290
    %3428 = vmatmul.mubr.f32.gmra.mxu0 %v3286
    %v3429 = vpop.f32.mrf.mxu0
    %v3430 = vadd.f32 0.0, %v3429
    %v3431 = vpop.f32.mrf.mxu0
    %v3432 = vadd.f32 0.0, %v3431
    %3433 = vdwg.mxu0
    %v3435 = vcombine.high %v3109, %v3109
    %v3436 = vsel %vm3289, %v3435, 0
    %3438 = vmatprep.subr.mxu0 %v2209
    %3439 = vmatpush1.msra.mxu0 %v2208
    %3440 = vmatprep.subr.mxu0 %v1432
    %3441 = vmatpush1.msra.mxu0 %v1431
    %3442 = vmatprep.subr.mxu0 %v1428
    %3443 = vmatpush1.msra.mxu0 %v1427
    %3444 = vmatprep.subr.mxu0 %v3105
    %3445 = vmatpush1.msra.mxu0 %v3104
    %3446 = vmatprep.subr.mxu0 %v3075
    %3447 = vmatpush1.msra.mxu0 %v3073
    %3448 = vmatprep.subr.mxu0 %v3101
    %3449 = vmatpush1.msra.mxu0 %v3100
    %3450 = vmatprep.subr.mxu0 %v3043
    %3451 = vmatpush1.msra.mxu0 %v3041
    %3452 = vmatprep.subr.mxu0 %v3097
    %3453 = vmatpush1.msra.mxu0 %v3096
    %3454 = vmatprep.subr.mxu0 %v3011
    %3455 = vmatpush1.msra.mxu0 %v3009
    %3456 = vmatprep.subr.mxu0 %v3093
    %3457 = vmatpush1.msra.mxu0 %v3092
    %3458 = vmatprep.subr.mxu0 %v2961
    %3459 = vmatpush1.msra.mxu0 %v2960
    %3460 = vmatprep.subr.mxu0 %v2957
    %3461 = vmatpush1.msra.mxu0 %v2956
    %3462 = vmatprep.subr.mxu0 %v2181
    %3463 = vmatpush1.msra.mxu0 %v2180
    %3464 = vmatprep.subr.mxu0 %v2177
    %3465 = vmatpush1.msra.mxu0 %v2176
    %3466 = vmatprep.subr.mxu0 %v1400
    %3467 = vmatpush1.msra.mxu0 %v1399
    %3468 = vmatprep.subr.mxu0 %v1396
    %3469 = vmatpush1.msra.mxu0 %v1395
    %3470 = vmatprep.subr.mxu0 0.0
    %3471 = vmatpush2.msra.mxu0 0.0
    %3472 = vmatprep.subr.mxu0 0.0
    %3473 = vmatpush2.msra.mxu0 0.0
    %3474 = vmatprep.subr.mxu0 0.0
    %3475 = vmatpush2.msra.mxu0 0.0
    %3476 = vmatprep.subr.mxu0 0.0
    %3477 = vmatpush2.msra.mxu0 0.0
    %3478 = vmatprep.subr.mxu0 0.0
    %3479 = vmatpush2.msra.mxu0 0.0
    %3480 = vmatprep.subr.mxu0 0.0
    %3481 = vmatpush2.msra.mxu0 0.0
    %3482 = vmatprep.subr.mxu0 0.0
    %3483 = vmatpush2.msra.mxu0 0.0
    %3484 = vmatprep.subr.mxu0 0.0
    %3485 = vmatpush2.msra.mxu0 0.0
    %3486 = vmatprep.subr.mxu0 0.0
    %3487 = vmatpush2.msra.mxu0 0.0
    %3488 = vmatprep.subr.mxu0 0.0
    %3489 = vmatpush2.msra.mxu0 0.0
    %3490 = vmatprep.subr.mxu0 0.0
    %3491 = vmatpush2.msra.mxu0 0.0
    %3492 = vmatprep.subr.mxu0 0.0
    %3493 = vmatpush2.msra.mxu0 0.0
    %3494 = vmatprep.subr.mxu0 %v917
    %3495 = vmatpush2.msra.mxu0 %v914
    %3496 = vmatprep.subr.mxu0 %v2993
    %3497 = vmatpush2.msra.mxu0 %v2992
    %3498 = vmatprep.subr.mxu0 %v2989
    %3499 = vmatpush2.msra.mxu0 %v2988
    %3500 = vmatprep.subr.mxu0 %v2213
    %3501 = vmatpush2.msra.mxu0 %v2212
    %3502 = vmatprep.mubr.f32.mxu0 %v3436
    %3503 = vmatmul.mubr.f32.gmra.mxu0 %v3109
    %v3504 = vpop.f32.mrf.mxu0
    %v3505 = vadd.f32 %v3359, %v3504
    %v3506 = vpop.f32.mrf.mxu0
    %v3507 = vadd.f32 %v3361, %v3506
    %3508 = vdwg.mxu0
    %3509 = vmatprep.subr.mxu0 %v2211
    %3510 = vmatpush1.msra.mxu0 %v2210
    %3511 = vmatprep.subr.mxu0 %v1434
    %3512 = vmatpush1.msra.mxu0 %v1433
    %3513 = vmatprep.subr.mxu0 %v1430
    %3514 = vmatpush1.msra.mxu0 %v1429
    %3515 = vmatprep.subr.mxu0 %v3107
    %3516 = vmatpush1.msra.mxu0 %v3106
    %3517 = vmatprep.subr.mxu0 %v3079
    %3518 = vmatpush1.msra.mxu0 %v3077
    %3519 = vmatprep.subr.mxu0 %v3103
    %3520 = vmatpush1.msra.mxu0 %v3102
    %3521 = vmatprep.subr.mxu0 %v3047
    %3522 = vmatpush1.msra.mxu0 %v3045
    %3523 = vmatprep.subr.mxu0 %v3099
    %3524 = vmatpush1.msra.mxu0 %v3098
    %3525 = vmatprep.subr.mxu0 %v3015
    %3526 = vmatpush1.msra.mxu0 %v3013
    %3527 = vmatprep.subr.mxu0 %v3095
    %3528 = vmatpush1.msra.mxu0 %v3094
    %3529 = vmatprep.subr.mxu0 %v2963
    %3530 = vmatpush1.msra.mxu0 %v2962
    %3531 = vmatprep.subr.mxu0 %v2959
    %3532 = vmatpush1.msra.mxu0 %v2958
    %3533 = vmatprep.subr.mxu0 %v2183
    %3534 = vmatpush1.msra.mxu0 %v2182
    %3535 = vmatprep.subr.mxu0 %v2179
    %3536 = vmatpush1.msra.mxu0 %v2178
    %3537 = vmatprep.subr.mxu0 %v1402
    %3538 = vmatpush1.msra.mxu0 %v1401
    %3539 = vmatprep.subr.mxu0 %v1398
    %3540 = vmatpush1.msra.mxu0 %v1397
    %3541 = vmatprep.subr.mxu0 0.0
    %3542 = vmatpush2.msra.mxu0 0.0
    %3543 = vmatprep.subr.mxu0 0.0
    %3544 = vmatpush2.msra.mxu0 0.0
    %3545 = vmatprep.subr.mxu0 0.0
    %3546 = vmatpush2.msra.mxu0 0.0
    %3547 = vmatprep.subr.mxu0 0.0
    %3548 = vmatpush2.msra.mxu0 0.0
    %3549 = vmatprep.subr.mxu0 0.0
    %3550 = vmatpush2.msra.mxu0 0.0
    %3551 = vmatprep.subr.mxu0 0.0
    %3552 = vmatpush2.msra.mxu0 0.0
    %3553 = vmatprep.subr.mxu0 0.0
    %3554 = vmatpush2.msra.mxu0 0.0
    %3555 = vmatprep.subr.mxu0 0.0
    %3556 = vmatpush2.msra.mxu0 0.0
    %3557 = vmatprep.subr.mxu0 0.0
    %3558 = vmatpush2.msra.mxu0 0.0
    %3559 = vmatprep.subr.mxu0 0.0
    %3560 = vmatpush2.msra.mxu0 0.0
    %3561 = vmatprep.subr.mxu0 0.0
    %3562 = vmatpush2.msra.mxu0 0.0
    %3563 = vmatprep.subr.mxu0 0.0
    %3564 = vmatpush2.msra.mxu0 0.0
    %3565 = vmatprep.subr.mxu0 %v923
    %3566 = vmatpush2.msra.mxu0 %v920
    %3567 = vmatprep.subr.mxu0 %v2995
    %3568 = vmatpush2.msra.mxu0 %v2994
    %3569 = vmatprep.subr.mxu0 %v2991
    %3570 = vmatpush2.msra.mxu0 %v2990
    %3571 = vmatprep.subr.mxu0 %v2215
    %3572 = vmatpush2.msra.mxu0 %v2214
    %3573 = vmatprep.mubr.f32.mxu0 %v3436
    %3574 = vmatmul.mubr.f32.gmra.mxu0 %v3109
    %v3575 = vpop.f32.mrf.mxu0
    %v3576 = vadd.f32 %v3430, %v3575
    %v3577 = vpop.f32.mrf.mxu0
    %v3578 = vadd.f32 %v3432, %v3577
    %3579 = vdwg.mxu0
    %3580 = vrot.lane.b32.xlu0 %v2956, 112
    %v3581 = vpop.permute.xlu0 %3580
    %3582 = vrot.lane.b32.xlu0 %v2960, 112
    %v3583 = vpop.permute.xlu0 %3582
    %3584 = vrot.lane.b32.xlu0 %v3092, 112
    %v3585 = vpop.permute.xlu0 %3584
    %3586 = vrot.lane.b32.xlu0 %v3009, 112
    %v3587 = vpop.permute.xlu0 %3586
    %3588 = vrot.lane.b32.xlu0 %v3096, 112
    %v3589 = vpop.permute.xlu0 %3588
    %3590 = vrot.lane.b32.xlu0 %v3041, 112
    %v3591 = vpop.permute.xlu0 %3590
    %3592 = vrot.lane.b32.xlu0 %v3100, 112
    %v3593 = vpop.permute.xlu0 %3592
    %3594 = vrot.lane.b32.xlu0 %v3073, 112
    %v3595 = vpop.permute.xlu0 %3594
    %3596 = vrot.lane.b32.xlu0 %v3104, 112
    %v3597 = vpop.permute.xlu0 %3596
    %3598 = vrot.lane.b32.xlu0 %v2988, 112
    %v3599 = vpop.permute.xlu0 %3598
    %3600 = vrot.lane.b32.xlu0 %v2992, 112
    %v3601 = vpop.permute.xlu0 %3600
    %3602 = vrot.lane.b32.xlu0 %v2957, 112
    %v3603 = vpop.permute.xlu0 %3602
    %3604 = vrot.lane.b32.xlu0 %v2961, 112
    %v3605 = vpop.permute.xlu0 %3604
    %3606 = vrot.lane.b32.xlu0 %v3093, 112
    %v3607 = vpop.permute.xlu0 %3606
    %3608 = vrot.lane.b32.xlu0 %v3011, 112
    %v3609 = vpop.permute.xlu0 %3608
    %3610 = vrot.lane.b32.xlu0 %v3097, 112
    %v3611 = vpop.permute.xlu0 %3610
    %3612 = vrot.lane.b32.xlu0 %v3043, 112
    %v3613 = vpop.permute.xlu0 %3612
    %3614 = vrot.lane.b32.xlu0 %v3101, 112
    %v3615 = vpop.permute.xlu0 %3614
    %3616 = vrot.lane.b32.xlu0 %v3075, 112
    %v3617 = vpop.permute.xlu0 %3616
    %3618 = vrot.lane.b32.xlu0 %v3105, 112
    %v3619 = vpop.permute.xlu0 %3618
    %3620 = vrot.lane.b32.xlu0 %v2989, 112
    %v3621 = vpop.permute.xlu0 %3620
    %3622 = vrot.lane.b32.xlu0 %v2993, 112
    %v3623 = vpop.permute.xlu0 %3622
    %3624 = vrot.lane.b32.xlu0 %v2958, 112
    %v3625 = vpop.permute.xlu0 %3624
    %3626 = vrot.lane.b32.xlu0 %v2962, 112
    %v3627 = vpop.permute.xlu0 %3626
    %3628 = vrot.lane.b32.xlu0 %v3094, 112
    %v3629 = vpop.permute.xlu0 %3628
    %3630 = vrot.lane.b32.xlu0 %v3013, 112
    %v3631 = vpop.permute.xlu0 %3630
    %3632 = vrot.lane.b32.xlu0 %v3098, 112
    %v3633 = vpop.permute.xlu0 %3632
    %3634 = vrot.lane.b32.xlu0 %v3045, 112
    %v3635 = vpop.permute.xlu0 %3634
    %3636 = vrot.lane.b32.xlu0 %v3102, 112
    %v3637 = vpop.permute.xlu0 %3636
    %3638 = vrot.lane.b32.xlu0 %v3077, 112
    %v3639 = vpop.permute.xlu0 %3638
    %3640 = vrot.lane.b32.xlu0 %v3106, 112
    %v3641 = vpop.permute.xlu0 %3640
    %3642 = vrot.lane.b32.xlu0 %v2990, 112
    %v3643 = vpop.permute.xlu0 %3642
    %3644 = vrot.lane.b32.xlu0 %v2994, 112
    %v3645 = vpop.permute.xlu0 %3644
    %3646 = vrot.lane.b32.xlu0 %v2959, 112
    %v3647 = vpop.permute.xlu0 %3646
    %3648 = vrot.lane.b32.xlu0 %v2963, 112
    %v3649 = vpop.permute.xlu0 %3648
    %3650 = vrot.lane.b32.xlu0 %v3095, 112
    %v3651 = vpop.permute.xlu0 %3650
    %3652 = vrot.lane.b32.xlu0 %v3015, 112
    %v3653 = vpop.permute.xlu0 %3652
    %3654 = vrot.lane.b32.xlu0 %v3099, 112
    %v3655 = vpop.permute.xlu0 %3654
    %3656 = vrot.lane.b32.xlu0 %v3047, 112
    %v3657 = vpop.permute.xlu0 %3656
    %3658 = vrot.lane.b32.xlu0 %v3103, 112
    %v3659 = vpop.permute.xlu0 %3658
    %3660 = vrot.lane.b32.xlu0 %v3079, 112
    %v3661 = vpop.permute.xlu0 %3660
    %3662 = vrot.lane.b32.xlu0 %v3107, 112
    %v3663 = vpop.permute.xlu0 %3662
    %3664 = vrot.lane.b32.xlu0 %v2991, 112
    %v3665 = vpop.permute.xlu0 %3664
    %3666 = vrot.lane.b32.xlu0 %v2995, 112
    %v3667 = vpop.permute.xlu0 %3666
    %v3668 = vsel %vm1119, %v3625, %v3647
    %v3669 = vsel %vm1119, %v3627, %v3649
    %v3670 = vsel %vm1119, %v3629, %v3651
    %v3671 = vsel %vm1119, %v3631, %v3653
    %v3672 = vsel %vm1119, %v3633, %v3655
    %v3673 = vsel %vm1119, %v3635, %v3657
    %v3674 = vsel %vm1119, %v3637, %v3659
    %v3675 = vsel %vm1119, %v3639, %v3661
    %v3676 = vsel %vm1119, %v3641, %v3663
    %v3677 = vsel %vm1119, %v3643, %v3665
    %v3678 = vsel %vm1119, %v3645, %v3667
    %v3679 = vsel %vm1119, %v3603, %v3625
    %v3680 = vsel %vm1119, %v3605, %v3627
    %v3681 = vsel %vm1119, %v3607, %v3629
    %v3682 = vsel %vm1119, %v3609, %v3631
    %v3683 = vsel %vm1119, %v3611, %v3633
    %v3684 = vsel %vm1119, %v3613, %v3635
    %v3685 = vsel %vm1119, %v3615, %v3637
    %v3686 = vsel %vm1119, %v3617, %v3639
    %v3687 = vsel %vm1119, %v3619, %v3641
    %v3688 = vsel %vm1119, %v3621, %v3643
    %v3689 = vsel %vm1119, %v3623, %v3645
    %v3690 = vsel %vm1119, %v3581, %v3603
    %v3691 = vsel %vm1119, %v3583, %v3605
    %v3692 = vsel %vm1119, %v3585, %v3607
    %v3693 = vsel %vm1119, %v3587, %v3609
    %v3694 = vsel %vm1119, %v3589, %v3611
    %v3695 = vsel %vm1119, %v3591, %v3613
    %v3696 = vsel %vm1119, %v3593, %v3615
    %v3697 = vsel %vm1119, %v3595, %v3617
    %v3698 = vsel %vm1119, %v3597, %v3619
    %v3699 = vsel %vm1119, %v3599, %v3621
    %v3700 = vsel %vm1119, %v3601, %v3623
    %v3701 = vsel %vm1119, %v3647, %v3581
    %v3702 = vsel %vm1119, %v3649, %v3583
    %v3703 = vsel %vm1119, %v3651, %v3585
    %v3704 = vsel %vm1119, %v3653, %v3587
    %v3705 = vsel %vm1119, %v3655, %v3589
    %v3706 = vsel %vm1119, %v3657, %v3591
    %v3707 = vsel %vm1119, %v3659, %v3593
    %v3708 = vsel %vm1119, %v3661, %v3595
    %v3709 = vsel %vm1119, %v3663, %v3597
    %v3710 = vsel %vm1119, %v3665, %v3599
    %v3711 = vsel %vm1119, %v3667, %v3601
    %v3712 = vmul.f32 %v3690, %v154
    %v3713 = vmul.f32 %v3679, %v155
    %v3714 = vmul.f32 %v3668, %v156
    %v3715 = vmul.f32 %v3701, %v157
    %v3716 = vmul.f32 %v3691, %v154
    %v3717 = vmul.f32 %v3680, %v155
    %v3718 = vmul.f32 %v3669, %v156
    %v3719 = vmul.f32 %v3702, %v157
    %v3720 = vmul.f32 %v3692, %v154
    %v3721 = vmul.f32 %v3681, %v155
    %v3722 = vmul.f32 %v3670, %v156
    %v3723 = vmul.f32 %v3703, %v157
    %v3724 = vmul.f32 %v3693, %v154
    %v3725 = vmul.f32 %v3682, %v155
    %v3726 = vmul.f32 %v3671, %v156
    %v3727 = vmul.f32 %v3704, %v157
    %v3728 = vmul.f32 %v3694, %v154
    %v3729 = vmul.f32 %v3683, %v155
    %v3730 = vmul.f32 %v3672, %v156
    %v3731 = vmul.f32 %v3705, %v157
    %v3732 = vmul.f32 %v3695, %v154
    %v3733 = vmul.f32 %v3684, %v155
    %v3734 = vmul.f32 %v3673, %v156
    %v3735 = vmul.f32 %v3706, %v157
    %v3736 = vmul.f32 %v3696, %v154
    %v3737 = vmul.f32 %v3685, %v155
    %v3738 = vmul.f32 %v3674, %v156
    %v3739 = vmul.f32 %v3707, %v157
    %v3740 = vmul.f32 %v3697, %v154
    %v3741 = vmul.f32 %v3686, %v155
    %v3742 = vmul.f32 %v3675, %v156
    %v3743 = vmul.f32 %v3708, %v157
    %v3744 = vmul.f32 %v3698, %v154
    %v3745 = vmul.f32 %v3687, %v155
    %v3746 = vmul.f32 %v3676, %v156
    %v3747 = vmul.f32 %v3709, %v157
    %v3748 = vmul.f32 %v3699, %v154
    %v3749 = vmul.f32 %v3688, %v155
    %v3750 = vmul.f32 %v3677, %v156
    %v3751 = vmul.f32 %v3710, %v157
    %v3752 = vmul.f32 %v3700, %v154
    %v3753 = vmul.f32 %v3689, %v155
    %v3754 = vmul.f32 %v3678, %v156
    %v3755 = vmul.f32 %v3711, %v157
    %s3756 = scalar_lea.vmem %s11, 16
    %v3757 = vld [vmem:[%s3756] sm:$0x77]
    %v3759 = vcombine.high %v3757, %v3757
    %v3760 = vsel %vm3289, %v3759, 0
    %3762 = vmatprep.subr.mxu0 %v2726
    %3763 = vmatpush1.msra.mxu0 %v2725
    %3764 = vmatprep.subr.mxu0 %v1950
    %3765 = vmatpush1.msra.mxu0 %v1949
    %3766 = vmatprep.subr.mxu0 %v1946
    %3767 = vmatpush1.msra.mxu0 %v1945
    %3768 = vmatprep.subr.mxu0 %v3745
    %3769 = vmatpush1.msra.mxu0 %v3744
    %3770 = vmatprep.subr.mxu0 %v3741
    %3771 = vmatpush1.msra.mxu0 %v3740
    %3772 = vmatprep.subr.mxu0 %v3737
    %3773 = vmatpush1.msra.mxu0 %v3736
    %3774 = vmatprep.subr.mxu0 %v3733
    %3775 = vmatpush1.msra.mxu0 %v3732
    %3776 = vmatprep.subr.mxu0 %v3729
    %3777 = vmatpush1.msra.mxu0 %v3728
    %3778 = vmatprep.subr.mxu0 %v3725
    %3779 = vmatpush1.msra.mxu0 %v3724
    %3780 = vmatprep.subr.mxu0 %v3721
    %3781 = vmatpush1.msra.mxu0 %v3720
    %3782 = vmatprep.subr.mxu0 %v3717
    %3783 = vmatpush1.msra.mxu0 %v3716
    %3784 = vmatprep.subr.mxu0 %v3713
    %3785 = vmatpush1.msra.mxu0 %v3712
    %3786 = vmatprep.subr.mxu0 %v2714
    %3787 = vmatpush1.msra.mxu0 %v2713
    %3788 = vmatprep.subr.mxu0 %v2710
    %3789 = vmatpush1.msra.mxu0 %v2709
    %3790 = vmatprep.subr.mxu0 %v1934
    %3791 = vmatpush1.msra.mxu0 %v1933
    %3792 = vmatprep.subr.mxu0 %v1930
    %3793 = vmatpush1.msra.mxu0 %v1929
    %3794 = vmatprep.subr.mxu0 0.0
    %3795 = vmatpush2.msra.mxu0 0.0
    %3796 = vmatprep.subr.mxu0 0.0
    %3797 = vmatpush2.msra.mxu0 0.0
    %3798 = vmatprep.subr.mxu0 0.0
    %3799 = vmatpush2.msra.mxu0 0.0
    %3800 = vmatprep.subr.mxu0 0.0
    %3801 = vmatpush2.msra.mxu0 0.0
    %3802 = vmatprep.subr.mxu0 0.0
    %3803 = vmatpush2.msra.mxu0 0.0
    %3804 = vmatprep.subr.mxu0 0.0
    %3805 = vmatpush2.msra.mxu0 0.0
    %3806 = vmatprep.subr.mxu0 0.0
    %3807 = vmatpush2.msra.mxu0 0.0
    %3808 = vmatprep.subr.mxu0 0.0
    %3809 = vmatpush2.msra.mxu0 0.0
    %3810 = vmatprep.subr.mxu0 0.0
    %3811 = vmatpush2.msra.mxu0 0.0
    %3812 = vmatprep.subr.mxu0 0.0
    %3813 = vmatpush2.msra.mxu0 0.0
    %3814 = vmatprep.subr.mxu0 0.0
    %3815 = vmatpush2.msra.mxu0 0.0
    %3816 = vmatprep.subr.mxu0 0.0
    %3817 = vmatpush2.msra.mxu0 0.0
    %3818 = vmatprep.subr.mxu0 %v1173
    %3819 = vmatpush2.msra.mxu0 %v1170
    %3820 = vmatprep.subr.mxu0 %v3753
    %3821 = vmatpush2.msra.mxu0 %v3752
    %3822 = vmatprep.subr.mxu0 %v3749
    %3823 = vmatpush2.msra.mxu0 %v3748
    %3824 = vmatprep.subr.mxu0 %v2730
    %3825 = vmatpush2.msra.mxu0 %v2729
    %3826 = vmatprep.mubr.f32.mxu0 %v3760
    %3827 = vmatmul.mubr.f32.gmra.mxu0 %v3757
    %v3828 = vpop.f32.mrf.mxu0
    %v3829 = vadd.f32 0.0, %v3828
    %v3830 = vpop.f32.mrf.mxu0
    %v3831 = vadd.f32 0.0, %v3830
    %3832 = vdwg.mxu0
    %3833 = vmatprep.subr.mxu0 %v2728
    %3834 = vmatpush1.msra.mxu0 %v2727
    %3835 = vmatprep.subr.mxu0 %v1952
    %3836 = vmatpush1.msra.mxu0 %v1951
    %3837 = vmatprep.subr.mxu0 %v1948
    %3838 = vmatpush1.msra.mxu0 %v1947
    %3839 = vmatprep.subr.mxu0 %v3747
    %3840 = vmatpush1.msra.mxu0 %v3746
    %3841 = vmatprep.subr.mxu0 %v3743
    %3842 = vmatpush1.msra.mxu0 %v3742
    %3843 = vmatprep.subr.mxu0 %v3739
    %3844 = vmatpush1.msra.mxu0 %v3738
    %3845 = vmatprep.subr.mxu0 %v3735
    %3846 = vmatpush1.msra.mxu0 %v3734
    %3847 = vmatprep.subr.mxu0 %v3731
    %3848 = vmatpush1.msra.mxu0 %v3730
    %3849 = vmatprep.subr.mxu0 %v3727
    %3850 = vmatpush1.msra.mxu0 %v3726
    %3851 = vmatprep.subr.mxu0 %v3723
    %3852 = vmatpush1.msra.mxu0 %v3722
    %3853 = vmatprep.subr.mxu0 %v3719
    %3854 = vmatpush1.msra.mxu0 %v3718
    %3855 = vmatprep.subr.mxu0 %v3715
    %3856 = vmatpush1.msra.mxu0 %v3714
    %3857 = vmatprep.subr.mxu0 %v2716
    %3858 = vmatpush1.msra.mxu0 %v2715
    %3859 = vmatprep.subr.mxu0 %v2712
    %3860 = vmatpush1.msra.mxu0 %v2711
    %3861 = vmatprep.subr.mxu0 %v1936
    %3862 = vmatpush1.msra.mxu0 %v1935
    %3863 = vmatprep.subr.mxu0 %v1932
    %3864 = vmatpush1.msra.mxu0 %v1931
    %3865 = vmatprep.subr.mxu0 0.0
    %3866 = vmatpush2.msra.mxu0 0.0
    %3867 = vmatprep.subr.mxu0 0.0
    %3868 = vmatpush2.msra.mxu0 0.0
    %3869 = vmatprep.subr.mxu0 0.0
    %3870 = vmatpush2.msra.mxu0 0.0
    %3871 = vmatprep.subr.mxu0 0.0
    %3872 = vmatpush2.msra.mxu0 0.0
    %3873 = vmatprep.subr.mxu0 0.0
    %3874 = vmatpush2.msra.mxu0 0.0
    %3875 = vmatprep.subr.mxu0 0.0
    %3876 = vmatpush2.msra.mxu0 0.0
    %3877 = vmatprep.subr.mxu0 0.0
    %3878 = vmatpush2.msra.mxu0 0.0
    %3879 = vmatprep.subr.mxu0 0.0
    %3880 = vmatpush2.msra.mxu0 0.0
    %3881 = vmatprep.subr.mxu0 0.0
    %3882 = vmatpush2.msra.mxu0 0.0
    %3883 = vmatprep.subr.mxu0 0.0
    %3884 = vmatpush2.msra.mxu0 0.0
    %3885 = vmatprep.subr.mxu0 0.0
    %3886 = vmatpush2.msra.mxu0 0.0
    %3887 = vmatprep.subr.mxu0 0.0
    %3888 = vmatpush2.msra.mxu0 0.0
    %3889 = vmatprep.subr.mxu0 %v1179
    %3890 = vmatpush2.msra.mxu0 %v1176
    %3891 = vmatprep.subr.mxu0 %v3755
    %3892 = vmatpush2.msra.mxu0 %v3754
    %3893 = vmatprep.subr.mxu0 %v3751
    %3894 = vmatpush2.msra.mxu0 %v3750
    %3895 = vmatprep.subr.mxu0 %v2732
    %3896 = vmatpush2.msra.mxu0 %v2731
    %3897 = vmatprep.mubr.f32.mxu0 %v3760
    %3898 = vmatmul.mubr.f32.gmra.mxu0 %v3757
    %v3899 = vpop.f32.mrf.mxu0
    %v3900 = vadd.f32 0.0, %v3899
    %v3901 = vpop.f32.mrf.mxu0
    %v3902 = vadd.f32 0.0, %v3901
    %3903 = vdwg.mxu0
    %v3904 = vadd.f32 %v3505, %v3829
    %v3905 = vadd.f32 %v3507, %v3831
    %v3906 = vadd.f32 %v3576, %v3900
    %v3907 = vadd.f32 %v3578, %v3902
    %v3908 = vld [vmem:[%s12] sm:$0x7]
    %3910 = vset.pattern.permute.xlu0 0
    %3911 = vperm.xlu0 %3910, %v3908
    %v3912 = vpop.permute.xlu0 %3911
    %v3914 = vadd.f32 %v3904, %v3912
    %v3915 = vadd.f32 %v3905, %v3912
    %v3916 = vadd.f32 %v3906, %v3912
    %v3917 = vadd.f32 %v3907, %v3912
    %v3922 = vcombine.low %v3914, %v3915
    %v3923 = vcombine.low %v3916, %v3917
    %v3926 = vadd.f32 %v107, %v3922
    %v3927 = vadd.f32 %v108, %v3923
    %3928 = vst [vmem:[#allocation11] sm:$0x77] %v3926
    %3929 = vst [vmem:[#allocation11 + $0x8] sm:$0x77] %v3927
    // Predicated region
    $region74: #{tpu_custom_call.1} parent=1 // pred_check
      _
    $region75: #{tpu_custom_call.1} parent=1 // pred_check_branch
      %3931 = sbr.rel (0) target = $region77
    $region76: #{tpu_custom_call.1} parent=1 // pred_region
      %s3933 = ssub.s32 256, 256
      %3934 = vsyncadd [#allocation4], %s3933
      %s3936 = sshll.u32 [#allocation11], 4
      %s3937 = int_to_ptr.vmem [resolvable:$true] %s3936
      %3939 = dma.vmem_to_hbm [thread:$0]  %s3937, 256, %s13, [#allocation4]
    $region77: #{tpu_custom_call.1} parent=1 // pred_fallthru
      _
    // Predicated region
    $region78: #{tpu_custom_call.1} parent=1 // pred_check
      _
    $region79: #{tpu_custom_call.1} parent=1 // pred_check_branch
      %3941 = sbr.rel (0) target = $region81
    $region80: #{tpu_custom_call.1} parent=1 // pred_region
      %3942 = dma.done [#allocation4], 256
    $region81: #{tpu_custom_call.1} parent=1 // pred_fallthru
      _
    %3943 = vsyncpa [#allocation3], 1
    %3944 = vsyncpa [#allocation6], 1
    %3945 = vsyncpa [#allocation9], 1
    %3946 = vsyncpa [#allocation4], 1

</llo_original>
